<compile_context>
chip_gen: v5e
topology: v5e:2x2
jax: 0.10.0
libtpu: 0.0.40
codegen_flags: <defaults>
</compile_context>

<pallas_src>
import functools

import jax
import jax.numpy as jnp
from jax.experimental import pallas as pl
from jax.experimental.pallas import tpu as pltpu

N_HIDDEN = 5
D_IN, D_HID, D_OUT = 5, 512, 3
D_OUT_PAD = 128  # lane-dense output slab; sliced back to D_OUT in the wrapper


def _round_up(n, m):
    return ((n + m - 1) // m) * m


def _use_bf16_tanh():
    """bf16 EUP exists on v6e / v7x; keep f32 tanh on v5e and older chips."""
    try:
        kind = jax.devices()[0].device_kind.lower()
    except Exception:
        return False
    return not any(tag in kind for tag in ("v2", "v3", "v4", "v5"))


def mlp_kernel(x_ref, w_in_ref, b_in_ref, w_h_ref, b_h_ref, w_out_ref, b_out_ref,
               o_ref, *, bf16_tanh):
    # --- input layer: K=5 contraction as 5 VPU broadcast-FMAs (exact f32, no MXU) ---
    x = x_ref[...]          # (tb, 5)  f32
    w_in = w_in_ref[...]    # (5, 512) f32
    h = x[:, 0:1] * w_in[0:1, :] + b_in_ref[...]          # (tb, 512) f32
    for k in range(1, D_IN):
        h = h + x[:, k:k + 1] * w_in[k:k + 1, :]

    # --- 5 hidden layers: bf16 weights/activations on MXU, f32 accumulation ---
    for i in range(N_HIDDEN):  # static Python loop -> unrolled at trace time
        z = jnp.dot(h.astype(jnp.bfloat16), w_h_ref[i],
                    preferred_element_type=jnp.float32) + b_h_ref[i]
        if bf16_tanh:
            # bf16 tanh on the EUP (v6e/v7x); h stays bf16 for the next matmul
            h = jnp.tanh(z.astype(jnp.bfloat16))
        else:
            # v5e: no bf16 EUP path, keep tanh in f32
            h = jnp.tanh(z)

    # --- output head: bf16 MXU matmul, f32 bias add, lane-dense (tb, 128) store ---
    o_ref[...] = (
        jnp.dot(h.astype(jnp.bfloat16), w_out_ref[...],
                preferred_element_type=jnp.float32)
        + b_out_ref[...]
    )


def prepare_params(params):
    """Convert f32 training params to kernel layout: bf16 matmul weights, lane-padded head."""
    w_in, b_in, w_h, b_h, w_out, b_out = params
    w_out_p = jnp.zeros((D_HID, D_OUT_PAD), jnp.float32).at[:, :D_OUT].set(w_out)
    b_out_p = jnp.zeros((1, D_OUT_PAD), jnp.float32).at[:, :D_OUT].set(b_out)
    return (
        w_in.astype(jnp.float32),        # used on the VPU, exact f32
        b_in.astype(jnp.float32),
        w_h.astype(jnp.bfloat16),        # dominant HBM traffic halved
        b_h.astype(jnp.float32),
        w_out_p.astype(jnp.bfloat16),    # bf16 head weights (no f32 MXU emulation)
        b_out_p,                         # bias stays f32 (added after the dot)
    )


@functools.partial(jax.jit, static_argnames=("tb", "bf16_tanh"))
def mlp_forward(x, kparams, *, tb=1024, bf16_tanh=False):
    """Run the MLP forward pass. tb = batch tile (multiple of 8)."""
    assert tb % 8 == 0
    w_in, b_in, w_h, b_h, w_out_p, b_out_p = kparams
    B = x.shape[0]

    # effective batch tile: multiple of 8 sublanes, capped so that B > 8 yields
    # >= 2 tiles (lets the "parallel" grid axis shard across v7x's 2 TensorCores)
    tb_eff = min(tb, _round_up(max(B, 1), 8))
    if B > 8:
        tb_eff = min(tb_eff, _round_up(-(-B // 2), 8))
    Bp = _round_up(B, tb_eff)
    if Bp != B:
        x = jnp.pad(x, ((0, Bp - B), (0, 0)))
    grid = (Bp // tb_eff,)

    const2 = lambda i: (0, 0)     # weights resident in VMEM across all batch tiles
    const3 = lambda i: (0, 0, 0)

    kernel = functools.partial(mlp_kernel, bf16_tanh=bf16_tanh)

    out_p = pl.pallas_call(
        kernel,
        out_shape=jax.ShapeDtypeStruct((Bp, D_OUT_PAD), jnp.float32),
        grid=grid,
        in_specs=[
            pl.BlockSpec((tb_eff, D_IN), lambda i: (i, 0)),          # x tiles stream in
            pl.BlockSpec((D_IN, D_HID), const2),
            pl.BlockSpec((1, D_HID), const2),
            pl.BlockSpec((N_HIDDEN, D_HID, D_HID), const3),
            pl.BlockSpec((N_HIDDEN, 1, D_HID), const3),
            pl.BlockSpec((D_HID, D_OUT_PAD), const2),
            pl.BlockSpec((1, D_OUT_PAD), const2),
        ],
        out_specs=pl.BlockSpec((tb_eff, D_OUT_PAD), lambda i: (i, 0)),
        compiler_params=pltpu.CompilerParams(
            dimension_semantics=("parallel",),   # shard batch tiles across v7x's 2 TCs
            vmem_limit_bytes=32 << 20,           # footprint ~8-12 MiB; leave headroom on v7x
        ),
    )(x, w_in, b_in, w_h, b_h, w_out_p, b_out_p)

    # drop batch padding and the lane padding of the output head
    return out_p[:B, :D_OUT]


def init_params(key):
    """Deterministic init mimicking PyTorch's default U(-1/sqrt(fan_in), 1/sqrt(fan_in))."""
    keys = jax.random.split(key, 4 + 2 * N_HIDDEN)

    def lin(kw, kb, fan_in, fan_out):
        bound = 1.0 / jnp.sqrt(jnp.float32(fan_in))
        w = jax.random.uniform(kw, (fan_in, fan_out), jnp.float32, -bound, bound)
        b = jax.random.uniform(kb, (1, fan_out), jnp.float32, -bound, bound)
        return w, b

    w_in, b_in = lin(keys[0], keys[1], D_IN, D_HID)
    hw, hb = [], []
    for i in range(N_HIDDEN):
        w, b = lin(keys[2 + 2 * i], keys[3 + 2 * i], D_HID, D_HID)
        hw.append(w)
        hb.append(b)
    w_h = jnp.stack(hw, axis=0)          # (5, 512, 512)
    b_h = jnp.stack(hb, axis=0)          # (5, 1, 512)
    w_out, b_out = lin(keys[-2], keys[-1], D_HID, D_OUT)
    return w_in, b_in, w_h, b_h, w_out, b_out


def mlp_reference_f32(x, params):
    """Pure f32 reference (matches the original PyTorch forward)."""
    w_in, b_in, w_h, b_h, w_out, b_out = params
    h = x @ w_in + b_in
    for i in range(N_HIDDEN):
        h = jnp.tanh(h @ w_h[i] + b_h[i])
    return h @ w_out + b_out


def mlp_reference_matched(x, params, *, bf16_tanh):
    """Reference mirroring the kernel's mixed-precision scheme."""
    w_in, b_in, w_h, b_h, w_out, b_out = params
    h = x @ w_in + b_in
    for i in range(N_HIDDEN):
        z = jnp.dot(h.astype(jnp.bfloat16), w_h[i].astype(jnp.bfloat16),
                    preferred_element_type=jnp.float32) + b_h[i]
        if bf16_tanh:
            h = jnp.tanh(z.astype(jnp.bfloat16))
        else:
            h = jnp.tanh(z)
    out = jnp.dot(h.astype(jnp.bfloat16), w_out.astype(jnp.bfloat16),
                  preferred_element_type=jnp.float32) + b_out
    return out


if __name__ == "__main__":
    key = jax.random.PRNGKey(0)
    k_params, k_x, k_x2 = jax.random.split(key, 3)
    params = init_params(k_params)
    kparams = prepare_params(params)
    bf16_tanh = _use_bf16_tanh()

    # small primary test (single batch tile)
    batch = 8
    x = jax.random.normal(k_x, (batch, D_IN), jnp.float32)
    out = jax.block_until_ready(mlp_forward(x, kparams, bf16_tanh=bf16_tanh))
    assert out.shape == (batch, D_OUT)
    assert jnp.all(jnp.isfinite(out))
    ref_m = mlp_reference_matched(x, params, bf16_tanh=bf16_tanh)
    assert jnp.allclose(out, ref_m, atol=2e-2, rtol=2e-2)
    assert jnp.allclose(out, mlp_reference_f32(x, params), atol=5e-2, rtol=5e-2)

    # exercise the multi-tile grid + batch-padding path (>= 2 tiles, small tile)
    batch2 = 200
    x2 = jax.random.normal(k_x2, (batch2, D_IN), jnp.float32)
    out2 = jax.block_until_ready(mlp_forward(x2, kparams, tb=64, bf16_tanh=bf16_tanh))
    assert out2.shape == (batch2, D_OUT)
    ref2_m = mlp_reference_matched(x2, params, bf16_tanh=bf16_tanh)
    assert jnp.allclose(out2, ref2_m, atol=2e-2, rtol=2e-2)
    assert jnp.allclose(out2, mlp_reference_f32(x2, params), atol=5e-2, rtol=5e-2)

    # default-tb path: B > 8 is split into >= 2 tiles (v7x 2-TC sharding)
    out3 = jax.block_until_ready(mlp_forward(x2, kparams, bf16_tanh=bf16_tanh))
    assert out3.shape == (batch2, D_OUT)
    assert jnp.allclose(out3, ref2_m, atol=2e-2, rtol=2e-2)

    print("KERNEL_OK")
</pallas_src>

<mosaic_0001>
module attributes {stable_mosaic.version = 11 : i64} {
  func.func @mlp_kernel(%arg0: i32, %arg1: memref<8x5xf32, #tpu.memory_space<vmem>>, %arg2: memref<5x512xf32, #tpu.memory_space<vmem>>, %arg3: memref<1x512xf32, #tpu.memory_space<vmem>>, %arg4: memref<5x512x512xbf16, #tpu.memory_space<vmem>>, %arg5: memref<5x1x512xf32, #tpu.memory_space<vmem>>, %arg6: memref<512x128xbf16, #tpu.memory_space<vmem>>, %arg7: memref<1x128xf32, #tpu.memory_space<vmem>>, %arg8: memref<8x128xf32, #tpu.memory_space<vmem>>) attributes {dimension_semantics = [#tpu.dimension_semantics<parallel>], iteration_bounds = array<i64: 1>, scalar_prefetch = 0 : i64, scratch_operands = 0 : i64, tpu.core_type = #tpu.core_type<tc>, window_params = [{transform_indices = @transform_0, window_bounds = array<i64: 8, 5>}, {pipeline_mode = #tpu.pipeline_mode<synchronous>, transform_indices = @transform_1, window_bounds = array<i64: 5, 512>}, {pipeline_mode = #tpu.pipeline_mode<synchronous>, transform_indices = @transform_2, window_bounds = array<i64: 1, 512>}, {pipeline_mode = #tpu.pipeline_mode<synchronous>, transform_indices = @transform_3, window_bounds = array<i64: 5, 512, 512>}, {pipeline_mode = #tpu.pipeline_mode<synchronous>, transform_indices = @transform_4, window_bounds = array<i64: 5, 1, 512>}, {pipeline_mode = #tpu.pipeline_mode<synchronous>, transform_indices = @transform_5, window_bounds = array<i64: 512, 128>}, {pipeline_mode = #tpu.pipeline_mode<synchronous>, transform_indices = @transform_6, window_bounds = array<i64: 1, 128>}, {transform_indices = @transform_7, window_bounds = array<i64: 8, 128>}]} {
    %c0 = arith.constant 0 : index
    %c0_0 = arith.constant 0 : index
    %0 = vector.load %arg1[%c0, %c0_0] : memref<8x5xf32, #tpu.memory_space<vmem>>, vector<8x5xf32>
    %c0_1 = arith.constant 0 : index
    %c0_2 = arith.constant 0 : index
    %1 = vector.load %arg2[%c0_1, %c0_2] : memref<5x512xf32, #tpu.memory_space<vmem>>, vector<5x512xf32>
    %2 = vector.extract_strided_slice %0 {offsets = [0, 0], sizes = [8, 1], strides = [1, 1]} : vector<8x5xf32> to vector<8x1xf32>
    %3 = vector.extract_strided_slice %1 {offsets = [0, 0], sizes = [1, 512], strides = [1, 1]} : vector<5x512xf32> to vector<1x512xf32>
    %4 = vector.broadcast %2 : vector<8x1xf32> to vector<8x512xf32>
    %5 = vector.broadcast %3 : vector<1x512xf32> to vector<8x512xf32>
    %6 = arith.mulf %4, %5 : vector<8x512xf32>
    %c0_3 = arith.constant 0 : index
    %c0_4 = arith.constant 0 : index
    %7 = vector.load %arg3[%c0_3, %c0_4] : memref<1x512xf32, #tpu.memory_space<vmem>>, vector<1x512xf32>
    %8 = vector.broadcast %7 : vector<1x512xf32> to vector<8x512xf32>
    %9 = arith.addf %6, %8 : vector<8x512xf32>
    %10 = vector.extract_strided_slice %0 {offsets = [0, 1], sizes = [8, 1], strides = [1, 1]} : vector<8x5xf32> to vector<8x1xf32>
    %11 = vector.extract_strided_slice %1 {offsets = [1, 0], sizes = [1, 512], strides = [1, 1]} : vector<5x512xf32> to vector<1x512xf32>
    %12 = vector.broadcast %10 : vector<8x1xf32> to vector<8x512xf32>
    %13 = vector.broadcast %11 : vector<1x512xf32> to vector<8x512xf32>
    %14 = arith.mulf %12, %13 : vector<8x512xf32>
    %15 = arith.addf %9, %14 : vector<8x512xf32>
    %16 = vector.extract_strided_slice %0 {offsets = [0, 2], sizes = [8, 1], strides = [1, 1]} : vector<8x5xf32> to vector<8x1xf32>
    %17 = vector.extract_strided_slice %1 {offsets = [2, 0], sizes = [1, 512], strides = [1, 1]} : vector<5x512xf32> to vector<1x512xf32>
    %18 = vector.broadcast %16 : vector<8x1xf32> to vector<8x512xf32>
    %19 = vector.broadcast %17 : vector<1x512xf32> to vector<8x512xf32>
    %20 = arith.mulf %18, %19 : vector<8x512xf32>
    %21 = arith.addf %15, %20 : vector<8x512xf32>
    %22 = vector.extract_strided_slice %0 {offsets = [0, 3], sizes = [8, 1], strides = [1, 1]} : vector<8x5xf32> to vector<8x1xf32>
    %23 = vector.extract_strided_slice %1 {offsets = [3, 0], sizes = [1, 512], strides = [1, 1]} : vector<5x512xf32> to vector<1x512xf32>
    %24 = vector.broadcast %22 : vector<8x1xf32> to vector<8x512xf32>
    %25 = vector.broadcast %23 : vector<1x512xf32> to vector<8x512xf32>
    %26 = arith.mulf %24, %25 : vector<8x512xf32>
    %27 = arith.addf %21, %26 : vector<8x512xf32>
    %28 = vector.extract_strided_slice %0 {offsets = [0, 4], sizes = [8, 1], strides = [1, 1]} : vector<8x5xf32> to vector<8x1xf32>
    %29 = vector.extract_strided_slice %1 {offsets = [4, 0], sizes = [1, 512], strides = [1, 1]} : vector<5x512xf32> to vector<1x512xf32>
    %30 = vector.broadcast %28 : vector<8x1xf32> to vector<8x512xf32>
    %31 = vector.broadcast %29 : vector<1x512xf32> to vector<8x512xf32>
    %32 = arith.mulf %30, %31 : vector<8x512xf32>
    %33 = arith.addf %27, %32 : vector<8x512xf32>
    %34 = arith.truncf %33 : vector<8x512xf32> to vector<8x512xbf16>
    %c0_5 = arith.constant 0 : index
    %c0_6 = arith.constant 0 : index
    %c0_7 = arith.constant 0 : index
    %35 = vector.load %arg4[%c0_5, %c0_6, %c0_7] : memref<5x512x512xbf16, #tpu.memory_space<vmem>>, vector<1x512x512xbf16>
    %36 = vector.shape_cast %35 : vector<1x512x512xbf16> to vector<512x512xbf16>
    %cst = arith.constant dense<0.000000e+00> : vector<8x512xf32>
    %37 = tpu.matmul %34, %36, %cst {dimension_numbers = #tpu.dot_dimension_numbers<[1], [0], [0], [1], [0, 0, 1, 1], [], []>} : vector<8x512xbf16>, vector<512x512xbf16>, vector<8x512xf32> -> vector<8x512xf32>
    %c0_8 = arith.constant 0 : index
    %c0_9 = arith.constant 0 : index
    %c0_10 = arith.constant 0 : index
    %38 = vector.load %arg5[%c0_8, %c0_9, %c0_10] : memref<5x1x512xf32, #tpu.memory_space<vmem>>, vector<1x1x512xf32>
    %39 = vector.shape_cast %38 : vector<1x1x512xf32> to vector<1x512xf32>
    %40 = vector.broadcast %39 : vector<1x512xf32> to vector<8x512xf32>
    %41 = arith.addf %37, %40 : vector<8x512xf32>
    %42 = arith.truncf %41 : vector<8x512xf32> to vector<8x512xbf16>
    %43 = math.tanh %42 : vector<8x512xbf16>
    %c1 = arith.constant 1 : index
    %c0_11 = arith.constant 0 : index
    %c0_12 = arith.constant 0 : index
    %44 = vector.load %arg4[%c1, %c0_11, %c0_12] : memref<5x512x512xbf16, #tpu.memory_space<vmem>>, vector<1x512x512xbf16>
    %45 = vector.shape_cast %44 : vector<1x512x512xbf16> to vector<512x512xbf16>
    %cst_13 = arith.constant dense<0.000000e+00> : vector<8x512xf32>
    %46 = tpu.matmul %43, %45, %cst_13 {dimension_numbers = #tpu.dot_dimension_numbers<[1], [0], [0], [1], [0, 0, 1, 1], [], []>} : vector<8x512xbf16>, vector<512x512xbf16>, vector<8x512xf32> -> vector<8x512xf32>
    %c1_14 = arith.constant 1 : index
    %c0_15 = arith.constant 0 : index
    %c0_16 = arith.constant 0 : index
    %47 = vector.load %arg5[%c1_14, %c0_15, %c0_16] : memref<5x1x512xf32, #tpu.memory_space<vmem>>, vector<1x1x512xf32>
    %48 = vector.shape_cast %47 : vector<1x1x512xf32> to vector<1x512xf32>
    %49 = vector.broadcast %48 : vector<1x512xf32> to vector<8x512xf32>
    %50 = arith.addf %46, %49 : vector<8x512xf32>
    %51 = arith.truncf %50 : vector<8x512xf32> to vector<8x512xbf16>
    %52 = math.tanh %51 : vector<8x512xbf16>
    %c2 = arith.constant 2 : index
    %c0_17 = arith.constant 0 : index
    %c0_18 = arith.constant 0 : index
    %53 = vector.load %arg4[%c2, %c0_17, %c0_18] : memref<5x512x512xbf16, #tpu.memory_space<vmem>>, vector<1x512x512xbf16>
    %54 = vector.shape_cast %53 : vector<1x512x512xbf16> to vector<512x512xbf16>
    %cst_19 = arith.constant dense<0.000000e+00> : vector<8x512xf32>
    %55 = tpu.matmul %52, %54, %cst_19 {dimension_numbers = #tpu.dot_dimension_numbers<[1], [0], [0], [1], [0, 0, 1, 1], [], []>} : vector<8x512xbf16>, vector<512x512xbf16>, vector<8x512xf32> -> vector<8x512xf32>
    %c2_20 = arith.constant 2 : index
    %c0_21 = arith.constant 0 : index
    %c0_22 = arith.constant 0 : index
    %56 = vector.load %arg5[%c2_20, %c0_21, %c0_22] : memref<5x1x512xf32, #tpu.memory_space<vmem>>, vector<1x1x512xf32>
    %57 = vector.shape_cast %56 : vector<1x1x512xf32> to vector<1x512xf32>
    %58 = vector.broadcast %57 : vector<1x512xf32> to vector<8x512xf32>
    %59 = arith.addf %55, %58 : vector<8x512xf32>
    %60 = arith.truncf %59 : vector<8x512xf32> to vector<8x512xbf16>
    %61 = math.tanh %60 : vector<8x512xbf16>
    %c3 = arith.constant 3 : index
    %c0_23 = arith.constant 0 : index
    %c0_24 = arith.constant 0 : index
    %62 = vector.load %arg4[%c3, %c0_23, %c0_24] : memref<5x512x512xbf16, #tpu.memory_space<vmem>>, vector<1x512x512xbf16>
    %63 = vector.shape_cast %62 : vector<1x512x512xbf16> to vector<512x512xbf16>
    %cst_25 = arith.constant dense<0.000000e+00> : vector<8x512xf32>
    %64 = tpu.matmul %61, %63, %cst_25 {dimension_numbers = #tpu.dot_dimension_numbers<[1], [0], [0], [1], [0, 0, 1, 1], [], []>} : vector<8x512xbf16>, vector<512x512xbf16>, vector<8x512xf32> -> vector<8x512xf32>
    %c3_26 = arith.constant 3 : index
    %c0_27 = arith.constant 0 : index
    %c0_28 = arith.constant 0 : index
    %65 = vector.load %arg5[%c3_26, %c0_27, %c0_28] : memref<5x1x512xf32, #tpu.memory_space<vmem>>, vector<1x1x512xf32>
    %66 = vector.shape_cast %65 : vector<1x1x512xf32> to vector<1x512xf32>
    %67 = vector.broadcast %66 : vector<1x512xf32> to vector<8x512xf32>
    %68 = arith.addf %64, %67 : vector<8x512xf32>
    %69 = arith.truncf %68 : vector<8x512xf32> to vector<8x512xbf16>
    %70 = math.tanh %69 : vector<8x512xbf16>
    %c4 = arith.constant 4 : index
    %c0_29 = arith.constant 0 : index
    %c0_30 = arith.constant 0 : index
    %71 = vector.load %arg4[%c4, %c0_29, %c0_30] : memref<5x512x512xbf16, #tpu.memory_space<vmem>>, vector<1x512x512xbf16>
    %72 = vector.shape_cast %71 : vector<1x512x512xbf16> to vector<512x512xbf16>
    %cst_31 = arith.constant dense<0.000000e+00> : vector<8x512xf32>
    %73 = tpu.matmul %70, %72, %cst_31 {dimension_numbers = #tpu.dot_dimension_numbers<[1], [0], [0], [1], [0, 0, 1, 1], [], []>} : vector<8x512xbf16>, vector<512x512xbf16>, vector<8x512xf32> -> vector<8x512xf32>
    %c4_32 = arith.constant 4 : index
    %c0_33 = arith.constant 0 : index
    %c0_34 = arith.constant 0 : index
    %74 = vector.load %arg5[%c4_32, %c0_33, %c0_34] : memref<5x1x512xf32, #tpu.memory_space<vmem>>, vector<1x1x512xf32>
    %75 = vector.shape_cast %74 : vector<1x1x512xf32> to vector<1x512xf32>
    %76 = vector.broadcast %75 : vector<1x512xf32> to vector<8x512xf32>
    %77 = arith.addf %73, %76 : vector<8x512xf32>
    %78 = arith.truncf %77 : vector<8x512xf32> to vector<8x512xbf16>
    %79 = math.tanh %78 : vector<8x512xbf16>
    %c0_35 = arith.constant 0 : index
    %c0_36 = arith.constant 0 : index
    %80 = vector.load %arg6[%c0_35, %c0_36] : memref<512x128xbf16, #tpu.memory_space<vmem>>, vector<512x128xbf16>
    %cst_37 = arith.constant dense<0.000000e+00> : vector<8x128xf32>
    %81 = tpu.matmul %79, %80, %cst_37 {dimension_numbers = #tpu.dot_dimension_numbers<[1], [0], [0], [1], [0, 0, 1, 1], [], []>} : vector<8x512xbf16>, vector<512x128xbf16>, vector<8x128xf32> -> vector<8x128xf32>
    %c0_38 = arith.constant 0 : index
    %c0_39 = arith.constant 0 : index
    %82 = vector.load %arg7[%c0_38, %c0_39] : memref<1x128xf32, #tpu.memory_space<vmem>>, vector<1x128xf32>
    %83 = vector.broadcast %82 : vector<1x128xf32> to vector<8x128xf32>
    %84 = arith.addf %81, %83 : vector<8x128xf32>
    %c0_40 = arith.constant 0 : index
    %c0_41 = arith.constant 0 : index
    %85 = vector.load %arg8[%c0_40, %c0_41] : memref<8x128xf32, #tpu.memory_space<vmem>>, vector<8x128xf32>
    tpu.vector_store %arg8[%c0_40, %c0_41], %84 {strides = array<i32>} : memref<8x128xf32, #tpu.memory_space<vmem>>, vector<8x128xf32>,
    return
  }
  func.func @transform_0(%arg0: i32) -> (i32, i32) {
    %c0_i32 = arith.constant 0 : i32
    %c0_i32_0 = arith.constant 0 : i32
    return %arg0, %c0_i32 : i32, i32
  }
  func.func @transform_1(%arg0: i32) -> (i32, i32) {
    %c0_i32 = arith.constant 0 : i32
    %c0_i32_0 = arith.constant 0 : i32
    %c0_i32_1 = arith.constant 0 : i32
    return %c0_i32, %c0_i32_0 : i32, i32
  }
  func.func @transform_2(%arg0: i32) -> (i32, i32) {
    %c0_i32 = arith.constant 0 : i32
    %c0_i32_0 = arith.constant 0 : i32
    %c0_i32_1 = arith.constant 0 : i32
    return %c0_i32, %c0_i32_0 : i32, i32
  }
  func.func @transform_3(%arg0: i32) -> (i32, i32, i32) {
    %c0_i32 = arith.constant 0 : i32
    %c0_i32_0 = arith.constant 0 : i32
    %c0_i32_1 = arith.constant 0 : i32
    %c0_i32_2 = arith.constant 0 : i32
    return %c0_i32, %c0_i32_0, %c0_i32_1 : i32, i32, i32
  }
  func.func @transform_4(%arg0: i32) -> (i32, i32, i32) {
    %c0_i32 = arith.constant 0 : i32
    %c0_i32_0 = arith.constant 0 : i32
    %c0_i32_1 = arith.constant 0 : i32
    %c0_i32_2 = arith.constant 0 : i32
    return %c0_i32, %c0_i32_0, %c0_i32_1 : i32, i32, i32
  }
  func.func @transform_5(%arg0: i32) -> (i32, i32) {
    %c0_i32 = arith.constant 0 : i32
    %c0_i32_0 = arith.constant 0 : i32
    %c0_i32_1 = arith.constant 0 : i32
    return %c0_i32, %c0_i32_0 : i32, i32
  }
  func.func @transform_6(%arg0: i32) -> (i32, i32) {
    %c0_i32 = arith.constant 0 : i32
    %c0_i32_0 = arith.constant 0 : i32
    %c0_i32_1 = arith.constant 0 : i32
    return %c0_i32, %c0_i32_0 : i32, i32
  }
  func.func @transform_7(%arg0: i32) -> (i32, i32) {
    %c0_i32 = arith.constant 0 : i32
    %c0_i32_0 = arith.constant 0 : i32
    return %arg0, %c0_i32 : i32, i32
  }
}

</mosaic_0001>

<llo_original>
// kernel: mlp_forward.1
$region0: #{mlp_forward.1}
  #allocation0 [shape = 'u32[]', space=smem, size = 0x4, offset = 0x4, fixed_abs, tag = 'smem constant byte address 0x4 - core index']
  #allocation1 [shape = 'u32[72,128]{1,0:T(1,128)}', space=vmem, size = 0x9000, scoped, tag = 'internal scratch']
  %s0 = inlined_call_operand.hbm [shape: f32[8,5], index: 0, kind: input, shape index: {}]
  %s1 = inlined_call_operand.hbm [shape: f32[5,512], index: 1, kind: input, shape index: {}]
  %s2 = inlined_call_operand.hbm [shape: f32[1,512], index: 2, kind: input, shape index: {}]
  %s3 = inlined_call_operand.hbm [shape: bf16[5,512,512], index: 3, kind: input, shape index: {}]
  %s4 = inlined_call_operand.hbm [shape: f32[5,1,512], index: 4, kind: input, shape index: {}]
  %s5 = inlined_call_operand.hbm [shape: bf16[512,128], index: 5, kind: input, shape index: {}]
  %s6 = inlined_call_operand.hbm [shape: f32[1,128], index: 6, kind: input, shape index: {}]
  %s7 = inlined_call_operand.vmem [shape: f32[8,128], index: 7, kind: output, shape index: {}]
  %s8 = sld [smem:[#allocation0]]
  $region66: #{mlp_forward.1} parent=0
    _
  %s10 = ssub.s32 1, %s8
  %s11 = scalar_select 0, %s10, %s8
  $region1: #{mlp_forward.1} parent=0
    #allocation2 [shape = 'u8[4096]{0}', space=vmem, size = 0x1000, scoped, tag = 'input window, operand 0, single buffered']
    #allocation3 [shape = 's32[1]{0}', space=sflag, size = 0x4, scoped, tag = 'scoped memory for mlp_forward.1']
    #allocation4 [shape = 'u8[16384]{0}', space=vmem, size = 0x4000, scoped, tag = 'input window, operand 1, single buffered']
    #allocation5 [shape = 's32[1]{0}', space=sflag, size = 0x4, scoped, tag = 'scoped memory for mlp_forward.1']
    #allocation6 [shape = 'u8[2048]{0}', space=vmem, size = 0x800, scoped, tag = 'input window, operand 2, single buffered']
    #allocation7 [shape = 'u8[2621440]{0}', space=vmem, size = 0x280000, scoped, tag = 'input window, operand 3, single buffered']
    #allocation8 [shape = 's32[1]{0}', space=sflag, size = 0x4, scoped, tag = 'scoped memory for mlp_forward.1']
    #allocation9 [shape = 'u8[10240]{0}', space=vmem, size = 0x2800, scoped, tag = 'input window, operand 4, single buffered']
    #allocation10 [shape = 'u8[131072]{0}', space=vmem, size = 0x20000, scoped, tag = 'input window, operand 5, single buffered']
    #allocation11 [shape = 's32[1]{0}', space=sflag, size = 0x4, scoped, tag = 'scoped memory for mlp_forward.1']
    #allocation12 [shape = 'u8[512]{0}', space=vmem, size = 0x400, scoped, tag = 'input window, operand 6, single buffered']
    %12 = vsyncpa [#allocation3], 0
    %13 = vsyncpa [#allocation5], 0
    %14 = vsyncpa [#allocation8], 0
    %15 = vsyncpa [#allocation11], 0
    // Predicated region
    $region2: #{mlp_forward.1} parent=1 // pred_check
      _
    $region3: #{mlp_forward.1} parent=1 // pred_check_branch
      %17 = sbr.rel (0) target = $region5
    $region4: #{mlp_forward.1} parent=1 // pred_region
      %19 = vsyncadd [#allocation3], 0
      %s21 = sshll.u32 %s0, 4
      %s22 = int_to_ptr.hbm [resolvable:$true] %s21
      %s23 = sshll.u32 [#allocation2], 4
      %s24 = int_to_ptr.vmem [resolvable:$true] %s23
      %26 = dma.hbm_to_vmem [thread:$0]  %s22, 128, %s24, [#allocation3]
    $region5: #{mlp_forward.1} parent=1 // pred_fallthru
      _
    // Predicated region
    $region6: #{mlp_forward.1} parent=1 // pred_check
      _
    $region7: #{mlp_forward.1} parent=1 // pred_check_branch
      %28 = sbr.rel (0) target = $region9
    $region8: #{mlp_forward.1} parent=1 // pred_region
      %30 = vsyncadd [#allocation5], 0
      %s32 = sshll.u32 %s1, 4
      %s33 = int_to_ptr.hbm [resolvable:$true] %s32
      %s34 = sshll.u32 [#allocation4], 4
      %s35 = int_to_ptr.vmem [resolvable:$true] %s34
      %37 = dma.hbm_to_vmem [thread:$0]  %s33, 512, %s35, [#allocation5]
    $region9: #{mlp_forward.1} parent=1 // pred_fallthru
      _
    // Predicated region
    $region10: #{mlp_forward.1} parent=1 // pred_check
      _
    $region11: #{mlp_forward.1} parent=1 // pred_check_branch
      %39 = sbr.rel (0) target = $region13
    $region12: #{mlp_forward.1} parent=1 // pred_region
      %41 = vsyncadd [#allocation5], 0
      %s43 = sshll.u32 %s2, 4
      %s44 = int_to_ptr.hbm [resolvable:$true] %s43
      %s45 = sshll.u32 [#allocation6], 4
      %s46 = int_to_ptr.vmem [resolvable:$true] %s45
      %48 = dma.hbm_to_vmem [thread:$0]  %s44, 64, %s46, [#allocation5]
    $region13: #{mlp_forward.1} parent=1 // pred_fallthru
      _
    // Predicated region
    $region14: #{mlp_forward.1} parent=1 // pred_check
      _
    $region15: #{mlp_forward.1} parent=1 // pred_check_branch
      %50 = sbr.rel (0) target = $region17
    $region16: #{mlp_forward.1} parent=1 // pred_region
      %52 = vsyncadd [#allocation8], 0
      %s53 = sshll.u32 %s3, 4
      %s54 = int_to_ptr.hbm [resolvable:$true] %s53
      %s55 = sshll.u32 [#allocation7], 4
      %s56 = int_to_ptr.vmem [resolvable:$true] %s55
      %61 = dma.hbm_to_vmem [thread:$0]  %s54, 81920, %s56, [#allocation8], 256, 256, 16
    $region17: #{mlp_forward.1} parent=1 // pred_fallthru
      _
    // Predicated region
    $region18: #{mlp_forward.1} parent=1 // pred_check
      _
    $region19: #{mlp_forward.1} parent=1 // pred_check_branch
      %63 = sbr.rel (0) target = $region21
    $region20: #{mlp_forward.1} parent=1 // pred_region
      %65 = vsyncadd [#allocation8], 0
      %s66 = sshll.u32 %s4, 4
      %s67 = int_to_ptr.hbm [resolvable:$true] %s66
      %s68 = sshll.u32 [#allocation9], 4
      %s69 = int_to_ptr.vmem [resolvable:$true] %s68
      %74 = dma.hbm_to_vmem [thread:$0]  %s67, 320, %s69, [#allocation8], 64, 64, 4
    $region21: #{mlp_forward.1} parent=1 // pred_fallthru
      _
    // Predicated region
    $region22: #{mlp_forward.1} parent=1 // pred_check
      _
    $region23: #{mlp_forward.1} parent=1 // pred_check_branch
      %76 = sbr.rel (0) target = $region25
    $region24: #{mlp_forward.1} parent=1 // pred_region
      %78 = vsyncadd [#allocation11], 0
      %s79 = sshll.u32 %s5, 4
      %s80 = int_to_ptr.hbm [resolvable:$true] %s79
      %s81 = sshll.u32 [#allocation10], 4
      %s82 = int_to_ptr.vmem [resolvable:$true] %s81
      %87 = dma.hbm_to_vmem [thread:$0]  %s80, 4096, %s82, [#allocation11], 64, 64, 4
    $region25: #{mlp_forward.1} parent=1 // pred_fallthru
      _
    // Predicated region
    $region26: #{mlp_forward.1} parent=1 // pred_check
      _
    $region27: #{mlp_forward.1} parent=1 // pred_check_branch
      %89 = sbr.rel (0) target = $region29
    $region28: #{mlp_forward.1} parent=1 // pred_region
      %91 = vsyncadd [#allocation11], 0
      %s93 = sshll.u32 %s6, 4
      %s94 = int_to_ptr.hbm [resolvable:$true] %s93
      %s95 = sshll.u32 [#allocation12], 4
      %s96 = int_to_ptr.vmem [resolvable:$true] %s95
      %98 = dma.hbm_to_vmem [thread:$0]  %s94, 16, %s96, [#allocation11]
    $region29: #{mlp_forward.1} parent=1 // pred_fallthru
      _
    // Predicated region
    $region30: #{mlp_forward.1} parent=1 // pred_check
      _
    $region31: #{mlp_forward.1} parent=1 // pred_check_branch
      %100 = sbr.rel (0) target = $region33
    $region32: #{mlp_forward.1} parent=1 // pred_region
      %102 = dma.done [#allocation3], 128
    $region33: #{mlp_forward.1} parent=1 // pred_fallthru
      _
    // Predicated region
    $region34: #{mlp_forward.1} parent=1 // pred_check
      _
    $region35: #{mlp_forward.1} parent=1 // pred_check_branch
      %104 = sbr.rel (0) target = $region37
    $region36: #{mlp_forward.1} parent=1 // pred_region
      %106 = dma.done [#allocation5], 512
    $region37: #{mlp_forward.1} parent=1 // pred_fallthru
      _
    // Predicated region
    $region38: #{mlp_forward.1} parent=1 // pred_check
      _
    $region39: #{mlp_forward.1} parent=1 // pred_check_branch
      %108 = sbr.rel (0) target = $region41
    $region40: #{mlp_forward.1} parent=1 // pred_region
      %110 = dma.done [#allocation5], 64
    $region41: #{mlp_forward.1} parent=1 // pred_fallthru
      _
    // Predicated region
    $region42: #{mlp_forward.1} parent=1 // pred_check
      _
    $region43: #{mlp_forward.1} parent=1 // pred_check_branch
      %112 = sbr.rel (0) target = $region45
    $region44: #{mlp_forward.1} parent=1 // pred_region
      %114 = dma.done [#allocation8], 81920
    $region45: #{mlp_forward.1} parent=1 // pred_fallthru
      _
    // Predicated region
    $region46: #{mlp_forward.1} parent=1 // pred_check
      _
    $region47: #{mlp_forward.1} parent=1 // pred_check_branch
      %116 = sbr.rel (0) target = $region49
    $region48: #{mlp_forward.1} parent=1 // pred_region
      %118 = dma.done [#allocation8], 320
    $region49: #{mlp_forward.1} parent=1 // pred_fallthru
      _
    // Predicated region
    $region50: #{mlp_forward.1} parent=1 // pred_check
      _
    $region51: #{mlp_forward.1} parent=1 // pred_check_branch
      %120 = sbr.rel (0) target = $region53
    $region52: #{mlp_forward.1} parent=1 // pred_region
      %122 = dma.done [#allocation11], 4096
    $region53: #{mlp_forward.1} parent=1 // pred_fallthru
      _
    // Predicated region
    $region54: #{mlp_forward.1} parent=1 // pred_check
      _
    $region55: #{mlp_forward.1} parent=1 // pred_check_branch
      %124 = sbr.rel (0) target = $region57
    $region56: #{mlp_forward.1} parent=1 // pred_region
      %126 = dma.done [#allocation11], 16
    $region57: #{mlp_forward.1} parent=1 // pred_fallthru
      _
    %v127 = vld [vmem:[#allocation2] sm:$0xff]
    %v128 = vld [vmem:[#allocation4] sm:$0x1f]
    %v129 = vld [vmem:[#allocation4 + $0x8] sm:$0x1f]
    %v130 = vld [vmem:[#allocation4 + $0x10] sm:$0x1f]
    %v131 = vld [vmem:[#allocation4 + $0x18] sm:$0x1f]
    %133 = vset.pattern.permute.xlu0 0
    %134 = vperm.xlu0 %133, %v127
    %v135 = vpop.permute.xlu0 %134
    %v137 = vperm.slane %v128, 0
    %v138 = vperm.slane %v129, 0
    %v139 = vperm.slane %v130, 0
    %v140 = vperm.slane %v131, 0
    %v141 = vmul.f32 %v135, %v137
    %v142 = vmul.f32 %v135, %v138
    %v143 = vmul.f32 %v135, %v139
    %v144 = vmul.f32 %v135, %v140
    %v145 = vld [vmem:[#allocation6] sm:$0xf]
    %v147 = vperm.slane %v145, 0
    %v148 = vperm.slane %v145, 1
    %v149 = vperm.slane %v145, 2
    %v150 = vperm.slane %v145, 3
    %v155 = vadd.f32 %v141, %v147
    %v156 = vadd.f32 %v142, %v148
    %v157 = vadd.f32 %v143, %v149
    %v158 = vadd.f32 %v144, %v150
    %159 = vset.pattern.permute.xlu0 1
    %160 = vperm.xlu0 %159, %v127
    %v161 = vpop.permute.xlu0 %160
    %v163 = vperm.slane %v128, 1
    %v164 = vperm.slane %v129, 1
    %v165 = vperm.slane %v130, 1
    %v166 = vperm.slane %v131, 1
    %v167 = vmul.f32 %v161, %v163
    %v168 = vmul.f32 %v161, %v164
    %v169 = vmul.f32 %v161, %v165
    %v170 = vmul.f32 %v161, %v166
    %v171 = vadd.f32 %v155, %v167
    %v172 = vadd.f32 %v156, %v168
    %v173 = vadd.f32 %v157, %v169
    %v174 = vadd.f32 %v158, %v170
    %175 = vset.pattern.permute.xlu0 2
    %176 = vperm.xlu0 %175, %v127
    %v177 = vpop.permute.xlu0 %176
    %v179 = vperm.slane %v128, 2
    %v180 = vperm.slane %v129, 2
    %v181 = vperm.slane %v130, 2
    %v182 = vperm.slane %v131, 2
    %v183 = vmul.f32 %v177, %v179
    %v184 = vmul.f32 %v177, %v180
    %v185 = vmul.f32 %v177, %v181
    %v186 = vmul.f32 %v177, %v182
    %v187 = vadd.f32 %v171, %v183
    %v188 = vadd.f32 %v172, %v184
    %v189 = vadd.f32 %v173, %v185
    %v190 = vadd.f32 %v174, %v186
    %191 = vset.pattern.permute.xlu0 3
    %192 = vperm.xlu0 %191, %v127
    %v193 = vpop.permute.xlu0 %192
    %v195 = vperm.slane %v128, 3
    %v196 = vperm.slane %v129, 3
    %v197 = vperm.slane %v130, 3
    %v198 = vperm.slane %v131, 3
    %v199 = vmul.f32 %v193, %v195
    %v200 = vmul.f32 %v193, %v196
    %v201 = vmul.f32 %v193, %v197
    %v202 = vmul.f32 %v193, %v198
    %v203 = vadd.f32 %v187, %v199
    %v204 = vadd.f32 %v188, %v200
    %v205 = vadd.f32 %v189, %v201
    %v206 = vadd.f32 %v190, %v202
    %207 = vset.pattern.permute.xlu0 4
    %208 = vperm.xlu0 %207, %v127
    %v209 = vpop.permute.xlu0 %208
    %v211 = vperm.slane %v128, 4
    %v212 = vperm.slane %v129, 4
    %v213 = vperm.slane %v130, 4
    %v214 = vperm.slane %v131, 4
    %v215 = vmul.f32 %v209, %v211
    %v216 = vmul.f32 %v209, %v212
    %v217 = vmul.f32 %v209, %v213
    %v218 = vmul.f32 %v209, %v214
    %v219 = vadd.f32 %v203, %v215
    %v220 = vadd.f32 %v204, %v216
    %v221 = vadd.f32 %v205, %v217
    %v222 = vadd.f32 %v206, %v218
    %v223 = vpack.c.bf16 %v219, %v219
    %v224 = vpack.c.bf16 %v220, %v220
    %v225 = vpack.c.bf16 %v221, %v221
    %v226 = vpack.c.bf16 %v222, %v222
    %v227 = vld [vmem:[#allocation7] sm:$0xff]
    %v228 = vld [vmem:[#allocation7 + $0x8] sm:$0xff]
    %v229 = vld [vmem:[#allocation7 + $0x10] sm:$0xff]
    %v230 = vld [vmem:[#allocation7 + $0x18] sm:$0xff]
    %v231 = vld [vmem:[#allocation7 + $0x20] sm:$0xff]
    %v232 = vld [vmem:[#allocation7 + $0x28] sm:$0xff]
    %v233 = vld [vmem:[#allocation7 + $0x30] sm:$0xff]
    %v234 = vld [vmem:[#allocation7 + $0x38] sm:$0xff]
    %v235 = vld [vmem:[#allocation7 + $0x40] sm:$0xff]
    %v236 = vld [vmem:[#allocation7 + $0x48] sm:$0xff]
    %v237 = vld [vmem:[#allocation7 + $0x50] sm:$0xff]
    %v238 = vld [vmem:[#allocation7 + $0x58] sm:$0xff]
    %v239 = vld [vmem:[#allocation7 + $0x60] sm:$0xff]
    %v240 = vld [vmem:[#allocation7 + $0x68] sm:$0xff]
    %v241 = vld [vmem:[#allocation7 + $0x70] sm:$0xff]
    %v242 = vld [vmem:[#allocation7 + $0x78] sm:$0xff]
    %v243 = vld [vmem:[#allocation7 + $0x80] sm:$0xff]
    %v244 = vld [vmem:[#allocation7 + $0x88] sm:$0xff]
    %v245 = vld [vmem:[#allocation7 + $0x90] sm:$0xff]
    %v246 = vld [vmem:[#allocation7 + $0x98] sm:$0xff]
    %v247 = vld [vmem:[#allocation7 + $0xa0] sm:$0xff]
    %v248 = vld [vmem:[#allocation7 + $0xa8] sm:$0xff]
    %v249 = vld [vmem:[#allocation7 + $0xb0] sm:$0xff]
    %v250 = vld [vmem:[#allocation7 + $0xb8] sm:$0xff]
    %v251 = vld [vmem:[#allocation7 + $0xc0] sm:$0xff]
    %v252 = vld [vmem:[#allocation7 + $0xc8] sm:$0xff]
    %v253 = vld [vmem:[#allocation7 + $0xd0] sm:$0xff]
    %v254 = vld [vmem:[#allocation7 + $0xd8] sm:$0xff]
    %v255 = vld [vmem:[#allocation7 + $0xe0] sm:$0xff]
    %v256 = vld [vmem:[#allocation7 + $0xe8] sm:$0xff]
    %v257 = vld [vmem:[#allocation7 + $0xf0] sm:$0xff]
    %v258 = vld [vmem:[#allocation7 + $0xf8] sm:$0xff]
    %v259 = vld [vmem:[#allocation7 + $0x100] sm:$0xff]
    %v260 = vld [vmem:[#allocation7 + $0x108] sm:$0xff]
    %v261 = vld [vmem:[#allocation7 + $0x110] sm:$0xff]
    %v262 = vld [vmem:[#allocation7 + $0x118] sm:$0xff]
    %v263 = vld [vmem:[#allocation7 + $0x120] sm:$0xff]
    %v264 = vld [vmem:[#allocation7 + $0x128] sm:$0xff]
    %v265 = vld [vmem:[#allocation7 + $0x130] sm:$0xff]
    %v266 = vld [vmem:[#allocation7 + $0x138] sm:$0xff]
    %v267 = vld [vmem:[#allocation7 + $0x140] sm:$0xff]
    %v268 = vld [vmem:[#allocation7 + $0x148] sm:$0xff]
    %v269 = vld [vmem:[#allocation7 + $0x150] sm:$0xff]
    %v270 = vld [vmem:[#allocation7 + $0x158] sm:$0xff]
    %v271 = vld [vmem:[#allocation7 + $0x160] sm:$0xff]
    %v272 = vld [vmem:[#allocation7 + $0x168] sm:$0xff]
    %v273 = vld [vmem:[#allocation7 + $0x170] sm:$0xff]
    %v274 = vld [vmem:[#allocation7 + $0x178] sm:$0xff]
    %v275 = vld [vmem:[#allocation7 + $0x180] sm:$0xff]
    %v276 = vld [vmem:[#allocation7 + $0x188] sm:$0xff]
    %v277 = vld [vmem:[#allocation7 + $0x190] sm:$0xff]
    %v278 = vld [vmem:[#allocation7 + $0x198] sm:$0xff]
    %v279 = vld [vmem:[#allocation7 + $0x1a0] sm:$0xff]
    %v280 = vld [vmem:[#allocation7 + $0x1a8] sm:$0xff]
    %v281 = vld [vmem:[#allocation7 + $0x1b0] sm:$0xff]
    %v282 = vld [vmem:[#allocation7 + $0x1b8] sm:$0xff]
    %v283 = vld [vmem:[#allocation7 + $0x1c0] sm:$0xff]
    %v284 = vld [vmem:[#allocation7 + $0x1c8] sm:$0xff]
    %v285 = vld [vmem:[#allocation7 + $0x1d0] sm:$0xff]
    %v286 = vld [vmem:[#allocation7 + $0x1d8] sm:$0xff]
    %v287 = vld [vmem:[#allocation7 + $0x1e0] sm:$0xff]
    %v288 = vld [vmem:[#allocation7 + $0x1e8] sm:$0xff]
    %v289 = vld [vmem:[#allocation7 + $0x1f0] sm:$0xff]
    %v290 = vld [vmem:[#allocation7 + $0x1f8] sm:$0xff]
    %v291 = vld [vmem:[#allocation7 + $0x200] sm:$0xff]
    %v292 = vld [vmem:[#allocation7 + $0x208] sm:$0xff]
    %v293 = vld [vmem:[#allocation7 + $0x210] sm:$0xff]
    %v294 = vld [vmem:[#allocation7 + $0x218] sm:$0xff]
    %v295 = vld [vmem:[#allocation7 + $0x220] sm:$0xff]
    %v296 = vld [vmem:[#allocation7 + $0x228] sm:$0xff]
    %v297 = vld [vmem:[#allocation7 + $0x230] sm:$0xff]
    %v298 = vld [vmem:[#allocation7 + $0x238] sm:$0xff]
    %v299 = vld [vmem:[#allocation7 + $0x240] sm:$0xff]
    %v300 = vld [vmem:[#allocation7 + $0x248] sm:$0xff]
    %v301 = vld [vmem:[#allocation7 + $0x250] sm:$0xff]
    %v302 = vld [vmem:[#allocation7 + $0x258] sm:$0xff]
    %v303 = vld [vmem:[#allocation7 + $0x260] sm:$0xff]
    %v304 = vld [vmem:[#allocation7 + $0x268] sm:$0xff]
    %v305 = vld [vmem:[#allocation7 + $0x270] sm:$0xff]
    %v306 = vld [vmem:[#allocation7 + $0x278] sm:$0xff]
    %v307 = vld [vmem:[#allocation7 + $0x280] sm:$0xff]
    %v308 = vld [vmem:[#allocation7 + $0x288] sm:$0xff]
    %v309 = vld [vmem:[#allocation7 + $0x290] sm:$0xff]
    %v310 = vld [vmem:[#allocation7 + $0x298] sm:$0xff]
    %v311 = vld [vmem:[#allocation7 + $0x2a0] sm:$0xff]
    %v312 = vld [vmem:[#allocation7 + $0x2a8] sm:$0xff]
    %v313 = vld [vmem:[#allocation7 + $0x2b0] sm:$0xff]
    %v314 = vld [vmem:[#allocation7 + $0x2b8] sm:$0xff]
    %v315 = vld [vmem:[#allocation7 + $0x2c0] sm:$0xff]
    %v316 = vld [vmem:[#allocation7 + $0x2c8] sm:$0xff]
    %v317 = vld [vmem:[#allocation7 + $0x2d0] sm:$0xff]
    %v318 = vld [vmem:[#allocation7 + $0x2d8] sm:$0xff]
    %v319 = vld [vmem:[#allocation7 + $0x2e0] sm:$0xff]
    %v320 = vld [vmem:[#allocation7 + $0x2e8] sm:$0xff]
    %v321 = vld [vmem:[#allocation7 + $0x2f0] sm:$0xff]
    %v322 = vld [vmem:[#allocation7 + $0x2f8] sm:$0xff]
    %v323 = vld [vmem:[#allocation7 + $0x300] sm:$0xff]
    %v324 = vld [vmem:[#allocation7 + $0x308] sm:$0xff]
    %v325 = vld [vmem:[#allocation7 + $0x310] sm:$0xff]
    %v326 = vld [vmem:[#allocation7 + $0x318] sm:$0xff]
    %v327 = vld [vmem:[#allocation7 + $0x320] sm:$0xff]
    %v328 = vld [vmem:[#allocation7 + $0x328] sm:$0xff]
    %v329 = vld [vmem:[#allocation7 + $0x330] sm:$0xff]
    %v330 = vld [vmem:[#allocation7 + $0x338] sm:$0xff]
    %v331 = vld [vmem:[#allocation7 + $0x340] sm:$0xff]
    %v332 = vld [vmem:[#allocation7 + $0x348] sm:$0xff]
    %v333 = vld [vmem:[#allocation7 + $0x350] sm:$0xff]
    %v334 = vld [vmem:[#allocation7 + $0x358] sm:$0xff]
    %v335 = vld [vmem:[#allocation7 + $0x360] sm:$0xff]
    %v336 = vld [vmem:[#allocation7 + $0x368] sm:$0xff]
    %v337 = vld [vmem:[#allocation7 + $0x370] sm:$0xff]
    %v338 = vld [vmem:[#allocation7 + $0x378] sm:$0xff]
    %v339 = vld [vmem:[#allocation7 + $0x380] sm:$0xff]
    %v340 = vld [vmem:[#allocation7 + $0x388] sm:$0xff]
    %v341 = vld [vmem:[#allocation7 + $0x390] sm:$0xff]
    %v342 = vld [vmem:[#allocation7 + $0x398] sm:$0xff]
    %v343 = vld [vmem:[#allocation7 + $0x3a0] sm:$0xff]
    %v344 = vld [vmem:[#allocation7 + $0x3a8] sm:$0xff]
    %v345 = vld [vmem:[#allocation7 + $0x3b0] sm:$0xff]
    %v346 = vld [vmem:[#allocation7 + $0x3b8] sm:$0xff]
    %v347 = vld [vmem:[#allocation7 + $0x3c0] sm:$0xff]
    %v348 = vld [vmem:[#allocation7 + $0x3c8] sm:$0xff]
    %v349 = vld [vmem:[#allocation7 + $0x3d0] sm:$0xff]
    %v350 = vld [vmem:[#allocation7 + $0x3d8] sm:$0xff]
    %v351 = vld [vmem:[#allocation7 + $0x3e0] sm:$0xff]
    %v352 = vld [vmem:[#allocation7 + $0x3e8] sm:$0xff]
    %v353 = vld [vmem:[#allocation7 + $0x3f0] sm:$0xff]
    %v354 = vld [vmem:[#allocation7 + $0x3f8] sm:$0xff]
    %v355 = vld [vmem:[#allocation9] sm:$0xf]
    %v357 = vperm.slane %v355, 0
    %v358 = vperm.slane %v355, 1
    %v359 = vperm.slane %v355, 2
    %v360 = vperm.slane %v355, 3
    %v493 = vunpack.c.l.b16 %v227
    %v494 = vunpack.c.h.b16 %v227
    %v495 = vunpack.c.l.b16 %v228
    %v496 = vunpack.c.h.b16 %v228
    %v497 = vunpack.c.l.b16 %v229
    %v498 = vunpack.c.h.b16 %v229
    %v499 = vunpack.c.l.b16 %v230
    %v500 = vunpack.c.h.b16 %v230
    %v501 = vunpack.c.l.b16 %v231
    %v502 = vunpack.c.h.b16 %v231
    %v503 = vunpack.c.l.b16 %v232
    %v504 = vunpack.c.h.b16 %v232
    %v505 = vunpack.c.l.b16 %v233
    %v506 = vunpack.c.h.b16 %v233
    %v507 = vunpack.c.l.b16 %v234
    %v508 = vunpack.c.h.b16 %v234
    %v509 = vunpack.c.l.b16 %v235
    %v510 = vunpack.c.h.b16 %v235
    %v511 = vunpack.c.l.b16 %v236
    %v512 = vunpack.c.h.b16 %v236
    %v513 = vunpack.c.l.b16 %v237
    %v514 = vunpack.c.h.b16 %v237
    %v515 = vunpack.c.l.b16 %v238
    %v516 = vunpack.c.h.b16 %v238
    %v517 = vunpack.c.l.b16 %v239
    %v518 = vunpack.c.h.b16 %v239
    %v519 = vunpack.c.l.b16 %v240
    %v520 = vunpack.c.h.b16 %v240
    %v521 = vunpack.c.l.b16 %v241
    %v522 = vunpack.c.h.b16 %v241
    %v523 = vunpack.c.l.b16 %v242
    %v524 = vunpack.c.h.b16 %v242
    %v525 = vunpack.c.l.b16 %v243
    %v526 = vunpack.c.h.b16 %v243
    %v527 = vunpack.c.l.b16 %v244
    %v528 = vunpack.c.h.b16 %v244
    %v529 = vunpack.c.l.b16 %v245
    %v530 = vunpack.c.h.b16 %v245
    %v531 = vunpack.c.l.b16 %v246
    %v532 = vunpack.c.h.b16 %v246
    %v533 = vunpack.c.l.b16 %v247
    %v534 = vunpack.c.h.b16 %v247
    %v535 = vunpack.c.l.b16 %v248
    %v536 = vunpack.c.h.b16 %v248
    %v537 = vunpack.c.l.b16 %v249
    %v538 = vunpack.c.h.b16 %v249
    %v539 = vunpack.c.l.b16 %v250
    %v540 = vunpack.c.h.b16 %v250
    %v541 = vunpack.c.l.b16 %v251
    %v542 = vunpack.c.h.b16 %v251
    %v543 = vunpack.c.l.b16 %v252
    %v544 = vunpack.c.h.b16 %v252
    %v545 = vunpack.c.l.b16 %v253
    %v546 = vunpack.c.h.b16 %v253
    %v547 = vunpack.c.l.b16 %v254
    %v548 = vunpack.c.h.b16 %v254
    %v549 = vunpack.c.l.b16 %v255
    %v550 = vunpack.c.h.b16 %v255
    %v551 = vunpack.c.l.b16 %v256
    %v552 = vunpack.c.h.b16 %v256
    %v553 = vunpack.c.l.b16 %v257
    %v554 = vunpack.c.h.b16 %v257
    %v555 = vunpack.c.l.b16 %v258
    %v556 = vunpack.c.h.b16 %v258
    %v557 = vunpack.c.l.b16 %v259
    %v558 = vunpack.c.h.b16 %v259
    %v559 = vunpack.c.l.b16 %v260
    %v560 = vunpack.c.h.b16 %v260
    %v561 = vunpack.c.l.b16 %v261
    %v562 = vunpack.c.h.b16 %v261
    %v563 = vunpack.c.l.b16 %v262
    %v564 = vunpack.c.h.b16 %v262
    %v565 = vunpack.c.l.b16 %v263
    %v566 = vunpack.c.h.b16 %v263
    %v567 = vunpack.c.l.b16 %v264
    %v568 = vunpack.c.h.b16 %v264
    %v569 = vunpack.c.l.b16 %v265
    %v570 = vunpack.c.h.b16 %v265
    %v571 = vunpack.c.l.b16 %v266
    %v572 = vunpack.c.h.b16 %v266
    %v573 = vunpack.c.l.b16 %v267
    %v574 = vunpack.c.h.b16 %v267
    %v575 = vunpack.c.l.b16 %v268
    %v576 = vunpack.c.h.b16 %v268
    %v577 = vunpack.c.l.b16 %v269
    %v578 = vunpack.c.h.b16 %v269
    %v579 = vunpack.c.l.b16 %v270
    %v580 = vunpack.c.h.b16 %v270
    %v581 = vunpack.c.l.b16 %v271
    %v582 = vunpack.c.h.b16 %v271
    %v583 = vunpack.c.l.b16 %v272
    %v584 = vunpack.c.h.b16 %v272
    %v585 = vunpack.c.l.b16 %v273
    %v586 = vunpack.c.h.b16 %v273
    %v587 = vunpack.c.l.b16 %v274
    %v588 = vunpack.c.h.b16 %v274
    %v589 = vunpack.c.l.b16 %v275
    %v590 = vunpack.c.h.b16 %v275
    %v591 = vunpack.c.l.b16 %v276
    %v592 = vunpack.c.h.b16 %v276
    %v593 = vunpack.c.l.b16 %v277
    %v594 = vunpack.c.h.b16 %v277
    %v595 = vunpack.c.l.b16 %v278
    %v596 = vunpack.c.h.b16 %v278
    %v597 = vunpack.c.l.b16 %v279
    %v598 = vunpack.c.h.b16 %v279
    %v599 = vunpack.c.l.b16 %v280
    %v600 = vunpack.c.h.b16 %v280
    %v601 = vunpack.c.l.b16 %v281
    %v602 = vunpack.c.h.b16 %v281
    %v603 = vunpack.c.l.b16 %v282
    %v604 = vunpack.c.h.b16 %v282
    %v605 = vunpack.c.l.b16 %v283
    %v606 = vunpack.c.h.b16 %v283
    %v607 = vunpack.c.l.b16 %v284
    %v608 = vunpack.c.h.b16 %v284
    %v609 = vunpack.c.l.b16 %v285
    %v610 = vunpack.c.h.b16 %v285
    %v611 = vunpack.c.l.b16 %v286
    %v612 = vunpack.c.h.b16 %v286
    %v613 = vunpack.c.l.b16 %v287
    %v614 = vunpack.c.h.b16 %v287
    %v615 = vunpack.c.l.b16 %v288
    %v616 = vunpack.c.h.b16 %v288
    %v617 = vunpack.c.l.b16 %v289
    %v618 = vunpack.c.h.b16 %v289
    %v619 = vunpack.c.l.b16 %v290
    %v620 = vunpack.c.h.b16 %v290
    %v621 = vunpack.c.l.b16 %v291
    %v622 = vunpack.c.h.b16 %v291
    %v623 = vunpack.c.l.b16 %v292
    %v624 = vunpack.c.h.b16 %v292
    %v625 = vunpack.c.l.b16 %v293
    %v626 = vunpack.c.h.b16 %v293
    %v627 = vunpack.c.l.b16 %v294
    %v628 = vunpack.c.h.b16 %v294
    %v629 = vunpack.c.l.b16 %v295
    %v630 = vunpack.c.h.b16 %v295
    %v631 = vunpack.c.l.b16 %v296
    %v632 = vunpack.c.h.b16 %v296
    %v633 = vunpack.c.l.b16 %v297
    %v634 = vunpack.c.h.b16 %v297
    %v635 = vunpack.c.l.b16 %v298
    %v636 = vunpack.c.h.b16 %v298
    %v637 = vunpack.c.l.b16 %v299
    %v638 = vunpack.c.h.b16 %v299
    %v639 = vunpack.c.l.b16 %v300
    %v640 = vunpack.c.h.b16 %v300
    %v641 = vunpack.c.l.b16 %v301
    %v642 = vunpack.c.h.b16 %v301
    %v643 = vunpack.c.l.b16 %v302
    %v644 = vunpack.c.h.b16 %v302
    %v645 = vunpack.c.l.b16 %v303
    %v646 = vunpack.c.h.b16 %v303
    %v647 = vunpack.c.l.b16 %v304
    %v648 = vunpack.c.h.b16 %v304
    %v649 = vunpack.c.l.b16 %v305
    %v650 = vunpack.c.h.b16 %v305
    %v651 = vunpack.c.l.b16 %v306
    %v652 = vunpack.c.h.b16 %v306
    %v653 = vunpack.c.l.b16 %v307
    %v654 = vunpack.c.h.b16 %v307
    %v655 = vunpack.c.l.b16 %v308
    %v656 = vunpack.c.h.b16 %v308
    %v657 = vunpack.c.l.b16 %v309
    %v658 = vunpack.c.h.b16 %v309
    %v659 = vunpack.c.l.b16 %v310
    %v660 = vunpack.c.h.b16 %v310
    %v661 = vunpack.c.l.b16 %v311
    %v662 = vunpack.c.h.b16 %v311
    %v663 = vunpack.c.l.b16 %v312
    %v664 = vunpack.c.h.b16 %v312
    %v665 = vunpack.c.l.b16 %v313
    %v666 = vunpack.c.h.b16 %v313
    %v667 = vunpack.c.l.b16 %v314
    %v668 = vunpack.c.h.b16 %v314
    %v669 = vunpack.c.l.b16 %v315
    %v670 = vunpack.c.h.b16 %v315
    %v671 = vunpack.c.l.b16 %v316
    %v672 = vunpack.c.h.b16 %v316
    %v673 = vunpack.c.l.b16 %v317
    %v674 = vunpack.c.h.b16 %v317
    %v675 = vunpack.c.l.b16 %v318
    %v676 = vunpack.c.h.b16 %v318
    %v677 = vunpack.c.l.b16 %v319
    %v678 = vunpack.c.h.b16 %v319
    %v679 = vunpack.c.l.b16 %v320
    %v680 = vunpack.c.h.b16 %v320
    %v681 = vunpack.c.l.b16 %v321
    %v682 = vunpack.c.h.b16 %v321
    %v683 = vunpack.c.l.b16 %v322
    %v684 = vunpack.c.h.b16 %v322
    %v685 = vunpack.c.l.b16 %v323
    %v686 = vunpack.c.h.b16 %v323
    %v687 = vunpack.c.l.b16 %v324
    %v688 = vunpack.c.h.b16 %v324
    %v689 = vunpack.c.l.b16 %v325
    %v690 = vunpack.c.h.b16 %v325
    %v691 = vunpack.c.l.b16 %v326
    %v692 = vunpack.c.h.b16 %v326
    %v693 = vunpack.c.l.b16 %v327
    %v694 = vunpack.c.h.b16 %v327
    %v695 = vunpack.c.l.b16 %v328
    %v696 = vunpack.c.h.b16 %v328
    %v697 = vunpack.c.l.b16 %v329
    %v698 = vunpack.c.h.b16 %v329
    %v699 = vunpack.c.l.b16 %v330
    %v700 = vunpack.c.h.b16 %v330
    %v701 = vunpack.c.l.b16 %v331
    %v702 = vunpack.c.h.b16 %v331
    %v703 = vunpack.c.l.b16 %v332
    %v704 = vunpack.c.h.b16 %v332
    %v705 = vunpack.c.l.b16 %v333
    %v706 = vunpack.c.h.b16 %v333
    %v707 = vunpack.c.l.b16 %v334
    %v708 = vunpack.c.h.b16 %v334
    %v709 = vunpack.c.l.b16 %v335
    %v710 = vunpack.c.h.b16 %v335
    %v711 = vunpack.c.l.b16 %v336
    %v712 = vunpack.c.h.b16 %v336
    %v713 = vunpack.c.l.b16 %v337
    %v714 = vunpack.c.h.b16 %v337
    %v715 = vunpack.c.l.b16 %v338
    %v716 = vunpack.c.h.b16 %v338
    %v717 = vunpack.c.l.b16 %v339
    %v718 = vunpack.c.h.b16 %v339
    %v719 = vunpack.c.l.b16 %v340
    %v720 = vunpack.c.h.b16 %v340
    %v721 = vunpack.c.l.b16 %v341
    %v722 = vunpack.c.h.b16 %v341
    %v723 = vunpack.c.l.b16 %v342
    %v724 = vunpack.c.h.b16 %v342
    %v725 = vunpack.c.l.b16 %v343
    %v726 = vunpack.c.h.b16 %v343
    %v727 = vunpack.c.l.b16 %v344
    %v728 = vunpack.c.h.b16 %v344
    %v729 = vunpack.c.l.b16 %v345
    %v730 = vunpack.c.h.b16 %v345
    %v731 = vunpack.c.l.b16 %v346
    %v732 = vunpack.c.h.b16 %v346
    %v733 = vunpack.c.l.b16 %v347
    %v734 = vunpack.c.h.b16 %v347
    %v735 = vunpack.c.l.b16 %v348
    %v736 = vunpack.c.h.b16 %v348
    %v737 = vunpack.c.l.b16 %v349
    %v738 = vunpack.c.h.b16 %v349
    %v739 = vunpack.c.l.b16 %v350
    %v740 = vunpack.c.h.b16 %v350
    %v741 = vunpack.c.l.b16 %v351
    %v742 = vunpack.c.h.b16 %v351
    %v743 = vunpack.c.l.b16 %v352
    %v744 = vunpack.c.h.b16 %v352
    %v745 = vunpack.c.l.b16 %v353
    %v746 = vunpack.c.h.b16 %v353
    %v747 = vunpack.c.l.b16 %v354
    %v748 = vunpack.c.h.b16 %v354
    %v749 = vpack.c.b16 %v497, %v493
    %v750 = vpack.c.b16 %v498, %v494
    %v751 = vpack.c.b16 %v499, %v495
    %v752 = vpack.c.b16 %v500, %v496
    %v753 = vpack.c.b16 %v505, %v501
    %v754 = vpack.c.b16 %v506, %v502
    %v755 = vpack.c.b16 %v507, %v503
    %v756 = vpack.c.b16 %v508, %v504
    %v757 = vpack.c.b16 %v513, %v509
    %v758 = vpack.c.b16 %v514, %v510
    %v759 = vpack.c.b16 %v515, %v511
    %v760 = vpack.c.b16 %v516, %v512
    %v761 = vpack.c.b16 %v521, %v517
    %v762 = vpack.c.b16 %v522, %v518
    %v763 = vpack.c.b16 %v523, %v519
    %v764 = vpack.c.b16 %v524, %v520
    %v765 = vpack.c.b16 %v529, %v525
    %v766 = vpack.c.b16 %v530, %v526
    %v767 = vpack.c.b16 %v531, %v527
    %v768 = vpack.c.b16 %v532, %v528
    %v769 = vpack.c.b16 %v537, %v533
    %v770 = vpack.c.b16 %v538, %v534
    %v771 = vpack.c.b16 %v539, %v535
    %v772 = vpack.c.b16 %v540, %v536
    %v773 = vpack.c.b16 %v545, %v541
    %v774 = vpack.c.b16 %v546, %v542
    %v775 = vpack.c.b16 %v547, %v543
    %v776 = vpack.c.b16 %v548, %v544
    %v777 = vpack.c.b16 %v553, %v549
    %v778 = vpack.c.b16 %v554, %v550
    %v779 = vpack.c.b16 %v555, %v551
    %v780 = vpack.c.b16 %v556, %v552
    %v781 = vpack.c.b16 %v561, %v557
    %v782 = vpack.c.b16 %v562, %v558
    %v783 = vpack.c.b16 %v563, %v559
    %v784 = vpack.c.b16 %v564, %v560
    %v785 = vpack.c.b16 %v569, %v565
    %v786 = vpack.c.b16 %v570, %v566
    %v787 = vpack.c.b16 %v571, %v567
    %v788 = vpack.c.b16 %v572, %v568
    %v789 = vpack.c.b16 %v577, %v573
    %v790 = vpack.c.b16 %v578, %v574
    %v791 = vpack.c.b16 %v579, %v575
    %v792 = vpack.c.b16 %v580, %v576
    %v793 = vpack.c.b16 %v585, %v581
    %v794 = vpack.c.b16 %v586, %v582
    %v795 = vpack.c.b16 %v587, %v583
    %v796 = vpack.c.b16 %v588, %v584
    %v797 = vpack.c.b16 %v593, %v589
    %v798 = vpack.c.b16 %v594, %v590
    %v799 = vpack.c.b16 %v595, %v591
    %v800 = vpack.c.b16 %v596, %v592
    %v801 = vpack.c.b16 %v601, %v597
    %v802 = vpack.c.b16 %v602, %v598
    %v803 = vpack.c.b16 %v603, %v599
    %v804 = vpack.c.b16 %v604, %v600
    %v805 = vpack.c.b16 %v609, %v605
    %v806 = vpack.c.b16 %v610, %v606
    %v807 = vpack.c.b16 %v611, %v607
    %v808 = vpack.c.b16 %v612, %v608
    %v809 = vpack.c.b16 %v617, %v613
    %v810 = vpack.c.b16 %v618, %v614
    %v811 = vpack.c.b16 %v619, %v615
    %v812 = vpack.c.b16 %v620, %v616
    %v813 = vpack.c.b16 %v625, %v621
    %v814 = vpack.c.b16 %v626, %v622
    %v815 = vpack.c.b16 %v627, %v623
    %v816 = vpack.c.b16 %v628, %v624
    %v817 = vpack.c.b16 %v633, %v629
    %v818 = vpack.c.b16 %v634, %v630
    %v819 = vpack.c.b16 %v635, %v631
    %v820 = vpack.c.b16 %v636, %v632
    %v821 = vpack.c.b16 %v641, %v637
    %v822 = vpack.c.b16 %v642, %v638
    %v823 = vpack.c.b16 %v643, %v639
    %v824 = vpack.c.b16 %v644, %v640
    %v825 = vpack.c.b16 %v649, %v645
    %v826 = vpack.c.b16 %v650, %v646
    %v827 = vpack.c.b16 %v651, %v647
    %v828 = vpack.c.b16 %v652, %v648
    %v829 = vpack.c.b16 %v657, %v653
    %v830 = vpack.c.b16 %v658, %v654
    %v831 = vpack.c.b16 %v659, %v655
    %v832 = vpack.c.b16 %v660, %v656
    %v833 = vpack.c.b16 %v665, %v661
    %v834 = vpack.c.b16 %v666, %v662
    %v835 = vpack.c.b16 %v667, %v663
    %v836 = vpack.c.b16 %v668, %v664
    %v837 = vpack.c.b16 %v673, %v669
    %v838 = vpack.c.b16 %v674, %v670
    %v839 = vpack.c.b16 %v675, %v671
    %v840 = vpack.c.b16 %v676, %v672
    %v841 = vpack.c.b16 %v681, %v677
    %v842 = vpack.c.b16 %v682, %v678
    %v843 = vpack.c.b16 %v683, %v679
    %v844 = vpack.c.b16 %v684, %v680
    %v845 = vpack.c.b16 %v689, %v685
    %v846 = vpack.c.b16 %v690, %v686
    %v847 = vpack.c.b16 %v691, %v687
    %v848 = vpack.c.b16 %v692, %v688
    %v849 = vpack.c.b16 %v697, %v693
    %v850 = vpack.c.b16 %v698, %v694
    %v851 = vpack.c.b16 %v699, %v695
    %v852 = vpack.c.b16 %v700, %v696
    %v853 = vpack.c.b16 %v705, %v701
    %v854 = vpack.c.b16 %v706, %v702
    %v855 = vpack.c.b16 %v707, %v703
    %v856 = vpack.c.b16 %v708, %v704
    %v857 = vpack.c.b16 %v713, %v709
    %v858 = vpack.c.b16 %v714, %v710
    %v859 = vpack.c.b16 %v715, %v711
    %v860 = vpack.c.b16 %v716, %v712
    %v861 = vpack.c.b16 %v721, %v717
    %v862 = vpack.c.b16 %v722, %v718
    %v863 = vpack.c.b16 %v723, %v719
    %v864 = vpack.c.b16 %v724, %v720
    %v865 = vpack.c.b16 %v729, %v725
    %v866 = vpack.c.b16 %v730, %v726
    %v867 = vpack.c.b16 %v731, %v727
    %v868 = vpack.c.b16 %v732, %v728
    %v869 = vpack.c.b16 %v737, %v733
    %v870 = vpack.c.b16 %v738, %v734
    %v871 = vpack.c.b16 %v739, %v735
    %v872 = vpack.c.b16 %v740, %v736
    %v873 = vpack.c.b16 %v745, %v741
    %v874 = vpack.c.b16 %v746, %v742
    %v875 = vpack.c.b16 %v747, %v743
    %v876 = vpack.c.b16 %v748, %v744
    %1005 = vmatpush.bf16.msra.mxu0 %v777
    %1006 = vmatpush.bf16.msra.mxu0 %v773
    %1007 = vmatpush.bf16.msra.mxu0 %v769
    %1008 = vmatpush.bf16.msra.mxu0 %v765
    %1009 = vmatpush.bf16.msra.mxu0 %v761
    %1010 = vmatpush.bf16.msra.mxu0 %v757
    %1011 = vmatpush.bf16.msra.mxu0 %v753
    %1012 = vmatpush.bf16.msra.mxu0 %v749
    %1013 = vmatmul.bf16.gmra.mxu0 %v223
    %v1014 = vpop.f32.mrf.mxu0
    %v1015 = vadd.f32 %v357, %v1014
    %v1016 = vpop.f32.mrf.mxu0
    %1017 = vdwg.mxu0
    %1018 = vmatpush.bf16.msra.mxu0 %v809
    %1019 = vmatpush.bf16.msra.mxu0 %v805
    %1020 = vmatpush.bf16.msra.mxu0 %v801
    %1021 = vmatpush.bf16.msra.mxu0 %v797
    %1022 = vmatpush.bf16.msra.mxu0 %v793
    %1023 = vmatpush.bf16.msra.mxu0 %v789
    %1024 = vmatpush.bf16.msra.mxu0 %v785
    %1025 = vmatpush.bf16.msra.mxu0 %v781
    %1026 = vmatmul.bf16.gmra.mxu0 %v224
    %v1027 = vpop.f32.mrf.mxu0
    %v1028 = vadd.f32 %v1015, %v1027
    %v1029 = vpop.f32.mrf.mxu0
    %1030 = vdwg.mxu0
    %1031 = vmatpush.bf16.msra.mxu0 %v841
    %1032 = vmatpush.bf16.msra.mxu0 %v837
    %1033 = vmatpush.bf16.msra.mxu0 %v833
    %1034 = vmatpush.bf16.msra.mxu0 %v829
    %1035 = vmatpush.bf16.msra.mxu0 %v825
    %1036 = vmatpush.bf16.msra.mxu0 %v821
    %1037 = vmatpush.bf16.msra.mxu0 %v817
    %1038 = vmatpush.bf16.msra.mxu0 %v813
    %1039 = vmatmul.bf16.gmra.mxu0 %v225
    %v1040 = vpop.f32.mrf.mxu0
    %v1041 = vadd.f32 %v1028, %v1040
    %v1042 = vpop.f32.mrf.mxu0
    %1043 = vdwg.mxu0
    %1044 = vmatpush.bf16.msra.mxu0 %v873
    %1045 = vmatpush.bf16.msra.mxu0 %v869
    %1046 = vmatpush.bf16.msra.mxu0 %v865
    %1047 = vmatpush.bf16.msra.mxu0 %v861
    %1048 = vmatpush.bf16.msra.mxu0 %v857
    %1049 = vmatpush.bf16.msra.mxu0 %v853
    %1050 = vmatpush.bf16.msra.mxu0 %v849
    %1051 = vmatpush.bf16.msra.mxu0 %v845
    %1052 = vmatmul.bf16.gmra.mxu0 %v226
    %v1053 = vpop.f32.mrf.mxu0
    %v1054 = vadd.f32 %v1041, %v1053
    %v1055 = vpop.f32.mrf.mxu0
    %1056 = vdwg.mxu0
    %1057 = vmatpush.bf16.msra.mxu0 %v778
    %1058 = vmatpush.bf16.msra.mxu0 %v774
    %1059 = vmatpush.bf16.msra.mxu0 %v770
    %1060 = vmatpush.bf16.msra.mxu0 %v766
    %1061 = vmatpush.bf16.msra.mxu0 %v762
    %1062 = vmatpush.bf16.msra.mxu0 %v758
    %1063 = vmatpush.bf16.msra.mxu0 %v754
    %1064 = vmatpush.bf16.msra.mxu0 %v750
    %1065 = vmatmul.bf16.gmra.mxu0 %v223
    %v1066 = vpop.f32.mrf.mxu0
    %v1067 = vadd.f32 %v358, %v1066
    %v1068 = vpop.f32.mrf.mxu0
    %1069 = vdwg.mxu0
    %1070 = vmatpush.bf16.msra.mxu0 %v810
    %1071 = vmatpush.bf16.msra.mxu0 %v806
    %1072 = vmatpush.bf16.msra.mxu0 %v802
    %1073 = vmatpush.bf16.msra.mxu0 %v798
    %1074 = vmatpush.bf16.msra.mxu0 %v794
    %1075 = vmatpush.bf16.msra.mxu0 %v790
    %1076 = vmatpush.bf16.msra.mxu0 %v786
    %1077 = vmatpush.bf16.msra.mxu0 %v782
    %1078 = vmatmul.bf16.gmra.mxu0 %v224
    %v1079 = vpop.f32.mrf.mxu0
    %v1080 = vadd.f32 %v1067, %v1079
    %v1081 = vpop.f32.mrf.mxu0
    %1082 = vdwg.mxu0
    %1083 = vmatpush.bf16.msra.mxu0 %v842
    %1084 = vmatpush.bf16.msra.mxu0 %v838
    %1085 = vmatpush.bf16.msra.mxu0 %v834
    %1086 = vmatpush.bf16.msra.mxu0 %v830
    %1087 = vmatpush.bf16.msra.mxu0 %v826
    %1088 = vmatpush.bf16.msra.mxu0 %v822
    %1089 = vmatpush.bf16.msra.mxu0 %v818
    %1090 = vmatpush.bf16.msra.mxu0 %v814
    %1091 = vmatmul.bf16.gmra.mxu0 %v225
    %v1092 = vpop.f32.mrf.mxu0
    %v1093 = vadd.f32 %v1080, %v1092
    %v1094 = vpop.f32.mrf.mxu0
    %1095 = vdwg.mxu0
    %1096 = vmatpush.bf16.msra.mxu0 %v874
    %1097 = vmatpush.bf16.msra.mxu0 %v870
    %1098 = vmatpush.bf16.msra.mxu0 %v866
    %1099 = vmatpush.bf16.msra.mxu0 %v862
    %1100 = vmatpush.bf16.msra.mxu0 %v858
    %1101 = vmatpush.bf16.msra.mxu0 %v854
    %1102 = vmatpush.bf16.msra.mxu0 %v850
    %1103 = vmatpush.bf16.msra.mxu0 %v846
    %1104 = vmatmul.bf16.gmra.mxu0 %v226
    %v1105 = vpop.f32.mrf.mxu0
    %v1106 = vadd.f32 %v1093, %v1105
    %v1107 = vpop.f32.mrf.mxu0
    %1108 = vdwg.mxu0
    %1109 = vmatpush.bf16.msra.mxu0 %v779
    %1110 = vmatpush.bf16.msra.mxu0 %v775
    %1111 = vmatpush.bf16.msra.mxu0 %v771
    %1112 = vmatpush.bf16.msra.mxu0 %v767
    %1113 = vmatpush.bf16.msra.mxu0 %v763
    %1114 = vmatpush.bf16.msra.mxu0 %v759
    %1115 = vmatpush.bf16.msra.mxu0 %v755
    %1116 = vmatpush.bf16.msra.mxu0 %v751
    %1117 = vmatmul.bf16.gmra.mxu0 %v223
    %v1118 = vpop.f32.mrf.mxu0
    %v1119 = vadd.f32 %v359, %v1118
    %v1120 = vpop.f32.mrf.mxu0
    %1121 = vdwg.mxu0
    %1122 = vmatpush.bf16.msra.mxu0 %v811
    %1123 = vmatpush.bf16.msra.mxu0 %v807
    %1124 = vmatpush.bf16.msra.mxu0 %v803
    %1125 = vmatpush.bf16.msra.mxu0 %v799
    %1126 = vmatpush.bf16.msra.mxu0 %v795
    %1127 = vmatpush.bf16.msra.mxu0 %v791
    %1128 = vmatpush.bf16.msra.mxu0 %v787
    %1129 = vmatpush.bf16.msra.mxu0 %v783
    %1130 = vmatmul.bf16.gmra.mxu0 %v224
    %v1131 = vpop.f32.mrf.mxu0
    %v1132 = vadd.f32 %v1119, %v1131
    %v1133 = vpop.f32.mrf.mxu0
    %1134 = vdwg.mxu0
    %1135 = vmatpush.bf16.msra.mxu0 %v843
    %1136 = vmatpush.bf16.msra.mxu0 %v839
    %1137 = vmatpush.bf16.msra.mxu0 %v835
    %1138 = vmatpush.bf16.msra.mxu0 %v831
    %1139 = vmatpush.bf16.msra.mxu0 %v827
    %1140 = vmatpush.bf16.msra.mxu0 %v823
    %1141 = vmatpush.bf16.msra.mxu0 %v819
    %1142 = vmatpush.bf16.msra.mxu0 %v815
    %1143 = vmatmul.bf16.gmra.mxu0 %v225
    %v1144 = vpop.f32.mrf.mxu0
    %v1145 = vadd.f32 %v1132, %v1144
    %v1146 = vpop.f32.mrf.mxu0
    %1147 = vdwg.mxu0
    %1148 = vmatpush.bf16.msra.mxu0 %v875
    %1149 = vmatpush.bf16.msra.mxu0 %v871
    %1150 = vmatpush.bf16.msra.mxu0 %v867
    %1151 = vmatpush.bf16.msra.mxu0 %v863
    %1152 = vmatpush.bf16.msra.mxu0 %v859
    %1153 = vmatpush.bf16.msra.mxu0 %v855
    %1154 = vmatpush.bf16.msra.mxu0 %v851
    %1155 = vmatpush.bf16.msra.mxu0 %v847
    %1156 = vmatmul.bf16.gmra.mxu0 %v226
    %v1157 = vpop.f32.mrf.mxu0
    %v1158 = vadd.f32 %v1145, %v1157
    %v1159 = vpop.f32.mrf.mxu0
    %1160 = vdwg.mxu0
    %1161 = vmatpush.bf16.msra.mxu0 %v780
    %1162 = vmatpush.bf16.msra.mxu0 %v776
    %1163 = vmatpush.bf16.msra.mxu0 %v772
    %1164 = vmatpush.bf16.msra.mxu0 %v768
    %1165 = vmatpush.bf16.msra.mxu0 %v764
    %1166 = vmatpush.bf16.msra.mxu0 %v760
    %1167 = vmatpush.bf16.msra.mxu0 %v756
    %1168 = vmatpush.bf16.msra.mxu0 %v752
    %1169 = vmatmul.bf16.gmra.mxu0 %v223
    %v1170 = vpop.f32.mrf.mxu0
    %v1171 = vadd.f32 %v360, %v1170
    %v1172 = vpop.f32.mrf.mxu0
    %1173 = vdwg.mxu0
    %1174 = vmatpush.bf16.msra.mxu0 %v812
    %1175 = vmatpush.bf16.msra.mxu0 %v808
    %1176 = vmatpush.bf16.msra.mxu0 %v804
    %1177 = vmatpush.bf16.msra.mxu0 %v800
    %1178 = vmatpush.bf16.msra.mxu0 %v796
    %1179 = vmatpush.bf16.msra.mxu0 %v792
    %1180 = vmatpush.bf16.msra.mxu0 %v788
    %1181 = vmatpush.bf16.msra.mxu0 %v784
    %1182 = vmatmul.bf16.gmra.mxu0 %v224
    %v1183 = vpop.f32.mrf.mxu0
    %v1184 = vadd.f32 %v1171, %v1183
    %v1185 = vpop.f32.mrf.mxu0
    %1186 = vdwg.mxu0
    %1187 = vmatpush.bf16.msra.mxu0 %v844
    %1188 = vmatpush.bf16.msra.mxu0 %v840
    %1189 = vmatpush.bf16.msra.mxu0 %v836
    %1190 = vmatpush.bf16.msra.mxu0 %v832
    %1191 = vmatpush.bf16.msra.mxu0 %v828
    %1192 = vmatpush.bf16.msra.mxu0 %v824
    %1193 = vmatpush.bf16.msra.mxu0 %v820
    %1194 = vmatpush.bf16.msra.mxu0 %v816
    %1195 = vmatmul.bf16.gmra.mxu0 %v225
    %v1196 = vpop.f32.mrf.mxu0
    %v1197 = vadd.f32 %v1184, %v1196
    %v1198 = vpop.f32.mrf.mxu0
    %1199 = vdwg.mxu0
    %1200 = vmatpush.bf16.msra.mxu0 %v876
    %1201 = vmatpush.bf16.msra.mxu0 %v872
    %1202 = vmatpush.bf16.msra.mxu0 %v868
    %1203 = vmatpush.bf16.msra.mxu0 %v864
    %1204 = vmatpush.bf16.msra.mxu0 %v860
    %1205 = vmatpush.bf16.msra.mxu0 %v856
    %1206 = vmatpush.bf16.msra.mxu0 %v852
    %1207 = vmatpush.bf16.msra.mxu0 %v848
    %1208 = vmatmul.bf16.gmra.mxu0 %v226
    %v1209 = vpop.f32.mrf.mxu0
    %v1210 = vadd.f32 %v1197, %v1209
    %v1211 = vpop.f32.mrf.mxu0
    %1212 = vdwg.mxu0
    %v1213 = vpack.c.bf16 %v1054, %v1054
    %v1214 = vpack.c.bf16 %v1106, %v1106
    %v1215 = vpack.c.bf16 %v1158, %v1158
    %v1216 = vpack.c.bf16 %v1210, %v1210
    %v1217 = vunpack.c.l.bf16 %v1213
    %v1218 = vunpack.c.l.bf16 %v1214
    %v1219 = vunpack.c.l.bf16 %v1215
    %v1220 = vunpack.c.l.bf16 %v1216
    %v1221 = vtanh.pop %v1217
    %v1222 = vtanh.pop %v1218
    %v1223 = vtanh.pop %v1219
    %v1224 = vtanh.pop %v1220
    %v1225 = vpack.c.bf16 %v1221, %v1221
    %v1226 = vpack.c.bf16 %v1222, %v1222
    %v1227 = vpack.c.bf16 %v1223, %v1223
    %v1228 = vpack.c.bf16 %v1224, %v1224
    %s1229 = scalar_lea.vmem [#allocation7], 1024
    %v1230 = vld [vmem:[%s1229] sm:$0xff]
    %v1231 = vld [vmem:[%s1229 + $0x8] sm:$0xff]
    %v1232 = vld [vmem:[%s1229 + $0x10] sm:$0xff]
    %v1233 = vld [vmem:[%s1229 + $0x18] sm:$0xff]
    %v1234 = vld [vmem:[%s1229 + $0x20] sm:$0xff]
    %v1235 = vld [vmem:[%s1229 + $0x28] sm:$0xff]
    %v1236 = vld [vmem:[%s1229 + $0x30] sm:$0xff]
    %v1237 = vld [vmem:[%s1229 + $0x38] sm:$0xff]
    %v1238 = vld [vmem:[%s1229 + $0x40] sm:$0xff]
    %v1239 = vld [vmem:[%s1229 + $0x48] sm:$0xff]
    %v1240 = vld [vmem:[%s1229 + $0x50] sm:$0xff]
    %v1241 = vld [vmem:[%s1229 + $0x58] sm:$0xff]
    %v1242 = vld [vmem:[%s1229 + $0x60] sm:$0xff]
    %v1243 = vld [vmem:[%s1229 + $0x68] sm:$0xff]
    %v1244 = vld [vmem:[%s1229 + $0x70] sm:$0xff]
    %v1245 = vld [vmem:[%s1229 + $0x78] sm:$0xff]
    %v1246 = vld [vmem:[%s1229 + $0x80] sm:$0xff]
    %v1247 = vld [vmem:[%s1229 + $0x88] sm:$0xff]
    %v1248 = vld [vmem:[%s1229 + $0x90] sm:$0xff]
    %v1249 = vld [vmem:[%s1229 + $0x98] sm:$0xff]
    %v1250 = vld [vmem:[%s1229 + $0xa0] sm:$0xff]
    %v1251 = vld [vmem:[%s1229 + $0xa8] sm:$0xff]
    %v1252 = vld [vmem:[%s1229 + $0xb0] sm:$0xff]
    %v1253 = vld [vmem:[%s1229 + $0xb8] sm:$0xff]
    %v1254 = vld [vmem:[%s1229 + $0xc0] sm:$0xff]
    %v1255 = vld [vmem:[%s1229 + $0xc8] sm:$0xff]
    %v1256 = vld [vmem:[%s1229 + $0xd0] sm:$0xff]
    %v1257 = vld [vmem:[%s1229 + $0xd8] sm:$0xff]
    %v1258 = vld [vmem:[%s1229 + $0xe0] sm:$0xff]
    %v1259 = vld [vmem:[%s1229 + $0xe8] sm:$0xff]
    %v1260 = vld [vmem:[%s1229 + $0xf0] sm:$0xff]
    %v1261 = vld [vmem:[%s1229 + $0xf8] sm:$0xff]
    %v1262 = vld [vmem:[%s1229 + $0x100] sm:$0xff]
    %v1263 = vld [vmem:[%s1229 + $0x108] sm:$0xff]
    %v1264 = vld [vmem:[%s1229 + $0x110] sm:$0xff]
    %v1265 = vld [vmem:[%s1229 + $0x118] sm:$0xff]
    %v1266 = vld [vmem:[%s1229 + $0x120] sm:$0xff]
    %v1267 = vld [vmem:[%s1229 + $0x128] sm:$0xff]
    %v1268 = vld [vmem:[%s1229 + $0x130] sm:$0xff]
    %v1269 = vld [vmem:[%s1229 + $0x138] sm:$0xff]
    %v1270 = vld [vmem:[%s1229 + $0x140] sm:$0xff]
    %v1271 = vld [vmem:[%s1229 + $0x148] sm:$0xff]
    %v1272 = vld [vmem:[%s1229 + $0x150] sm:$0xff]
    %v1273 = vld [vmem:[%s1229 + $0x158] sm:$0xff]
    %v1274 = vld [vmem:[%s1229 + $0x160] sm:$0xff]
    %v1275 = vld [vmem:[%s1229 + $0x168] sm:$0xff]
    %v1276 = vld [vmem:[%s1229 + $0x170] sm:$0xff]
    %v1277 = vld [vmem:[%s1229 + $0x178] sm:$0xff]
    %v1278 = vld [vmem:[%s1229 + $0x180] sm:$0xff]
    %v1279 = vld [vmem:[%s1229 + $0x188] sm:$0xff]
    %v1280 = vld [vmem:[%s1229 + $0x190] sm:$0xff]
    %v1281 = vld [vmem:[%s1229 + $0x198] sm:$0xff]
    %v1282 = vld [vmem:[%s1229 + $0x1a0] sm:$0xff]
    %v1283 = vld [vmem:[%s1229 + $0x1a8] sm:$0xff]
    %v1284 = vld [vmem:[%s1229 + $0x1b0] sm:$0xff]
    %v1285 = vld [vmem:[%s1229 + $0x1b8] sm:$0xff]
    %v1286 = vld [vmem:[%s1229 + $0x1c0] sm:$0xff]
    %v1287 = vld [vmem:[%s1229 + $0x1c8] sm:$0xff]
    %v1288 = vld [vmem:[%s1229 + $0x1d0] sm:$0xff]
    %v1289 = vld [vmem:[%s1229 + $0x1d8] sm:$0xff]
    %v1290 = vld [vmem:[%s1229 + $0x1e0] sm:$0xff]
    %v1291 = vld [vmem:[%s1229 + $0x1e8] sm:$0xff]
    %v1292 = vld [vmem:[%s1229 + $0x1f0] sm:$0xff]
    %v1293 = vld [vmem:[%s1229 + $0x1f8] sm:$0xff]
    %v1294 = vld [vmem:[%s1229 + $0x200] sm:$0xff]
    %v1295 = vld [vmem:[%s1229 + $0x208] sm:$0xff]
    %v1296 = vld [vmem:[%s1229 + $0x210] sm:$0xff]
    %v1297 = vld [vmem:[%s1229 + $0x218] sm:$0xff]
    %v1298 = vld [vmem:[%s1229 + $0x220] sm:$0xff]
    %v1299 = vld [vmem:[%s1229 + $0x228] sm:$0xff]
    %v1300 = vld [vmem:[%s1229 + $0x230] sm:$0xff]
    %v1301 = vld [vmem:[%s1229 + $0x238] sm:$0xff]
    %v1302 = vld [vmem:[%s1229 + $0x240] sm:$0xff]
    %v1303 = vld [vmem:[%s1229 + $0x248] sm:$0xff]
    %v1304 = vld [vmem:[%s1229 + $0x250] sm:$0xff]
    %v1305 = vld [vmem:[%s1229 + $0x258] sm:$0xff]
    %v1306 = vld [vmem:[%s1229 + $0x260] sm:$0xff]
    %v1307 = vld [vmem:[%s1229 + $0x268] sm:$0xff]
    %v1308 = vld [vmem:[%s1229 + $0x270] sm:$0xff]
    %v1309 = vld [vmem:[%s1229 + $0x278] sm:$0xff]
    %v1310 = vld [vmem:[%s1229 + $0x280] sm:$0xff]
    %v1311 = vld [vmem:[%s1229 + $0x288] sm:$0xff]
    %v1312 = vld [vmem:[%s1229 + $0x290] sm:$0xff]
    %v1313 = vld [vmem:[%s1229 + $0x298] sm:$0xff]
    %v1314 = vld [vmem:[%s1229 + $0x2a0] sm:$0xff]
    %v1315 = vld [vmem:[%s1229 + $0x2a8] sm:$0xff]
    %v1316 = vld [vmem:[%s1229 + $0x2b0] sm:$0xff]
    %v1317 = vld [vmem:[%s1229 + $0x2b8] sm:$0xff]
    %v1318 = vld [vmem:[%s1229 + $0x2c0] sm:$0xff]
    %v1319 = vld [vmem:[%s1229 + $0x2c8] sm:$0xff]
    %v1320 = vld [vmem:[%s1229 + $0x2d0] sm:$0xff]
    %v1321 = vld [vmem:[%s1229 + $0x2d8] sm:$0xff]
    %v1322 = vld [vmem:[%s1229 + $0x2e0] sm:$0xff]
    %v1323 = vld [vmem:[%s1229 + $0x2e8] sm:$0xff]
    %v1324 = vld [vmem:[%s1229 + $0x2f0] sm:$0xff]
    %v1325 = vld [vmem:[%s1229 + $0x2f8] sm:$0xff]
    %v1326 = vld [vmem:[%s1229 + $0x300] sm:$0xff]
    %v1327 = vld [vmem:[%s1229 + $0x308] sm:$0xff]
    %v1328 = vld [vmem:[%s1229 + $0x310] sm:$0xff]
    %v1329 = vld [vmem:[%s1229 + $0x318] sm:$0xff]
    %v1330 = vld [vmem:[%s1229 + $0x320] sm:$0xff]
    %v1331 = vld [vmem:[%s1229 + $0x328] sm:$0xff]
    %v1332 = vld [vmem:[%s1229 + $0x330] sm:$0xff]
    %v1333 = vld [vmem:[%s1229 + $0x338] sm:$0xff]
    %v1334 = vld [vmem:[%s1229 + $0x340] sm:$0xff]
    %v1335 = vld [vmem:[%s1229 + $0x348] sm:$0xff]
    %v1336 = vld [vmem:[%s1229 + $0x350] sm:$0xff]
    %v1337 = vld [vmem:[%s1229 + $0x358] sm:$0xff]
    %v1338 = vld [vmem:[%s1229 + $0x360] sm:$0xff]
    %v1339 = vld [vmem:[%s1229 + $0x368] sm:$0xff]
    %v1340 = vld [vmem:[%s1229 + $0x370] sm:$0xff]
    %v1341 = vld [vmem:[%s1229 + $0x378] sm:$0xff]
    %v1342 = vld [vmem:[%s1229 + $0x380] sm:$0xff]
    %v1343 = vld [vmem:[%s1229 + $0x388] sm:$0xff]
    %v1344 = vld [vmem:[%s1229 + $0x390] sm:$0xff]
    %v1345 = vld [vmem:[%s1229 + $0x398] sm:$0xff]
    %v1346 = vld [vmem:[%s1229 + $0x3a0] sm:$0xff]
    %v1347 = vld [vmem:[%s1229 + $0x3a8] sm:$0xff]
    %v1348 = vld [vmem:[%s1229 + $0x3b0] sm:$0xff]
    %v1349 = vld [vmem:[%s1229 + $0x3b8] sm:$0xff]
    %v1350 = vld [vmem:[%s1229 + $0x3c0] sm:$0xff]
    %v1351 = vld [vmem:[%s1229 + $0x3c8] sm:$0xff]
    %v1352 = vld [vmem:[%s1229 + $0x3d0] sm:$0xff]
    %v1353 = vld [vmem:[%s1229 + $0x3d8] sm:$0xff]
    %v1354 = vld [vmem:[%s1229 + $0x3e0] sm:$0xff]
    %v1355 = vld [vmem:[%s1229 + $0x3e8] sm:$0xff]
    %v1356 = vld [vmem:[%s1229 + $0x3f0] sm:$0xff]
    %v1357 = vld [vmem:[%s1229 + $0x3f8] sm:$0xff]
    %s1358 = scalar_lea.vmem [#allocation9], 4
    %v1359 = vld [vmem:[%s1358] sm:$0xf]
    %v1361 = vperm.slane %v1359, 0
    %v1362 = vperm.slane %v1359, 1
    %v1363 = vperm.slane %v1359, 2
    %v1364 = vperm.slane %v1359, 3
    %v1497 = vunpack.c.l.b16 %v1230
    %v1498 = vunpack.c.h.b16 %v1230
    %v1499 = vunpack.c.l.b16 %v1231
    %v1500 = vunpack.c.h.b16 %v1231
    %v1501 = vunpack.c.l.b16 %v1232
    %v1502 = vunpack.c.h.b16 %v1232
    %v1503 = vunpack.c.l.b16 %v1233
    %v1504 = vunpack.c.h.b16 %v1233
    %v1505 = vunpack.c.l.b16 %v1234
    %v1506 = vunpack.c.h.b16 %v1234
    %v1507 = vunpack.c.l.b16 %v1235
    %v1508 = vunpack.c.h.b16 %v1235
    %v1509 = vunpack.c.l.b16 %v1236
    %v1510 = vunpack.c.h.b16 %v1236
    %v1511 = vunpack.c.l.b16 %v1237
    %v1512 = vunpack.c.h.b16 %v1237
    %v1513 = vunpack.c.l.b16 %v1238
    %v1514 = vunpack.c.h.b16 %v1238
    %v1515 = vunpack.c.l.b16 %v1239
    %v1516 = vunpack.c.h.b16 %v1239
    %v1517 = vunpack.c.l.b16 %v1240
    %v1518 = vunpack.c.h.b16 %v1240
    %v1519 = vunpack.c.l.b16 %v1241
    %v1520 = vunpack.c.h.b16 %v1241
    %v1521 = vunpack.c.l.b16 %v1242
    %v1522 = vunpack.c.h.b16 %v1242
    %v1523 = vunpack.c.l.b16 %v1243
    %v1524 = vunpack.c.h.b16 %v1243
    %v1525 = vunpack.c.l.b16 %v1244
    %v1526 = vunpack.c.h.b16 %v1244
    %v1527 = vunpack.c.l.b16 %v1245
    %v1528 = vunpack.c.h.b16 %v1245
    %v1529 = vunpack.c.l.b16 %v1246
    %v1530 = vunpack.c.h.b16 %v1246
    %v1531 = vunpack.c.l.b16 %v1247
    %v1532 = vunpack.c.h.b16 %v1247
    %v1533 = vunpack.c.l.b16 %v1248
    %v1534 = vunpack.c.h.b16 %v1248
    %v1535 = vunpack.c.l.b16 %v1249
    %v1536 = vunpack.c.h.b16 %v1249
    %v1537 = vunpack.c.l.b16 %v1250
    %v1538 = vunpack.c.h.b16 %v1250
    %v1539 = vunpack.c.l.b16 %v1251
    %v1540 = vunpack.c.h.b16 %v1251
    %v1541 = vunpack.c.l.b16 %v1252
    %v1542 = vunpack.c.h.b16 %v1252
    %v1543 = vunpack.c.l.b16 %v1253
    %v1544 = vunpack.c.h.b16 %v1253
    %v1545 = vunpack.c.l.b16 %v1254
    %v1546 = vunpack.c.h.b16 %v1254
    %v1547 = vunpack.c.l.b16 %v1255
    %v1548 = vunpack.c.h.b16 %v1255
    %v1549 = vunpack.c.l.b16 %v1256
    %v1550 = vunpack.c.h.b16 %v1256
    %v1551 = vunpack.c.l.b16 %v1257
    %v1552 = vunpack.c.h.b16 %v1257
    %v1553 = vunpack.c.l.b16 %v1258
    %v1554 = vunpack.c.h.b16 %v1258
    %v1555 = vunpack.c.l.b16 %v1259
    %v1556 = vunpack.c.h.b16 %v1259
    %v1557 = vunpack.c.l.b16 %v1260
    %v1558 = vunpack.c.h.b16 %v1260
    %v1559 = vunpack.c.l.b16 %v1261
    %v1560 = vunpack.c.h.b16 %v1261
    %v1561 = vunpack.c.l.b16 %v1262
    %v1562 = vunpack.c.h.b16 %v1262
    %v1563 = vunpack.c.l.b16 %v1263
    %v1564 = vunpack.c.h.b16 %v1263
    %v1565 = vunpack.c.l.b16 %v1264
    %v1566 = vunpack.c.h.b16 %v1264
    %v1567 = vunpack.c.l.b16 %v1265
    %v1568 = vunpack.c.h.b16 %v1265
    %v1569 = vunpack.c.l.b16 %v1266
    %v1570 = vunpack.c.h.b16 %v1266
    %v1571 = vunpack.c.l.b16 %v1267
    %v1572 = vunpack.c.h.b16 %v1267
    %v1573 = vunpack.c.l.b16 %v1268
    %v1574 = vunpack.c.h.b16 %v1268
    %v1575 = vunpack.c.l.b16 %v1269
    %v1576 = vunpack.c.h.b16 %v1269
    %v1577 = vunpack.c.l.b16 %v1270
    %v1578 = vunpack.c.h.b16 %v1270
    %v1579 = vunpack.c.l.b16 %v1271
    %v1580 = vunpack.c.h.b16 %v1271
    %v1581 = vunpack.c.l.b16 %v1272
    %v1582 = vunpack.c.h.b16 %v1272
    %v1583 = vunpack.c.l.b16 %v1273
    %v1584 = vunpack.c.h.b16 %v1273
    %v1585 = vunpack.c.l.b16 %v1274
    %v1586 = vunpack.c.h.b16 %v1274
    %v1587 = vunpack.c.l.b16 %v1275
    %v1588 = vunpack.c.h.b16 %v1275
    %v1589 = vunpack.c.l.b16 %v1276
    %v1590 = vunpack.c.h.b16 %v1276
    %v1591 = vunpack.c.l.b16 %v1277
    %v1592 = vunpack.c.h.b16 %v1277
    %v1593 = vunpack.c.l.b16 %v1278
    %v1594 = vunpack.c.h.b16 %v1278
    %v1595 = vunpack.c.l.b16 %v1279
    %v1596 = vunpack.c.h.b16 %v1279
    %v1597 = vunpack.c.l.b16 %v1280
    %v1598 = vunpack.c.h.b16 %v1280
    %v1599 = vunpack.c.l.b16 %v1281
    %v1600 = vunpack.c.h.b16 %v1281
    %v1601 = vunpack.c.l.b16 %v1282
    %v1602 = vunpack.c.h.b16 %v1282
    %v1603 = vunpack.c.l.b16 %v1283
    %v1604 = vunpack.c.h.b16 %v1283
    %v1605 = vunpack.c.l.b16 %v1284
    %v1606 = vunpack.c.h.b16 %v1284
    %v1607 = vunpack.c.l.b16 %v1285
    %v1608 = vunpack.c.h.b16 %v1285
    %v1609 = vunpack.c.l.b16 %v1286
    %v1610 = vunpack.c.h.b16 %v1286
    %v1611 = vunpack.c.l.b16 %v1287
    %v1612 = vunpack.c.h.b16 %v1287
    %v1613 = vunpack.c.l.b16 %v1288
    %v1614 = vunpack.c.h.b16 %v1288
    %v1615 = vunpack.c.l.b16 %v1289
    %v1616 = vunpack.c.h.b16 %v1289
    %v1617 = vunpack.c.l.b16 %v1290
    %v1618 = vunpack.c.h.b16 %v1290
    %v1619 = vunpack.c.l.b16 %v1291
    %v1620 = vunpack.c.h.b16 %v1291
    %v1621 = vunpack.c.l.b16 %v1292
    %v1622 = vunpack.c.h.b16 %v1292
    %v1623 = vunpack.c.l.b16 %v1293
    %v1624 = vunpack.c.h.b16 %v1293
    %v1625 = vunpack.c.l.b16 %v1294
    %v1626 = vunpack.c.h.b16 %v1294
    %v1627 = vunpack.c.l.b16 %v1295
    %v1628 = vunpack.c.h.b16 %v1295
    %v1629 = vunpack.c.l.b16 %v1296
    %v1630 = vunpack.c.h.b16 %v1296
    %v1631 = vunpack.c.l.b16 %v1297
    %v1632 = vunpack.c.h.b16 %v1297
    %v1633 = vunpack.c.l.b16 %v1298
    %v1634 = vunpack.c.h.b16 %v1298
    %v1635 = vunpack.c.l.b16 %v1299
    %v1636 = vunpack.c.h.b16 %v1299
    %v1637 = vunpack.c.l.b16 %v1300
    %v1638 = vunpack.c.h.b16 %v1300
    %v1639 = vunpack.c.l.b16 %v1301
    %v1640 = vunpack.c.h.b16 %v1301
    %v1641 = vunpack.c.l.b16 %v1302
    %v1642 = vunpack.c.h.b16 %v1302
    %v1643 = vunpack.c.l.b16 %v1303
    %v1644 = vunpack.c.h.b16 %v1303
    %v1645 = vunpack.c.l.b16 %v1304
    %v1646 = vunpack.c.h.b16 %v1304
    %v1647 = vunpack.c.l.b16 %v1305
    %v1648 = vunpack.c.h.b16 %v1305
    %v1649 = vunpack.c.l.b16 %v1306
    %v1650 = vunpack.c.h.b16 %v1306
    %v1651 = vunpack.c.l.b16 %v1307
    %v1652 = vunpack.c.h.b16 %v1307
    %v1653 = vunpack.c.l.b16 %v1308
    %v1654 = vunpack.c.h.b16 %v1308
    %v1655 = vunpack.c.l.b16 %v1309
    %v1656 = vunpack.c.h.b16 %v1309
    %v1657 = vunpack.c.l.b16 %v1310
    %v1658 = vunpack.c.h.b16 %v1310
    %v1659 = vunpack.c.l.b16 %v1311
    %v1660 = vunpack.c.h.b16 %v1311
    %v1661 = vunpack.c.l.b16 %v1312
    %v1662 = vunpack.c.h.b16 %v1312
    %v1663 = vunpack.c.l.b16 %v1313
    %v1664 = vunpack.c.h.b16 %v1313
    %v1665 = vunpack.c.l.b16 %v1314
    %v1666 = vunpack.c.h.b16 %v1314
    %v1667 = vunpack.c.l.b16 %v1315
    %v1668 = vunpack.c.h.b16 %v1315
    %v1669 = vunpack.c.l.b16 %v1316
    %v1670 = vunpack.c.h.b16 %v1316
    %v1671 = vunpack.c.l.b16 %v1317
    %v1672 = vunpack.c.h.b16 %v1317
    %v1673 = vunpack.c.l.b16 %v1318
    %v1674 = vunpack.c.h.b16 %v1318
    %v1675 = vunpack.c.l.b16 %v1319
    %v1676 = vunpack.c.h.b16 %v1319
    %v1677 = vunpack.c.l.b16 %v1320
    %v1678 = vunpack.c.h.b16 %v1320
    %v1679 = vunpack.c.l.b16 %v1321
    %v1680 = vunpack.c.h.b16 %v1321
    %v1681 = vunpack.c.l.b16 %v1322
    %v1682 = vunpack.c.h.b16 %v1322
    %v1683 = vunpack.c.l.b16 %v1323
    %v1684 = vunpack.c.h.b16 %v1323
    %v1685 = vunpack.c.l.b16 %v1324
    %v1686 = vunpack.c.h.b16 %v1324
    %v1687 = vunpack.c.l.b16 %v1325
    %v1688 = vunpack.c.h.b16 %v1325
    %v1689 = vunpack.c.l.b16 %v1326
    %v1690 = vunpack.c.h.b16 %v1326
    %v1691 = vunpack.c.l.b16 %v1327
    %v1692 = vunpack.c.h.b16 %v1327
    %v1693 = vunpack.c.l.b16 %v1328
    %v1694 = vunpack.c.h.b16 %v1328
    %v1695 = vunpack.c.l.b16 %v1329
    %v1696 = vunpack.c.h.b16 %v1329
    %v1697 = vunpack.c.l.b16 %v1330
    %v1698 = vunpack.c.h.b16 %v1330
    %v1699 = vunpack.c.l.b16 %v1331
    %v1700 = vunpack.c.h.b16 %v1331
    %v1701 = vunpack.c.l.b16 %v1332
    %v1702 = vunpack.c.h.b16 %v1332
    %v1703 = vunpack.c.l.b16 %v1333
    %v1704 = vunpack.c.h.b16 %v1333
    %v1705 = vunpack.c.l.b16 %v1334
    %v1706 = vunpack.c.h.b16 %v1334
    %v1707 = vunpack.c.l.b16 %v1335
    %v1708 = vunpack.c.h.b16 %v1335
    %v1709 = vunpack.c.l.b16 %v1336
    %v1710 = vunpack.c.h.b16 %v1336
    %v1711 = vunpack.c.l.b16 %v1337
    %v1712 = vunpack.c.h.b16 %v1337
    %v1713 = vunpack.c.l.b16 %v1338
    %v1714 = vunpack.c.h.b16 %v1338
    %v1715 = vunpack.c.l.b16 %v1339
    %v1716 = vunpack.c.h.b16 %v1339
    %v1717 = vunpack.c.l.b16 %v1340
    %v1718 = vunpack.c.h.b16 %v1340
    %v1719 = vunpack.c.l.b16 %v1341
    %v1720 = vunpack.c.h.b16 %v1341
    %v1721 = vunpack.c.l.b16 %v1342
    %v1722 = vunpack.c.h.b16 %v1342
    %v1723 = vunpack.c.l.b16 %v1343
    %v1724 = vunpack.c.h.b16 %v1343
    %v1725 = vunpack.c.l.b16 %v1344
    %v1726 = vunpack.c.h.b16 %v1344
    %v1727 = vunpack.c.l.b16 %v1345
    %v1728 = vunpack.c.h.b16 %v1345
    %v1729 = vunpack.c.l.b16 %v1346
    %v1730 = vunpack.c.h.b16 %v1346
    %v1731 = vunpack.c.l.b16 %v1347
    %v1732 = vunpack.c.h.b16 %v1347
    %v1733 = vunpack.c.l.b16 %v1348
    %v1734 = vunpack.c.h.b16 %v1348
    %v1735 = vunpack.c.l.b16 %v1349
    %v1736 = vunpack.c.h.b16 %v1349
    %v1737 = vunpack.c.l.b16 %v1350
    %v1738 = vunpack.c.h.b16 %v1350
    %v1739 = vunpack.c.l.b16 %v1351
    %v1740 = vunpack.c.h.b16 %v1351
    %v1741 = vunpack.c.l.b16 %v1352
    %v1742 = vunpack.c.h.b16 %v1352
    %v1743 = vunpack.c.l.b16 %v1353
    %v1744 = vunpack.c.h.b16 %v1353
    %v1745 = vunpack.c.l.b16 %v1354
    %v1746 = vunpack.c.h.b16 %v1354
    %v1747 = vunpack.c.l.b16 %v1355
    %v1748 = vunpack.c.h.b16 %v1355
    %v1749 = vunpack.c.l.b16 %v1356
    %v1750 = vunpack.c.h.b16 %v1356
    %v1751 = vunpack.c.l.b16 %v1357
    %v1752 = vunpack.c.h.b16 %v1357
    %v1753 = vpack.c.b16 %v1501, %v1497
    %v1754 = vpack.c.b16 %v1502, %v1498
    %v1755 = vpack.c.b16 %v1503, %v1499
    %v1756 = vpack.c.b16 %v1504, %v1500
    %v1757 = vpack.c.b16 %v1509, %v1505
    %v1758 = vpack.c.b16 %v1510, %v1506
    %v1759 = vpack.c.b16 %v1511, %v1507
    %v1760 = vpack.c.b16 %v1512, %v1508
    %v1761 = vpack.c.b16 %v1517, %v1513
    %v1762 = vpack.c.b16 %v1518, %v1514
    %v1763 = vpack.c.b16 %v1519, %v1515
    %v1764 = vpack.c.b16 %v1520, %v1516
    %v1765 = vpack.c.b16 %v1525, %v1521
    %v1766 = vpack.c.b16 %v1526, %v1522
    %v1767 = vpack.c.b16 %v1527, %v1523
    %v1768 = vpack.c.b16 %v1528, %v1524
    %v1769 = vpack.c.b16 %v1533, %v1529
    %v1770 = vpack.c.b16 %v1534, %v1530
    %v1771 = vpack.c.b16 %v1535, %v1531
    %v1772 = vpack.c.b16 %v1536, %v1532
    %v1773 = vpack.c.b16 %v1541, %v1537
    %v1774 = vpack.c.b16 %v1542, %v1538
    %v1775 = vpack.c.b16 %v1543, %v1539
    %v1776 = vpack.c.b16 %v1544, %v1540
    %v1777 = vpack.c.b16 %v1549, %v1545
    %v1778 = vpack.c.b16 %v1550, %v1546
    %v1779 = vpack.c.b16 %v1551, %v1547
    %v1780 = vpack.c.b16 %v1552, %v1548
    %v1781 = vpack.c.b16 %v1557, %v1553
    %v1782 = vpack.c.b16 %v1558, %v1554
    %v1783 = vpack.c.b16 %v1559, %v1555
    %v1784 = vpack.c.b16 %v1560, %v1556
    %v1785 = vpack.c.b16 %v1565, %v1561
    %v1786 = vpack.c.b16 %v1566, %v1562
    %v1787 = vpack.c.b16 %v1567, %v1563
    %v1788 = vpack.c.b16 %v1568, %v1564
    %v1789 = vpack.c.b16 %v1573, %v1569
    %v1790 = vpack.c.b16 %v1574, %v1570
    %v1791 = vpack.c.b16 %v1575, %v1571
    %v1792 = vpack.c.b16 %v1576, %v1572
    %v1793 = vpack.c.b16 %v1581, %v1577
    %v1794 = vpack.c.b16 %v1582, %v1578
    %v1795 = vpack.c.b16 %v1583, %v1579
    %v1796 = vpack.c.b16 %v1584, %v1580
    %v1797 = vpack.c.b16 %v1589, %v1585
    %v1798 = vpack.c.b16 %v1590, %v1586
    %v1799 = vpack.c.b16 %v1591, %v1587
    %v1800 = vpack.c.b16 %v1592, %v1588
    %v1801 = vpack.c.b16 %v1597, %v1593
    %v1802 = vpack.c.b16 %v1598, %v1594
    %v1803 = vpack.c.b16 %v1599, %v1595
    %v1804 = vpack.c.b16 %v1600, %v1596
    %v1805 = vpack.c.b16 %v1605, %v1601
    %v1806 = vpack.c.b16 %v1606, %v1602
    %v1807 = vpack.c.b16 %v1607, %v1603
    %v1808 = vpack.c.b16 %v1608, %v1604
    %v1809 = vpack.c.b16 %v1613, %v1609
    %v1810 = vpack.c.b16 %v1614, %v1610
    %v1811 = vpack.c.b16 %v1615, %v1611
    %v1812 = vpack.c.b16 %v1616, %v1612
    %v1813 = vpack.c.b16 %v1621, %v1617
    %v1814 = vpack.c.b16 %v1622, %v1618
    %v1815 = vpack.c.b16 %v1623, %v1619
    %v1816 = vpack.c.b16 %v1624, %v1620
    %v1817 = vpack.c.b16 %v1629, %v1625
    %v1818 = vpack.c.b16 %v1630, %v1626
    %v1819 = vpack.c.b16 %v1631, %v1627
    %v1820 = vpack.c.b16 %v1632, %v1628
    %v1821 = vpack.c.b16 %v1637, %v1633
    %v1822 = vpack.c.b16 %v1638, %v1634
    %v1823 = vpack.c.b16 %v1639, %v1635
    %v1824 = vpack.c.b16 %v1640, %v1636
    %v1825 = vpack.c.b16 %v1645, %v1641
    %v1826 = vpack.c.b16 %v1646, %v1642
    %v1827 = vpack.c.b16 %v1647, %v1643
    %v1828 = vpack.c.b16 %v1648, %v1644
    %v1829 = vpack.c.b16 %v1653, %v1649
    %v1830 = vpack.c.b16 %v1654, %v1650
    %v1831 = vpack.c.b16 %v1655, %v1651
    %v1832 = vpack.c.b16 %v1656, %v1652
    %v1833 = vpack.c.b16 %v1661, %v1657
    %v1834 = vpack.c.b16 %v1662, %v1658
    %v1835 = vpack.c.b16 %v1663, %v1659
    %v1836 = vpack.c.b16 %v1664, %v1660
    %v1837 = vpack.c.b16 %v1669, %v1665
    %v1838 = vpack.c.b16 %v1670, %v1666
    %v1839 = vpack.c.b16 %v1671, %v1667
    %v1840 = vpack.c.b16 %v1672, %v1668
    %v1841 = vpack.c.b16 %v1677, %v1673
    %v1842 = vpack.c.b16 %v1678, %v1674
    %v1843 = vpack.c.b16 %v1679, %v1675
    %v1844 = vpack.c.b16 %v1680, %v1676
    %v1845 = vpack.c.b16 %v1685, %v1681
    %v1846 = vpack.c.b16 %v1686, %v1682
    %v1847 = vpack.c.b16 %v1687, %v1683
    %v1848 = vpack.c.b16 %v1688, %v1684
    %v1849 = vpack.c.b16 %v1693, %v1689
    %v1850 = vpack.c.b16 %v1694, %v1690
    %v1851 = vpack.c.b16 %v1695, %v1691
    %v1852 = vpack.c.b16 %v1696, %v1692
    %v1853 = vpack.c.b16 %v1701, %v1697
    %v1854 = vpack.c.b16 %v1702, %v1698
    %v1855 = vpack.c.b16 %v1703, %v1699
    %v1856 = vpack.c.b16 %v1704, %v1700
    %v1857 = vpack.c.b16 %v1709, %v1705
    %v1858 = vpack.c.b16 %v1710, %v1706
    %v1859 = vpack.c.b16 %v1711, %v1707
    %v1860 = vpack.c.b16 %v1712, %v1708
    %v1861 = vpack.c.b16 %v1717, %v1713
    %v1862 = vpack.c.b16 %v1718, %v1714
    %v1863 = vpack.c.b16 %v1719, %v1715
    %v1864 = vpack.c.b16 %v1720, %v1716
    %v1865 = vpack.c.b16 %v1725, %v1721
    %v1866 = vpack.c.b16 %v1726, %v1722
    %v1867 = vpack.c.b16 %v1727, %v1723
    %v1868 = vpack.c.b16 %v1728, %v1724
    %v1869 = vpack.c.b16 %v1733, %v1729
    %v1870 = vpack.c.b16 %v1734, %v1730
    %v1871 = vpack.c.b16 %v1735, %v1731
    %v1872 = vpack.c.b16 %v1736, %v1732
    %v1873 = vpack.c.b16 %v1741, %v1737
    %v1874 = vpack.c.b16 %v1742, %v1738
    %v1875 = vpack.c.b16 %v1743, %v1739
    %v1876 = vpack.c.b16 %v1744, %v1740
    %v1877 = vpack.c.b16 %v1749, %v1745
    %v1878 = vpack.c.b16 %v1750, %v1746
    %v1879 = vpack.c.b16 %v1751, %v1747
    %v1880 = vpack.c.b16 %v1752, %v1748
    %2009 = vmatpush.bf16.msra.mxu0 %v1781
    %2010 = vmatpush.bf16.msra.mxu0 %v1777
    %2011 = vmatpush.bf16.msra.mxu0 %v1773
    %2012 = vmatpush.bf16.msra.mxu0 %v1769
    %2013 = vmatpush.bf16.msra.mxu0 %v1765
    %2014 = vmatpush.bf16.msra.mxu0 %v1761
    %2015 = vmatpush.bf16.msra.mxu0 %v1757
    %2016 = vmatpush.bf16.msra.mxu0 %v1753
    %2017 = vmatmul.bf16.gmra.mxu0 %v1225
    %v2018 = vpop.f32.mrf.mxu0
    %v2019 = vadd.f32 %v1361, %v2018
    %v2020 = vpop.f32.mrf.mxu0
    %2021 = vdwg.mxu0
    %2022 = vmatpush.bf16.msra.mxu0 %v1813
    %2023 = vmatpush.bf16.msra.mxu0 %v1809
    %2024 = vmatpush.bf16.msra.mxu0 %v1805
    %2025 = vmatpush.bf16.msra.mxu0 %v1801
    %2026 = vmatpush.bf16.msra.mxu0 %v1797
    %2027 = vmatpush.bf16.msra.mxu0 %v1793
    %2028 = vmatpush.bf16.msra.mxu0 %v1789
    %2029 = vmatpush.bf16.msra.mxu0 %v1785
    %2030 = vmatmul.bf16.gmra.mxu0 %v1226
    %v2031 = vpop.f32.mrf.mxu0
    %v2032 = vadd.f32 %v2019, %v2031
    %v2033 = vpop.f32.mrf.mxu0
    %2034 = vdwg.mxu0
    %2035 = vmatpush.bf16.msra.mxu0 %v1845
    %2036 = vmatpush.bf16.msra.mxu0 %v1841
    %2037 = vmatpush.bf16.msra.mxu0 %v1837
    %2038 = vmatpush.bf16.msra.mxu0 %v1833
    %2039 = vmatpush.bf16.msra.mxu0 %v1829
    %2040 = vmatpush.bf16.msra.mxu0 %v1825
    %2041 = vmatpush.bf16.msra.mxu0 %v1821
    %2042 = vmatpush.bf16.msra.mxu0 %v1817
    %2043 = vmatmul.bf16.gmra.mxu0 %v1227
    %v2044 = vpop.f32.mrf.mxu0
    %v2045 = vadd.f32 %v2032, %v2044
    %v2046 = vpop.f32.mrf.mxu0
    %2047 = vdwg.mxu0
    %2048 = vmatpush.bf16.msra.mxu0 %v1877
    %2049 = vmatpush.bf16.msra.mxu0 %v1873
    %2050 = vmatpush.bf16.msra.mxu0 %v1869
    %2051 = vmatpush.bf16.msra.mxu0 %v1865
    %2052 = vmatpush.bf16.msra.mxu0 %v1861
    %2053 = vmatpush.bf16.msra.mxu0 %v1857
    %2054 = vmatpush.bf16.msra.mxu0 %v1853
    %2055 = vmatpush.bf16.msra.mxu0 %v1849
    %2056 = vmatmul.bf16.gmra.mxu0 %v1228
    %v2057 = vpop.f32.mrf.mxu0
    %v2058 = vadd.f32 %v2045, %v2057
    %v2059 = vpop.f32.mrf.mxu0
    %2060 = vdwg.mxu0
    %2061 = vmatpush.bf16.msra.mxu0 %v1782
    %2062 = vmatpush.bf16.msra.mxu0 %v1778
    %2063 = vmatpush.bf16.msra.mxu0 %v1774
    %2064 = vmatpush.bf16.msra.mxu0 %v1770
    %2065 = vmatpush.bf16.msra.mxu0 %v1766
    %2066 = vmatpush.bf16.msra.mxu0 %v1762
    %2067 = vmatpush.bf16.msra.mxu0 %v1758
    %2068 = vmatpush.bf16.msra.mxu0 %v1754
    %2069 = vmatmul.bf16.gmra.mxu0 %v1225
    %v2070 = vpop.f32.mrf.mxu0
    %v2071 = vadd.f32 %v1362, %v2070
    %v2072 = vpop.f32.mrf.mxu0
    %2073 = vdwg.mxu0
    %2074 = vmatpush.bf16.msra.mxu0 %v1814
    %2075 = vmatpush.bf16.msra.mxu0 %v1810
    %2076 = vmatpush.bf16.msra.mxu0 %v1806
    %2077 = vmatpush.bf16.msra.mxu0 %v1802
    %2078 = vmatpush.bf16.msra.mxu0 %v1798
    %2079 = vmatpush.bf16.msra.mxu0 %v1794
    %2080 = vmatpush.bf16.msra.mxu0 %v1790
    %2081 = vmatpush.bf16.msra.mxu0 %v1786
    %2082 = vmatmul.bf16.gmra.mxu0 %v1226
    %v2083 = vpop.f32.mrf.mxu0
    %v2084 = vadd.f32 %v2071, %v2083
    %v2085 = vpop.f32.mrf.mxu0
    %2086 = vdwg.mxu0
    %2087 = vmatpush.bf16.msra.mxu0 %v1846
    %2088 = vmatpush.bf16.msra.mxu0 %v1842
    %2089 = vmatpush.bf16.msra.mxu0 %v1838
    %2090 = vmatpush.bf16.msra.mxu0 %v1834
    %2091 = vmatpush.bf16.msra.mxu0 %v1830
    %2092 = vmatpush.bf16.msra.mxu0 %v1826
    %2093 = vmatpush.bf16.msra.mxu0 %v1822
    %2094 = vmatpush.bf16.msra.mxu0 %v1818
    %2095 = vmatmul.bf16.gmra.mxu0 %v1227
    %v2096 = vpop.f32.mrf.mxu0
    %v2097 = vadd.f32 %v2084, %v2096
    %v2098 = vpop.f32.mrf.mxu0
    %2099 = vdwg.mxu0
    %2100 = vmatpush.bf16.msra.mxu0 %v1878
    %2101 = vmatpush.bf16.msra.mxu0 %v1874
    %2102 = vmatpush.bf16.msra.mxu0 %v1870
    %2103 = vmatpush.bf16.msra.mxu0 %v1866
    %2104 = vmatpush.bf16.msra.mxu0 %v1862
    %2105 = vmatpush.bf16.msra.mxu0 %v1858
    %2106 = vmatpush.bf16.msra.mxu0 %v1854
    %2107 = vmatpush.bf16.msra.mxu0 %v1850
    %2108 = vmatmul.bf16.gmra.mxu0 %v1228
    %v2109 = vpop.f32.mrf.mxu0
    %v2110 = vadd.f32 %v2097, %v2109
    %v2111 = vpop.f32.mrf.mxu0
    %2112 = vdwg.mxu0
    %2113 = vmatpush.bf16.msra.mxu0 %v1783
    %2114 = vmatpush.bf16.msra.mxu0 %v1779
    %2115 = vmatpush.bf16.msra.mxu0 %v1775
    %2116 = vmatpush.bf16.msra.mxu0 %v1771
    %2117 = vmatpush.bf16.msra.mxu0 %v1767
    %2118 = vmatpush.bf16.msra.mxu0 %v1763
    %2119 = vmatpush.bf16.msra.mxu0 %v1759
    %2120 = vmatpush.bf16.msra.mxu0 %v1755
    %2121 = vmatmul.bf16.gmra.mxu0 %v1225
    %v2122 = vpop.f32.mrf.mxu0
    %v2123 = vadd.f32 %v1363, %v2122
    %v2124 = vpop.f32.mrf.mxu0
    %2125 = vdwg.mxu0
    %2126 = vmatpush.bf16.msra.mxu0 %v1815
    %2127 = vmatpush.bf16.msra.mxu0 %v1811
    %2128 = vmatpush.bf16.msra.mxu0 %v1807
    %2129 = vmatpush.bf16.msra.mxu0 %v1803
    %2130 = vmatpush.bf16.msra.mxu0 %v1799
    %2131 = vmatpush.bf16.msra.mxu0 %v1795
    %2132 = vmatpush.bf16.msra.mxu0 %v1791
    %2133 = vmatpush.bf16.msra.mxu0 %v1787
    %2134 = vmatmul.bf16.gmra.mxu0 %v1226
    %v2135 = vpop.f32.mrf.mxu0
    %v2136 = vadd.f32 %v2123, %v2135
    %v2137 = vpop.f32.mrf.mxu0
    %2138 = vdwg.mxu0
    %2139 = vmatpush.bf16.msra.mxu0 %v1847
    %2140 = vmatpush.bf16.msra.mxu0 %v1843
    %2141 = vmatpush.bf16.msra.mxu0 %v1839
    %2142 = vmatpush.bf16.msra.mxu0 %v1835
    %2143 = vmatpush.bf16.msra.mxu0 %v1831
    %2144 = vmatpush.bf16.msra.mxu0 %v1827
    %2145 = vmatpush.bf16.msra.mxu0 %v1823
    %2146 = vmatpush.bf16.msra.mxu0 %v1819
    %2147 = vmatmul.bf16.gmra.mxu0 %v1227
    %v2148 = vpop.f32.mrf.mxu0
    %v2149 = vadd.f32 %v2136, %v2148
    %v2150 = vpop.f32.mrf.mxu0
    %2151 = vdwg.mxu0
    %2152 = vmatpush.bf16.msra.mxu0 %v1879
    %2153 = vmatpush.bf16.msra.mxu0 %v1875
    %2154 = vmatpush.bf16.msra.mxu0 %v1871
    %2155 = vmatpush.bf16.msra.mxu0 %v1867
    %2156 = vmatpush.bf16.msra.mxu0 %v1863
    %2157 = vmatpush.bf16.msra.mxu0 %v1859
    %2158 = vmatpush.bf16.msra.mxu0 %v1855
    %2159 = vmatpush.bf16.msra.mxu0 %v1851
    %2160 = vmatmul.bf16.gmra.mxu0 %v1228
    %v2161 = vpop.f32.mrf.mxu0
    %v2162 = vadd.f32 %v2149, %v2161
    %v2163 = vpop.f32.mrf.mxu0
    %2164 = vdwg.mxu0
    %2165 = vmatpush.bf16.msra.mxu0 %v1784
    %2166 = vmatpush.bf16.msra.mxu0 %v1780
    %2167 = vmatpush.bf16.msra.mxu0 %v1776
    %2168 = vmatpush.bf16.msra.mxu0 %v1772
    %2169 = vmatpush.bf16.msra.mxu0 %v1768
    %2170 = vmatpush.bf16.msra.mxu0 %v1764
    %2171 = vmatpush.bf16.msra.mxu0 %v1760
    %2172 = vmatpush.bf16.msra.mxu0 %v1756
    %2173 = vmatmul.bf16.gmra.mxu0 %v1225
    %v2174 = vpop.f32.mrf.mxu0
    %v2175 = vadd.f32 %v1364, %v2174
    %v2176 = vpop.f32.mrf.mxu0
    %2177 = vdwg.mxu0
    %2178 = vmatpush.bf16.msra.mxu0 %v1816
    %2179 = vmatpush.bf16.msra.mxu0 %v1812
    %2180 = vmatpush.bf16.msra.mxu0 %v1808
    %2181 = vmatpush.bf16.msra.mxu0 %v1804
    %2182 = vmatpush.bf16.msra.mxu0 %v1800
    %2183 = vmatpush.bf16.msra.mxu0 %v1796
    %2184 = vmatpush.bf16.msra.mxu0 %v1792
    %2185 = vmatpush.bf16.msra.mxu0 %v1788
    %2186 = vmatmul.bf16.gmra.mxu0 %v1226
    %v2187 = vpop.f32.mrf.mxu0
    %v2188 = vadd.f32 %v2175, %v2187
    %v2189 = vpop.f32.mrf.mxu0
    %2190 = vdwg.mxu0
    %2191 = vmatpush.bf16.msra.mxu0 %v1848
    %2192 = vmatpush.bf16.msra.mxu0 %v1844
    %2193 = vmatpush.bf16.msra.mxu0 %v1840
    %2194 = vmatpush.bf16.msra.mxu0 %v1836
    %2195 = vmatpush.bf16.msra.mxu0 %v1832
    %2196 = vmatpush.bf16.msra.mxu0 %v1828
    %2197 = vmatpush.bf16.msra.mxu0 %v1824
    %2198 = vmatpush.bf16.msra.mxu0 %v1820
    %2199 = vmatmul.bf16.gmra.mxu0 %v1227
    %v2200 = vpop.f32.mrf.mxu0
    %v2201 = vadd.f32 %v2188, %v2200
    %v2202 = vpop.f32.mrf.mxu0
    %2203 = vdwg.mxu0
    %2204 = vmatpush.bf16.msra.mxu0 %v1880
    %2205 = vmatpush.bf16.msra.mxu0 %v1876
    %2206 = vmatpush.bf16.msra.mxu0 %v1872
    %2207 = vmatpush.bf16.msra.mxu0 %v1868
    %2208 = vmatpush.bf16.msra.mxu0 %v1864
    %2209 = vmatpush.bf16.msra.mxu0 %v1860
    %2210 = vmatpush.bf16.msra.mxu0 %v1856
    %2211 = vmatpush.bf16.msra.mxu0 %v1852
    %2212 = vmatmul.bf16.gmra.mxu0 %v1228
    %v2213 = vpop.f32.mrf.mxu0
    %v2214 = vadd.f32 %v2201, %v2213
    %v2215 = vpop.f32.mrf.mxu0
    %2216 = vdwg.mxu0
    %v2217 = vpack.c.bf16 %v2058, %v2058
    %v2218 = vpack.c.bf16 %v2110, %v2110
    %v2219 = vpack.c.bf16 %v2162, %v2162
    %v2220 = vpack.c.bf16 %v2214, %v2214
    %v2221 = vunpack.c.l.bf16 %v2217
    %v2222 = vunpack.c.l.bf16 %v2218
    %v2223 = vunpack.c.l.bf16 %v2219
    %v2224 = vunpack.c.l.bf16 %v2220
    %v2225 = vtanh.pop %v2221
    %v2226 = vtanh.pop %v2222
    %v2227 = vtanh.pop %v2223
    %v2228 = vtanh.pop %v2224
    %v2229 = vpack.c.bf16 %v2225, %v2225
    %v2230 = vpack.c.bf16 %v2226, %v2226
    %v2231 = vpack.c.bf16 %v2227, %v2227
    %v2232 = vpack.c.bf16 %v2228, %v2228
    %s2233 = scalar_lea.vmem [#allocation7], 2048
    %v2234 = vld [vmem:[%s2233] sm:$0xff]
    %v2235 = vld [vmem:[%s2233 + $0x8] sm:$0xff]
    %v2236 = vld [vmem:[%s2233 + $0x10] sm:$0xff]
    %v2237 = vld [vmem:[%s2233 + $0x18] sm:$0xff]
    %v2238 = vld [vmem:[%s2233 + $0x20] sm:$0xff]
    %v2239 = vld [vmem:[%s2233 + $0x28] sm:$0xff]
    %v2240 = vld [vmem:[%s2233 + $0x30] sm:$0xff]
    %v2241 = vld [vmem:[%s2233 + $0x38] sm:$0xff]
    %v2242 = vld [vmem:[%s2233 + $0x40] sm:$0xff]
    %v2243 = vld [vmem:[%s2233 + $0x48] sm:$0xff]
    %v2244 = vld [vmem:[%s2233 + $0x50] sm:$0xff]
    %v2245 = vld [vmem:[%s2233 + $0x58] sm:$0xff]
    %v2246 = vld [vmem:[%s2233 + $0x60] sm:$0xff]
    %v2247 = vld [vmem:[%s2233 + $0x68] sm:$0xff]
    %v2248 = vld [vmem:[%s2233 + $0x70] sm:$0xff]
    %v2249 = vld [vmem:[%s2233 + $0x78] sm:$0xff]
    %v2250 = vld [vmem:[%s2233 + $0x80] sm:$0xff]
    %v2251 = vld [vmem:[%s2233 + $0x88] sm:$0xff]
    %v2252 = vld [vmem:[%s2233 + $0x90] sm:$0xff]
    %v2253 = vld [vmem:[%s2233 + $0x98] sm:$0xff]
    %v2254 = vld [vmem:[%s2233 + $0xa0] sm:$0xff]
    %v2255 = vld [vmem:[%s2233 + $0xa8] sm:$0xff]
    %v2256 = vld [vmem:[%s2233 + $0xb0] sm:$0xff]
    %v2257 = vld [vmem:[%s2233 + $0xb8] sm:$0xff]
    %v2258 = vld [vmem:[%s2233 + $0xc0] sm:$0xff]
    %v2259 = vld [vmem:[%s2233 + $0xc8] sm:$0xff]
    %v2260 = vld [vmem:[%s2233 + $0xd0] sm:$0xff]
    %v2261 = vld [vmem:[%s2233 + $0xd8] sm:$0xff]
    %v2262 = vld [vmem:[%s2233 + $0xe0] sm:$0xff]
    %v2263 = vld [vmem:[%s2233 + $0xe8] sm:$0xff]
    %v2264 = vld [vmem:[%s2233 + $0xf0] sm:$0xff]
    %v2265 = vld [vmem:[%s2233 + $0xf8] sm:$0xff]
    %v2266 = vld [vmem:[%s2233 + $0x100] sm:$0xff]
    %v2267 = vld [vmem:[%s2233 + $0x108] sm:$0xff]
    %v2268 = vld [vmem:[%s2233 + $0x110] sm:$0xff]
    %v2269 = vld [vmem:[%s2233 + $0x118] sm:$0xff]
    %v2270 = vld [vmem:[%s2233 + $0x120] sm:$0xff]
    %v2271 = vld [vmem:[%s2233 + $0x128] sm:$0xff]
    %v2272 = vld [vmem:[%s2233 + $0x130] sm:$0xff]
    %v2273 = vld [vmem:[%s2233 + $0x138] sm:$0xff]
    %v2274 = vld [vmem:[%s2233 + $0x140] sm:$0xff]
    %v2275 = vld [vmem:[%s2233 + $0x148] sm:$0xff]
    %v2276 = vld [vmem:[%s2233 + $0x150] sm:$0xff]
    %v2277 = vld [vmem:[%s2233 + $0x158] sm:$0xff]
    %v2278 = vld [vmem:[%s2233 + $0x160] sm:$0xff]
    %v2279 = vld [vmem:[%s2233 + $0x168] sm:$0xff]
    %v2280 = vld [vmem:[%s2233 + $0x170] sm:$0xff]
    %v2281 = vld [vmem:[%s2233 + $0x178] sm:$0xff]
    %v2282 = vld [vmem:[%s2233 + $0x180] sm:$0xff]
    %v2283 = vld [vmem:[%s2233 + $0x188] sm:$0xff]
    %v2284 = vld [vmem:[%s2233 + $0x190] sm:$0xff]
    %v2285 = vld [vmem:[%s2233 + $0x198] sm:$0xff]
    %v2286 = vld [vmem:[%s2233 + $0x1a0] sm:$0xff]
    %v2287 = vld [vmem:[%s2233 + $0x1a8] sm:$0xff]
    %v2288 = vld [vmem:[%s2233 + $0x1b0] sm:$0xff]
    %v2289 = vld [vmem:[%s2233 + $0x1b8] sm:$0xff]
    %v2290 = vld [vmem:[%s2233 + $0x1c0] sm:$0xff]
    %v2291 = vld [vmem:[%s2233 + $0x1c8] sm:$0xff]
    %v2292 = vld [vmem:[%s2233 + $0x1d0] sm:$0xff]
    %v2293 = vld [vmem:[%s2233 + $0x1d8] sm:$0xff]
    %v2294 = vld [vmem:[%s2233 + $0x1e0] sm:$0xff]
    %v2295 = vld [vmem:[%s2233 + $0x1e8] sm:$0xff]
    %v2296 = vld [vmem:[%s2233 + $0x1f0] sm:$0xff]
    %v2297 = vld [vmem:[%s2233 + $0x1f8] sm:$0xff]
    %v2298 = vld [vmem:[%s2233 + $0x200] sm:$0xff]
    %v2299 = vld [vmem:[%s2233 + $0x208] sm:$0xff]
    %v2300 = vld [vmem:[%s2233 + $0x210] sm:$0xff]
    %v2301 = vld [vmem:[%s2233 + $0x218] sm:$0xff]
    %v2302 = vld [vmem:[%s2233 + $0x220] sm:$0xff]
    %v2303 = vld [vmem:[%s2233 + $0x228] sm:$0xff]
    %v2304 = vld [vmem:[%s2233 + $0x230] sm:$0xff]
    %v2305 = vld [vmem:[%s2233 + $0x238] sm:$0xff]
    %v2306 = vld [vmem:[%s2233 + $0x240] sm:$0xff]
    %v2307 = vld [vmem:[%s2233 + $0x248] sm:$0xff]
    %v2308 = vld [vmem:[%s2233 + $0x250] sm:$0xff]
    %v2309 = vld [vmem:[%s2233 + $0x258] sm:$0xff]
    %v2310 = vld [vmem:[%s2233 + $0x260] sm:$0xff]
    %v2311 = vld [vmem:[%s2233 + $0x268] sm:$0xff]
    %v2312 = vld [vmem:[%s2233 + $0x270] sm:$0xff]
    %v2313 = vld [vmem:[%s2233 + $0x278] sm:$0xff]
    %v2314 = vld [vmem:[%s2233 + $0x280] sm:$0xff]
    %v2315 = vld [vmem:[%s2233 + $0x288] sm:$0xff]
    %v2316 = vld [vmem:[%s2233 + $0x290] sm:$0xff]
    %v2317 = vld [vmem:[%s2233 + $0x298] sm:$0xff]
    %v2318 = vld [vmem:[%s2233 + $0x2a0] sm:$0xff]
    %v2319 = vld [vmem:[%s2233 + $0x2a8] sm:$0xff]
    %v2320 = vld [vmem:[%s2233 + $0x2b0] sm:$0xff]
    %v2321 = vld [vmem:[%s2233 + $0x2b8] sm:$0xff]
    %v2322 = vld [vmem:[%s2233 + $0x2c0] sm:$0xff]
    %v2323 = vld [vmem:[%s2233 + $0x2c8] sm:$0xff]
    %v2324 = vld [vmem:[%s2233 + $0x2d0] sm:$0xff]
    %v2325 = vld [vmem:[%s2233 + $0x2d8] sm:$0xff]
    %v2326 = vld [vmem:[%s2233 + $0x2e0] sm:$0xff]
    %v2327 = vld [vmem:[%s2233 + $0x2e8] sm:$0xff]
    %v2328 = vld [vmem:[%s2233 + $0x2f0] sm:$0xff]
    %v2329 = vld [vmem:[%s2233 + $0x2f8] sm:$0xff]
    %v2330 = vld [vmem:[%s2233 + $0x300] sm:$0xff]
    %v2331 = vld [vmem:[%s2233 + $0x308] sm:$0xff]
    %v2332 = vld [vmem:[%s2233 + $0x310] sm:$0xff]
    %v2333 = vld [vmem:[%s2233 + $0x318] sm:$0xff]
    %v2334 = vld [vmem:[%s2233 + $0x320] sm:$0xff]
    %v2335 = vld [vmem:[%s2233 + $0x328] sm:$0xff]
    %v2336 = vld [vmem:[%s2233 + $0x330] sm:$0xff]
    %v2337 = vld [vmem:[%s2233 + $0x338] sm:$0xff]
    %v2338 = vld [vmem:[%s2233 + $0x340] sm:$0xff]
    %v2339 = vld [vmem:[%s2233 + $0x348] sm:$0xff]
    %v2340 = vld [vmem:[%s2233 + $0x350] sm:$0xff]
    %v2341 = vld [vmem:[%s2233 + $0x358] sm:$0xff]
    %v2342 = vld [vmem:[%s2233 + $0x360] sm:$0xff]
    %v2343 = vld [vmem:[%s2233 + $0x368] sm:$0xff]
    %v2344 = vld [vmem:[%s2233 + $0x370] sm:$0xff]
    %v2345 = vld [vmem:[%s2233 + $0x378] sm:$0xff]
    %v2346 = vld [vmem:[%s2233 + $0x380] sm:$0xff]
    %v2347 = vld [vmem:[%s2233 + $0x388] sm:$0xff]
    %v2348 = vld [vmem:[%s2233 + $0x390] sm:$0xff]
    %v2349 = vld [vmem:[%s2233 + $0x398] sm:$0xff]
    %v2350 = vld [vmem:[%s2233 + $0x3a0] sm:$0xff]
    %v2351 = vld [vmem:[%s2233 + $0x3a8] sm:$0xff]
    %v2352 = vld [vmem:[%s2233 + $0x3b0] sm:$0xff]
    %v2353 = vld [vmem:[%s2233 + $0x3b8] sm:$0xff]
    %v2354 = vld [vmem:[%s2233 + $0x3c0] sm:$0xff]
    %v2355 = vld [vmem:[%s2233 + $0x3c8] sm:$0xff]
    %v2356 = vld [vmem:[%s2233 + $0x3d0] sm:$0xff]
    %v2357 = vld [vmem:[%s2233 + $0x3d8] sm:$0xff]
    %v2358 = vld [vmem:[%s2233 + $0x3e0] sm:$0xff]
    %v2359 = vld [vmem:[%s2233 + $0x3e8] sm:$0xff]
    %v2360 = vld [vmem:[%s2233 + $0x3f0] sm:$0xff]
    %v2361 = vld [vmem:[%s2233 + $0x3f8] sm:$0xff]
    %s2362 = scalar_lea.vmem [#allocation9], 8
    %v2363 = vld [vmem:[%s2362] sm:$0xf]
    %v2365 = vperm.slane %v2363, 0
    %v2366 = vperm.slane %v2363, 1
    %v2367 = vperm.slane %v2363, 2
    %v2368 = vperm.slane %v2363, 3
    %v2501 = vunpack.c.l.b16 %v2234
    %v2502 = vunpack.c.h.b16 %v2234
    %v2503 = vunpack.c.l.b16 %v2235
    %v2504 = vunpack.c.h.b16 %v2235
    %v2505 = vunpack.c.l.b16 %v2236
    %v2506 = vunpack.c.h.b16 %v2236
    %v2507 = vunpack.c.l.b16 %v2237
    %v2508 = vunpack.c.h.b16 %v2237
    %v2509 = vunpack.c.l.b16 %v2238
    %v2510 = vunpack.c.h.b16 %v2238
    %v2511 = vunpack.c.l.b16 %v2239
    %v2512 = vunpack.c.h.b16 %v2239
    %v2513 = vunpack.c.l.b16 %v2240
    %v2514 = vunpack.c.h.b16 %v2240
    %v2515 = vunpack.c.l.b16 %v2241
    %v2516 = vunpack.c.h.b16 %v2241
    %v2517 = vunpack.c.l.b16 %v2242
    %v2518 = vunpack.c.h.b16 %v2242
    %v2519 = vunpack.c.l.b16 %v2243
    %v2520 = vunpack.c.h.b16 %v2243
    %v2521 = vunpack.c.l.b16 %v2244
    %v2522 = vunpack.c.h.b16 %v2244
    %v2523 = vunpack.c.l.b16 %v2245
    %v2524 = vunpack.c.h.b16 %v2245
    %v2525 = vunpack.c.l.b16 %v2246
    %v2526 = vunpack.c.h.b16 %v2246
    %v2527 = vunpack.c.l.b16 %v2247
    %v2528 = vunpack.c.h.b16 %v2247
    %v2529 = vunpack.c.l.b16 %v2248
    %v2530 = vunpack.c.h.b16 %v2248
    %v2531 = vunpack.c.l.b16 %v2249
    %v2532 = vunpack.c.h.b16 %v2249
    %v2533 = vunpack.c.l.b16 %v2250
    %v2534 = vunpack.c.h.b16 %v2250
    %v2535 = vunpack.c.l.b16 %v2251
    %v2536 = vunpack.c.h.b16 %v2251
    %v2537 = vunpack.c.l.b16 %v2252
    %v2538 = vunpack.c.h.b16 %v2252
    %v2539 = vunpack.c.l.b16 %v2253
    %v2540 = vunpack.c.h.b16 %v2253
    %v2541 = vunpack.c.l.b16 %v2254
    %v2542 = vunpack.c.h.b16 %v2254
    %v2543 = vunpack.c.l.b16 %v2255
    %v2544 = vunpack.c.h.b16 %v2255
    %v2545 = vunpack.c.l.b16 %v2256
    %v2546 = vunpack.c.h.b16 %v2256
    %v2547 = vunpack.c.l.b16 %v2257
    %v2548 = vunpack.c.h.b16 %v2257
    %v2549 = vunpack.c.l.b16 %v2258
    %v2550 = vunpack.c.h.b16 %v2258
    %v2551 = vunpack.c.l.b16 %v2259
    %v2552 = vunpack.c.h.b16 %v2259
    %v2553 = vunpack.c.l.b16 %v2260
    %v2554 = vunpack.c.h.b16 %v2260
    %v2555 = vunpack.c.l.b16 %v2261
    %v2556 = vunpack.c.h.b16 %v2261
    %v2557 = vunpack.c.l.b16 %v2262
    %v2558 = vunpack.c.h.b16 %v2262
    %v2559 = vunpack.c.l.b16 %v2263
    %v2560 = vunpack.c.h.b16 %v2263
    %v2561 = vunpack.c.l.b16 %v2264
    %v2562 = vunpack.c.h.b16 %v2264
    %v2563 = vunpack.c.l.b16 %v2265
    %v2564 = vunpack.c.h.b16 %v2265
    %v2565 = vunpack.c.l.b16 %v2266
    %v2566 = vunpack.c.h.b16 %v2266
    %v2567 = vunpack.c.l.b16 %v2267
    %v2568 = vunpack.c.h.b16 %v2267
    %v2569 = vunpack.c.l.b16 %v2268
    %v2570 = vunpack.c.h.b16 %v2268
    %v2571 = vunpack.c.l.b16 %v2269
    %v2572 = vunpack.c.h.b16 %v2269
    %v2573 = vunpack.c.l.b16 %v2270
    %v2574 = vunpack.c.h.b16 %v2270
    %v2575 = vunpack.c.l.b16 %v2271
    %v2576 = vunpack.c.h.b16 %v2271
    %v2577 = vunpack.c.l.b16 %v2272
    %v2578 = vunpack.c.h.b16 %v2272
    %v2579 = vunpack.c.l.b16 %v2273
    %v2580 = vunpack.c.h.b16 %v2273
    %v2581 = vunpack.c.l.b16 %v2274
    %v2582 = vunpack.c.h.b16 %v2274
    %v2583 = vunpack.c.l.b16 %v2275
    %v2584 = vunpack.c.h.b16 %v2275
    %v2585 = vunpack.c.l.b16 %v2276
    %v2586 = vunpack.c.h.b16 %v2276
    %v2587 = vunpack.c.l.b16 %v2277
    %v2588 = vunpack.c.h.b16 %v2277
    %v2589 = vunpack.c.l.b16 %v2278
    %v2590 = vunpack.c.h.b16 %v2278
    %v2591 = vunpack.c.l.b16 %v2279
    %v2592 = vunpack.c.h.b16 %v2279
    %v2593 = vunpack.c.l.b16 %v2280
    %v2594 = vunpack.c.h.b16 %v2280
    %v2595 = vunpack.c.l.b16 %v2281
    %v2596 = vunpack.c.h.b16 %v2281
    %v2597 = vunpack.c.l.b16 %v2282
    %v2598 = vunpack.c.h.b16 %v2282
    %v2599 = vunpack.c.l.b16 %v2283
    %v2600 = vunpack.c.h.b16 %v2283
    %v2601 = vunpack.c.l.b16 %v2284
    %v2602 = vunpack.c.h.b16 %v2284
    %v2603 = vunpack.c.l.b16 %v2285
    %v2604 = vunpack.c.h.b16 %v2285
    %v2605 = vunpack.c.l.b16 %v2286
    %v2606 = vunpack.c.h.b16 %v2286
    %v2607 = vunpack.c.l.b16 %v2287
    %v2608 = vunpack.c.h.b16 %v2287
    %v2609 = vunpack.c.l.b16 %v2288
    %v2610 = vunpack.c.h.b16 %v2288
    %v2611 = vunpack.c.l.b16 %v2289
    %v2612 = vunpack.c.h.b16 %v2289
    %v2613 = vunpack.c.l.b16 %v2290
    %v2614 = vunpack.c.h.b16 %v2290
    %v2615 = vunpack.c.l.b16 %v2291
    %v2616 = vunpack.c.h.b16 %v2291
    %v2617 = vunpack.c.l.b16 %v2292
    %v2618 = vunpack.c.h.b16 %v2292
    %v2619 = vunpack.c.l.b16 %v2293
    %v2620 = vunpack.c.h.b16 %v2293
    %v2621 = vunpack.c.l.b16 %v2294
    %v2622 = vunpack.c.h.b16 %v2294
    %v2623 = vunpack.c.l.b16 %v2295
    %v2624 = vunpack.c.h.b16 %v2295
    %v2625 = vunpack.c.l.b16 %v2296
    %v2626 = vunpack.c.h.b16 %v2296
    %v2627 = vunpack.c.l.b16 %v2297
    %v2628 = vunpack.c.h.b16 %v2297
    %v2629 = vunpack.c.l.b16 %v2298
    %v2630 = vunpack.c.h.b16 %v2298
    %v2631 = vunpack.c.l.b16 %v2299
    %v2632 = vunpack.c.h.b16 %v2299
    %v2633 = vunpack.c.l.b16 %v2300
    %v2634 = vunpack.c.h.b16 %v2300
    %v2635 = vunpack.c.l.b16 %v2301
    %v2636 = vunpack.c.h.b16 %v2301
    %v2637 = vunpack.c.l.b16 %v2302
    %v2638 = vunpack.c.h.b16 %v2302
    %v2639 = vunpack.c.l.b16 %v2303
    %v2640 = vunpack.c.h.b16 %v2303
    %v2641 = vunpack.c.l.b16 %v2304
    %v2642 = vunpack.c.h.b16 %v2304
    %v2643 = vunpack.c.l.b16 %v2305
    %v2644 = vunpack.c.h.b16 %v2305
    %v2645 = vunpack.c.l.b16 %v2306
    %v2646 = vunpack.c.h.b16 %v2306
    %v2647 = vunpack.c.l.b16 %v2307
    %v2648 = vunpack.c.h.b16 %v2307
    %v2649 = vunpack.c.l.b16 %v2308
    %v2650 = vunpack.c.h.b16 %v2308
    %v2651 = vunpack.c.l.b16 %v2309
    %v2652 = vunpack.c.h.b16 %v2309
    %v2653 = vunpack.c.l.b16 %v2310
    %v2654 = vunpack.c.h.b16 %v2310
    %v2655 = vunpack.c.l.b16 %v2311
    %v2656 = vunpack.c.h.b16 %v2311
    %v2657 = vunpack.c.l.b16 %v2312
    %v2658 = vunpack.c.h.b16 %v2312
    %v2659 = vunpack.c.l.b16 %v2313
    %v2660 = vunpack.c.h.b16 %v2313
    %v2661 = vunpack.c.l.b16 %v2314
    %v2662 = vunpack.c.h.b16 %v2314
    %v2663 = vunpack.c.l.b16 %v2315
    %v2664 = vunpack.c.h.b16 %v2315
    %v2665 = vunpack.c.l.b16 %v2316
    %v2666 = vunpack.c.h.b16 %v2316
    %v2667 = vunpack.c.l.b16 %v2317
    %v2668 = vunpack.c.h.b16 %v2317
    %v2669 = vunpack.c.l.b16 %v2318
    %v2670 = vunpack.c.h.b16 %v2318
    %v2671 = vunpack.c.l.b16 %v2319
    %v2672 = vunpack.c.h.b16 %v2319
    %v2673 = vunpack.c.l.b16 %v2320
    %v2674 = vunpack.c.h.b16 %v2320
    %v2675 = vunpack.c.l.b16 %v2321
    %v2676 = vunpack.c.h.b16 %v2321
    %v2677 = vunpack.c.l.b16 %v2322
    %v2678 = vunpack.c.h.b16 %v2322
    %v2679 = vunpack.c.l.b16 %v2323
    %v2680 = vunpack.c.h.b16 %v2323
    %v2681 = vunpack.c.l.b16 %v2324
    %v2682 = vunpack.c.h.b16 %v2324
    %v2683 = vunpack.c.l.b16 %v2325
    %v2684 = vunpack.c.h.b16 %v2325
    %v2685 = vunpack.c.l.b16 %v2326
    %v2686 = vunpack.c.h.b16 %v2326
    %v2687 = vunpack.c.l.b16 %v2327
    %v2688 = vunpack.c.h.b16 %v2327
    %v2689 = vunpack.c.l.b16 %v2328
    %v2690 = vunpack.c.h.b16 %v2328
    %v2691 = vunpack.c.l.b16 %v2329
    %v2692 = vunpack.c.h.b16 %v2329
    %v2693 = vunpack.c.l.b16 %v2330
    %v2694 = vunpack.c.h.b16 %v2330
    %v2695 = vunpack.c.l.b16 %v2331
    %v2696 = vunpack.c.h.b16 %v2331
    %v2697 = vunpack.c.l.b16 %v2332
    %v2698 = vunpack.c.h.b16 %v2332
    %v2699 = vunpack.c.l.b16 %v2333
    %v2700 = vunpack.c.h.b16 %v2333
    %v2701 = vunpack.c.l.b16 %v2334
    %v2702 = vunpack.c.h.b16 %v2334
    %v2703 = vunpack.c.l.b16 %v2335
    %v2704 = vunpack.c.h.b16 %v2335
    %v2705 = vunpack.c.l.b16 %v2336
    %v2706 = vunpack.c.h.b16 %v2336
    %v2707 = vunpack.c.l.b16 %v2337
    %v2708 = vunpack.c.h.b16 %v2337
    %v2709 = vunpack.c.l.b16 %v2338
    %v2710 = vunpack.c.h.b16 %v2338
    %v2711 = vunpack.c.l.b16 %v2339
    %v2712 = vunpack.c.h.b16 %v2339
    %v2713 = vunpack.c.l.b16 %v2340
    %v2714 = vunpack.c.h.b16 %v2340
    %v2715 = vunpack.c.l.b16 %v2341
    %v2716 = vunpack.c.h.b16 %v2341
    %v2717 = vunpack.c.l.b16 %v2342
    %v2718 = vunpack.c.h.b16 %v2342
    %v2719 = vunpack.c.l.b16 %v2343
    %v2720 = vunpack.c.h.b16 %v2343
    %v2721 = vunpack.c.l.b16 %v2344
    %v2722 = vunpack.c.h.b16 %v2344
    %v2723 = vunpack.c.l.b16 %v2345
    %v2724 = vunpack.c.h.b16 %v2345
    %v2725 = vunpack.c.l.b16 %v2346
    %v2726 = vunpack.c.h.b16 %v2346
    %v2727 = vunpack.c.l.b16 %v2347
    %v2728 = vunpack.c.h.b16 %v2347
    %v2729 = vunpack.c.l.b16 %v2348
    %v2730 = vunpack.c.h.b16 %v2348
    %v2731 = vunpack.c.l.b16 %v2349
    %v2732 = vunpack.c.h.b16 %v2349
    %v2733 = vunpack.c.l.b16 %v2350
    %v2734 = vunpack.c.h.b16 %v2350
    %v2735 = vunpack.c.l.b16 %v2351
    %v2736 = vunpack.c.h.b16 %v2351
    %v2737 = vunpack.c.l.b16 %v2352
    %v2738 = vunpack.c.h.b16 %v2352
    %v2739 = vunpack.c.l.b16 %v2353
    %v2740 = vunpack.c.h.b16 %v2353
    %v2741 = vunpack.c.l.b16 %v2354
    %v2742 = vunpack.c.h.b16 %v2354
    %v2743 = vunpack.c.l.b16 %v2355
    %v2744 = vunpack.c.h.b16 %v2355
    %v2745 = vunpack.c.l.b16 %v2356
    %v2746 = vunpack.c.h.b16 %v2356
    %v2747 = vunpack.c.l.b16 %v2357
    %v2748 = vunpack.c.h.b16 %v2357
    %v2749 = vunpack.c.l.b16 %v2358
    %v2750 = vunpack.c.h.b16 %v2358
    %v2751 = vunpack.c.l.b16 %v2359
    %v2752 = vunpack.c.h.b16 %v2359
    %v2753 = vunpack.c.l.b16 %v2360
    %v2754 = vunpack.c.h.b16 %v2360
    %v2755 = vunpack.c.l.b16 %v2361
    %v2756 = vunpack.c.h.b16 %v2361
    %v2757 = vpack.c.b16 %v2505, %v2501
    %v2758 = vpack.c.b16 %v2506, %v2502
    %v2759 = vpack.c.b16 %v2507, %v2503
    %v2760 = vpack.c.b16 %v2508, %v2504
    %v2761 = vpack.c.b16 %v2513, %v2509
    %v2762 = vpack.c.b16 %v2514, %v2510
    %v2763 = vpack.c.b16 %v2515, %v2511
    %v2764 = vpack.c.b16 %v2516, %v2512
    %v2765 = vpack.c.b16 %v2521, %v2517
    %v2766 = vpack.c.b16 %v2522, %v2518
    %v2767 = vpack.c.b16 %v2523, %v2519
    %v2768 = vpack.c.b16 %v2524, %v2520
    %v2769 = vpack.c.b16 %v2529, %v2525
    %v2770 = vpack.c.b16 %v2530, %v2526
    %v2771 = vpack.c.b16 %v2531, %v2527
    %v2772 = vpack.c.b16 %v2532, %v2528
    %v2773 = vpack.c.b16 %v2537, %v2533
    %v2774 = vpack.c.b16 %v2538, %v2534
    %v2775 = vpack.c.b16 %v2539, %v2535
    %v2776 = vpack.c.b16 %v2540, %v2536
    %v2777 = vpack.c.b16 %v2545, %v2541
    %v2778 = vpack.c.b16 %v2546, %v2542
    %v2779 = vpack.c.b16 %v2547, %v2543
    %v2780 = vpack.c.b16 %v2548, %v2544
    %v2781 = vpack.c.b16 %v2553, %v2549
    %v2782 = vpack.c.b16 %v2554, %v2550
    %v2783 = vpack.c.b16 %v2555, %v2551
    %v2784 = vpack.c.b16 %v2556, %v2552
    %v2785 = vpack.c.b16 %v2561, %v2557
    %v2786 = vpack.c.b16 %v2562, %v2558
    %v2787 = vpack.c.b16 %v2563, %v2559
    %v2788 = vpack.c.b16 %v2564, %v2560
    %v2789 = vpack.c.b16 %v2569, %v2565
    %v2790 = vpack.c.b16 %v2570, %v2566
    %v2791 = vpack.c.b16 %v2571, %v2567
    %v2792 = vpack.c.b16 %v2572, %v2568
    %v2793 = vpack.c.b16 %v2577, %v2573
    %v2794 = vpack.c.b16 %v2578, %v2574
    %v2795 = vpack.c.b16 %v2579, %v2575
    %v2796 = vpack.c.b16 %v2580, %v2576
    %v2797 = vpack.c.b16 %v2585, %v2581
    %v2798 = vpack.c.b16 %v2586, %v2582
    %v2799 = vpack.c.b16 %v2587, %v2583
    %v2800 = vpack.c.b16 %v2588, %v2584
    %v2801 = vpack.c.b16 %v2593, %v2589
    %v2802 = vpack.c.b16 %v2594, %v2590
    %v2803 = vpack.c.b16 %v2595, %v2591
    %v2804 = vpack.c.b16 %v2596, %v2592
    %v2805 = vpack.c.b16 %v2601, %v2597
    %v2806 = vpack.c.b16 %v2602, %v2598
    %v2807 = vpack.c.b16 %v2603, %v2599
    %v2808 = vpack.c.b16 %v2604, %v2600
    %v2809 = vpack.c.b16 %v2609, %v2605
    %v2810 = vpack.c.b16 %v2610, %v2606
    %v2811 = vpack.c.b16 %v2611, %v2607
    %v2812 = vpack.c.b16 %v2612, %v2608
    %v2813 = vpack.c.b16 %v2617, %v2613
    %v2814 = vpack.c.b16 %v2618, %v2614
    %v2815 = vpack.c.b16 %v2619, %v2615
    %v2816 = vpack.c.b16 %v2620, %v2616
    %v2817 = vpack.c.b16 %v2625, %v2621
    %v2818 = vpack.c.b16 %v2626, %v2622
    %v2819 = vpack.c.b16 %v2627, %v2623
    %v2820 = vpack.c.b16 %v2628, %v2624
    %v2821 = vpack.c.b16 %v2633, %v2629
    %v2822 = vpack.c.b16 %v2634, %v2630
    %v2823 = vpack.c.b16 %v2635, %v2631
    %v2824 = vpack.c.b16 %v2636, %v2632
    %v2825 = vpack.c.b16 %v2641, %v2637
    %v2826 = vpack.c.b16 %v2642, %v2638
    %v2827 = vpack.c.b16 %v2643, %v2639
    %v2828 = vpack.c.b16 %v2644, %v2640
    %v2829 = vpack.c.b16 %v2649, %v2645
    %v2830 = vpack.c.b16 %v2650, %v2646
    %v2831 = vpack.c.b16 %v2651, %v2647
    %v2832 = vpack.c.b16 %v2652, %v2648
    %v2833 = vpack.c.b16 %v2657, %v2653
    %v2834 = vpack.c.b16 %v2658, %v2654
    %v2835 = vpack.c.b16 %v2659, %v2655
    %v2836 = vpack.c.b16 %v2660, %v2656
    %v2837 = vpack.c.b16 %v2665, %v2661
    %v2838 = vpack.c.b16 %v2666, %v2662
    %v2839 = vpack.c.b16 %v2667, %v2663
    %v2840 = vpack.c.b16 %v2668, %v2664
    %v2841 = vpack.c.b16 %v2673, %v2669
    %v2842 = vpack.c.b16 %v2674, %v2670
    %v2843 = vpack.c.b16 %v2675, %v2671
    %v2844 = vpack.c.b16 %v2676, %v2672
    %v2845 = vpack.c.b16 %v2681, %v2677
    %v2846 = vpack.c.b16 %v2682, %v2678
    %v2847 = vpack.c.b16 %v2683, %v2679
    %v2848 = vpack.c.b16 %v2684, %v2680
    %v2849 = vpack.c.b16 %v2689, %v2685
    %v2850 = vpack.c.b16 %v2690, %v2686
    %v2851 = vpack.c.b16 %v2691, %v2687
    %v2852 = vpack.c.b16 %v2692, %v2688
    %v2853 = vpack.c.b16 %v2697, %v2693
    %v2854 = vpack.c.b16 %v2698, %v2694
    %v2855 = vpack.c.b16 %v2699, %v2695
    %v2856 = vpack.c.b16 %v2700, %v2696
    %v2857 = vpack.c.b16 %v2705, %v2701
    %v2858 = vpack.c.b16 %v2706, %v2702
    %v2859 = vpack.c.b16 %v2707, %v2703
    %v2860 = vpack.c.b16 %v2708, %v2704
    %v2861 = vpack.c.b16 %v2713, %v2709
    %v2862 = vpack.c.b16 %v2714, %v2710
    %v2863 = vpack.c.b16 %v2715, %v2711
    %v2864 = vpack.c.b16 %v2716, %v2712
    %v2865 = vpack.c.b16 %v2721, %v2717
    %v2866 = vpack.c.b16 %v2722, %v2718
    %v2867 = vpack.c.b16 %v2723, %v2719
    %v2868 = vpack.c.b16 %v2724, %v2720
    %v2869 = vpack.c.b16 %v2729, %v2725
    %v2870 = vpack.c.b16 %v2730, %v2726
    %v2871 = vpack.c.b16 %v2731, %v2727
    %v2872 = vpack.c.b16 %v2732, %v2728
    %v2873 = vpack.c.b16 %v2737, %v2733
    %v2874 = vpack.c.b16 %v2738, %v2734
    %v2875 = vpack.c.b16 %v2739, %v2735
    %v2876 = vpack.c.b16 %v2740, %v2736
    %v2877 = vpack.c.b16 %v2745, %v2741
    %v2878 = vpack.c.b16 %v2746, %v2742
    %v2879 = vpack.c.b16 %v2747, %v2743
    %v2880 = vpack.c.b16 %v2748, %v2744
    %v2881 = vpack.c.b16 %v2753, %v2749
    %v2882 = vpack.c.b16 %v2754, %v2750
    %v2883 = vpack.c.b16 %v2755, %v2751
    %v2884 = vpack.c.b16 %v2756, %v2752
    %3013 = vmatpush.bf16.msra.mxu0 %v2785
    %3014 = vmatpush.bf16.msra.mxu0 %v2781
    %3015 = vmatpush.bf16.msra.mxu0 %v2777
    %3016 = vmatpush.bf16.msra.mxu0 %v2773
    %3017 = vmatpush.bf16.msra.mxu0 %v2769
    %3018 = vmatpush.bf16.msra.mxu0 %v2765
    %3019 = vmatpush.bf16.msra.mxu0 %v2761
    %3020 = vmatpush.bf16.msra.mxu0 %v2757
    %3021 = vmatmul.bf16.gmra.mxu0 %v2229
    %v3022 = vpop.f32.mrf.mxu0
    %v3023 = vadd.f32 %v2365, %v3022
    %v3024 = vpop.f32.mrf.mxu0
    %3025 = vdwg.mxu0
    %3026 = vmatpush.bf16.msra.mxu0 %v2817
    %3027 = vmatpush.bf16.msra.mxu0 %v2813
    %3028 = vmatpush.bf16.msra.mxu0 %v2809
    %3029 = vmatpush.bf16.msra.mxu0 %v2805
    %3030 = vmatpush.bf16.msra.mxu0 %v2801
    %3031 = vmatpush.bf16.msra.mxu0 %v2797
    %3032 = vmatpush.bf16.msra.mxu0 %v2793
    %3033 = vmatpush.bf16.msra.mxu0 %v2789
    %3034 = vmatmul.bf16.gmra.mxu0 %v2230
    %v3035 = vpop.f32.mrf.mxu0
    %v3036 = vadd.f32 %v3023, %v3035
    %v3037 = vpop.f32.mrf.mxu0
    %3038 = vdwg.mxu0
    %3039 = vmatpush.bf16.msra.mxu0 %v2849
    %3040 = vmatpush.bf16.msra.mxu0 %v2845
    %3041 = vmatpush.bf16.msra.mxu0 %v2841
    %3042 = vmatpush.bf16.msra.mxu0 %v2837
    %3043 = vmatpush.bf16.msra.mxu0 %v2833
    %3044 = vmatpush.bf16.msra.mxu0 %v2829
    %3045 = vmatpush.bf16.msra.mxu0 %v2825
    %3046 = vmatpush.bf16.msra.mxu0 %v2821
    %3047 = vmatmul.bf16.gmra.mxu0 %v2231
    %v3048 = vpop.f32.mrf.mxu0
    %v3049 = vadd.f32 %v3036, %v3048
    %v3050 = vpop.f32.mrf.mxu0
    %3051 = vdwg.mxu0
    %3052 = vmatpush.bf16.msra.mxu0 %v2881
    %3053 = vmatpush.bf16.msra.mxu0 %v2877
    %3054 = vmatpush.bf16.msra.mxu0 %v2873
    %3055 = vmatpush.bf16.msra.mxu0 %v2869
    %3056 = vmatpush.bf16.msra.mxu0 %v2865
    %3057 = vmatpush.bf16.msra.mxu0 %v2861
    %3058 = vmatpush.bf16.msra.mxu0 %v2857
    %3059 = vmatpush.bf16.msra.mxu0 %v2853
    %3060 = vmatmul.bf16.gmra.mxu0 %v2232
    %v3061 = vpop.f32.mrf.mxu0
    %v3062 = vadd.f32 %v3049, %v3061
    %v3063 = vpop.f32.mrf.mxu0
    %3064 = vdwg.mxu0
    %3065 = vmatpush.bf16.msra.mxu0 %v2786
    %3066 = vmatpush.bf16.msra.mxu0 %v2782
    %3067 = vmatpush.bf16.msra.mxu0 %v2778
    %3068 = vmatpush.bf16.msra.mxu0 %v2774
    %3069 = vmatpush.bf16.msra.mxu0 %v2770
    %3070 = vmatpush.bf16.msra.mxu0 %v2766
    %3071 = vmatpush.bf16.msra.mxu0 %v2762
    %3072 = vmatpush.bf16.msra.mxu0 %v2758
    %3073 = vmatmul.bf16.gmra.mxu0 %v2229
    %v3074 = vpop.f32.mrf.mxu0
    %v3075 = vadd.f32 %v2366, %v3074
    %v3076 = vpop.f32.mrf.mxu0
    %3077 = vdwg.mxu0
    %3078 = vmatpush.bf16.msra.mxu0 %v2818
    %3079 = vmatpush.bf16.msra.mxu0 %v2814
    %3080 = vmatpush.bf16.msra.mxu0 %v2810
    %3081 = vmatpush.bf16.msra.mxu0 %v2806
    %3082 = vmatpush.bf16.msra.mxu0 %v2802
    %3083 = vmatpush.bf16.msra.mxu0 %v2798
    %3084 = vmatpush.bf16.msra.mxu0 %v2794
    %3085 = vmatpush.bf16.msra.mxu0 %v2790
    %3086 = vmatmul.bf16.gmra.mxu0 %v2230
    %v3087 = vpop.f32.mrf.mxu0
    %v3088 = vadd.f32 %v3075, %v3087
    %v3089 = vpop.f32.mrf.mxu0
    %3090 = vdwg.mxu0
    %3091 = vmatpush.bf16.msra.mxu0 %v2850
    %3092 = vmatpush.bf16.msra.mxu0 %v2846
    %3093 = vmatpush.bf16.msra.mxu0 %v2842
    %3094 = vmatpush.bf16.msra.mxu0 %v2838
    %3095 = vmatpush.bf16.msra.mxu0 %v2834
    %3096 = vmatpush.bf16.msra.mxu0 %v2830
    %3097 = vmatpush.bf16.msra.mxu0 %v2826
    %3098 = vmatpush.bf16.msra.mxu0 %v2822
    %3099 = vmatmul.bf16.gmra.mxu0 %v2231
    %v3100 = vpop.f32.mrf.mxu0
    %v3101 = vadd.f32 %v3088, %v3100
    %v3102 = vpop.f32.mrf.mxu0
    %3103 = vdwg.mxu0
    %3104 = vmatpush.bf16.msra.mxu0 %v2882
    %3105 = vmatpush.bf16.msra.mxu0 %v2878
    %3106 = vmatpush.bf16.msra.mxu0 %v2874
    %3107 = vmatpush.bf16.msra.mxu0 %v2870
    %3108 = vmatpush.bf16.msra.mxu0 %v2866
    %3109 = vmatpush.bf16.msra.mxu0 %v2862
    %3110 = vmatpush.bf16.msra.mxu0 %v2858
    %3111 = vmatpush.bf16.msra.mxu0 %v2854
    %3112 = vmatmul.bf16.gmra.mxu0 %v2232
    %v3113 = vpop.f32.mrf.mxu0
    %v3114 = vadd.f32 %v3101, %v3113
    %v3115 = vpop.f32.mrf.mxu0
    %3116 = vdwg.mxu0
    %3117 = vmatpush.bf16.msra.mxu0 %v2787
    %3118 = vmatpush.bf16.msra.mxu0 %v2783
    %3119 = vmatpush.bf16.msra.mxu0 %v2779
    %3120 = vmatpush.bf16.msra.mxu0 %v2775
    %3121 = vmatpush.bf16.msra.mxu0 %v2771
    %3122 = vmatpush.bf16.msra.mxu0 %v2767
    %3123 = vmatpush.bf16.msra.mxu0 %v2763
    %3124 = vmatpush.bf16.msra.mxu0 %v2759
    %3125 = vmatmul.bf16.gmra.mxu0 %v2229
    %v3126 = vpop.f32.mrf.mxu0
    %v3127 = vadd.f32 %v2367, %v3126
    %v3128 = vpop.f32.mrf.mxu0
    %3129 = vdwg.mxu0
    %3130 = vmatpush.bf16.msra.mxu0 %v2819
    %3131 = vmatpush.bf16.msra.mxu0 %v2815
    %3132 = vmatpush.bf16.msra.mxu0 %v2811
    %3133 = vmatpush.bf16.msra.mxu0 %v2807
    %3134 = vmatpush.bf16.msra.mxu0 %v2803
    %3135 = vmatpush.bf16.msra.mxu0 %v2799
    %3136 = vmatpush.bf16.msra.mxu0 %v2795
    %3137 = vmatpush.bf16.msra.mxu0 %v2791
    %3138 = vmatmul.bf16.gmra.mxu0 %v2230
    %v3139 = vpop.f32.mrf.mxu0
    %v3140 = vadd.f32 %v3127, %v3139
    %v3141 = vpop.f32.mrf.mxu0
    %3142 = vdwg.mxu0
    %3143 = vmatpush.bf16.msra.mxu0 %v2851
    %3144 = vmatpush.bf16.msra.mxu0 %v2847
    %3145 = vmatpush.bf16.msra.mxu0 %v2843
    %3146 = vmatpush.bf16.msra.mxu0 %v2839
    %3147 = vmatpush.bf16.msra.mxu0 %v2835
    %3148 = vmatpush.bf16.msra.mxu0 %v2831
    %3149 = vmatpush.bf16.msra.mxu0 %v2827
    %3150 = vmatpush.bf16.msra.mxu0 %v2823
    %3151 = vmatmul.bf16.gmra.mxu0 %v2231
    %v3152 = vpop.f32.mrf.mxu0
    %v3153 = vadd.f32 %v3140, %v3152
    %v3154 = vpop.f32.mrf.mxu0
    %3155 = vdwg.mxu0
    %3156 = vmatpush.bf16.msra.mxu0 %v2883
    %3157 = vmatpush.bf16.msra.mxu0 %v2879
    %3158 = vmatpush.bf16.msra.mxu0 %v2875
    %3159 = vmatpush.bf16.msra.mxu0 %v2871
    %3160 = vmatpush.bf16.msra.mxu0 %v2867
    %3161 = vmatpush.bf16.msra.mxu0 %v2863
    %3162 = vmatpush.bf16.msra.mxu0 %v2859
    %3163 = vmatpush.bf16.msra.mxu0 %v2855
    %3164 = vmatmul.bf16.gmra.mxu0 %v2232
    %v3165 = vpop.f32.mrf.mxu0
    %v3166 = vadd.f32 %v3153, %v3165
    %v3167 = vpop.f32.mrf.mxu0
    %3168 = vdwg.mxu0
    %3169 = vmatpush.bf16.msra.mxu0 %v2788
    %3170 = vmatpush.bf16.msra.mxu0 %v2784
    %3171 = vmatpush.bf16.msra.mxu0 %v2780
    %3172 = vmatpush.bf16.msra.mxu0 %v2776
    %3173 = vmatpush.bf16.msra.mxu0 %v2772
    %3174 = vmatpush.bf16.msra.mxu0 %v2768
    %3175 = vmatpush.bf16.msra.mxu0 %v2764
    %3176 = vmatpush.bf16.msra.mxu0 %v2760
    %3177 = vmatmul.bf16.gmra.mxu0 %v2229
    %v3178 = vpop.f32.mrf.mxu0
    %v3179 = vadd.f32 %v2368, %v3178
    %v3180 = vpop.f32.mrf.mxu0
    %3181 = vdwg.mxu0
    %3182 = vmatpush.bf16.msra.mxu0 %v2820
    %3183 = vmatpush.bf16.msra.mxu0 %v2816
    %3184 = vmatpush.bf16.msra.mxu0 %v2812
    %3185 = vmatpush.bf16.msra.mxu0 %v2808
    %3186 = vmatpush.bf16.msra.mxu0 %v2804
    %3187 = vmatpush.bf16.msra.mxu0 %v2800
    %3188 = vmatpush.bf16.msra.mxu0 %v2796
    %3189 = vmatpush.bf16.msra.mxu0 %v2792
    %3190 = vmatmul.bf16.gmra.mxu0 %v2230
    %v3191 = vpop.f32.mrf.mxu0
    %v3192 = vadd.f32 %v3179, %v3191
    %v3193 = vpop.f32.mrf.mxu0
    %3194 = vdwg.mxu0
    %3195 = vmatpush.bf16.msra.mxu0 %v2852
    %3196 = vmatpush.bf16.msra.mxu0 %v2848
    %3197 = vmatpush.bf16.msra.mxu0 %v2844
    %3198 = vmatpush.bf16.msra.mxu0 %v2840
    %3199 = vmatpush.bf16.msra.mxu0 %v2836
    %3200 = vmatpush.bf16.msra.mxu0 %v2832
    %3201 = vmatpush.bf16.msra.mxu0 %v2828
    %3202 = vmatpush.bf16.msra.mxu0 %v2824
    %3203 = vmatmul.bf16.gmra.mxu0 %v2231
    %v3204 = vpop.f32.mrf.mxu0
    %v3205 = vadd.f32 %v3192, %v3204
    %v3206 = vpop.f32.mrf.mxu0
    %3207 = vdwg.mxu0
    %3208 = vmatpush.bf16.msra.mxu0 %v2884
    %3209 = vmatpush.bf16.msra.mxu0 %v2880
    %3210 = vmatpush.bf16.msra.mxu0 %v2876
    %3211 = vmatpush.bf16.msra.mxu0 %v2872
    %3212 = vmatpush.bf16.msra.mxu0 %v2868
    %3213 = vmatpush.bf16.msra.mxu0 %v2864
    %3214 = vmatpush.bf16.msra.mxu0 %v2860
    %3215 = vmatpush.bf16.msra.mxu0 %v2856
    %3216 = vmatmul.bf16.gmra.mxu0 %v2232
    %v3217 = vpop.f32.mrf.mxu0
    %v3218 = vadd.f32 %v3205, %v3217
    %v3219 = vpop.f32.mrf.mxu0
    %3220 = vdwg.mxu0
    %v3221 = vpack.c.bf16 %v3062, %v3062
    %v3222 = vpack.c.bf16 %v3114, %v3114
    %v3223 = vpack.c.bf16 %v3166, %v3166
    %v3224 = vpack.c.bf16 %v3218, %v3218
    %v3225 = vunpack.c.l.bf16 %v3221
    %v3226 = vunpack.c.l.bf16 %v3222
    %v3227 = vunpack.c.l.bf16 %v3223
    %v3228 = vunpack.c.l.bf16 %v3224
    %v3229 = vtanh.pop %v3225
    %v3230 = vtanh.pop %v3226
    %v3231 = vtanh.pop %v3227
    %v3232 = vtanh.pop %v3228
    %v3233 = vpack.c.bf16 %v3229, %v3229
    %v3234 = vpack.c.bf16 %v3230, %v3230
    %v3235 = vpack.c.bf16 %v3231, %v3231
    %v3236 = vpack.c.bf16 %v3232, %v3232
    %s3237 = scalar_lea.vmem [#allocation7], 3072
    %v3238 = vld [vmem:[%s3237] sm:$0xff]
    %v3239 = vld [vmem:[%s3237 + $0x8] sm:$0xff]
    %v3240 = vld [vmem:[%s3237 + $0x10] sm:$0xff]
    %v3241 = vld [vmem:[%s3237 + $0x18] sm:$0xff]
    %v3242 = vld [vmem:[%s3237 + $0x20] sm:$0xff]
    %v3243 = vld [vmem:[%s3237 + $0x28] sm:$0xff]
    %v3244 = vld [vmem:[%s3237 + $0x30] sm:$0xff]
    %v3245 = vld [vmem:[%s3237 + $0x38] sm:$0xff]
    %v3246 = vld [vmem:[%s3237 + $0x40] sm:$0xff]
    %v3247 = vld [vmem:[%s3237 + $0x48] sm:$0xff]
    %v3248 = vld [vmem:[%s3237 + $0x50] sm:$0xff]
    %v3249 = vld [vmem:[%s3237 + $0x58] sm:$0xff]
    %v3250 = vld [vmem:[%s3237 + $0x60] sm:$0xff]
    %v3251 = vld [vmem:[%s3237 + $0x68] sm:$0xff]
    %v3252 = vld [vmem:[%s3237 + $0x70] sm:$0xff]
    %v3253 = vld [vmem:[%s3237 + $0x78] sm:$0xff]
    %v3254 = vld [vmem:[%s3237 + $0x80] sm:$0xff]
    %v3255 = vld [vmem:[%s3237 + $0x88] sm:$0xff]
    %v3256 = vld [vmem:[%s3237 + $0x90] sm:$0xff]
    %v3257 = vld [vmem:[%s3237 + $0x98] sm:$0xff]
    %v3258 = vld [vmem:[%s3237 + $0xa0] sm:$0xff]
    %v3259 = vld [vmem:[%s3237 + $0xa8] sm:$0xff]
    %v3260 = vld [vmem:[%s3237 + $0xb0] sm:$0xff]
    %v3261 = vld [vmem:[%s3237 + $0xb8] sm:$0xff]
    %v3262 = vld [vmem:[%s3237 + $0xc0] sm:$0xff]
    %v3263 = vld [vmem:[%s3237 + $0xc8] sm:$0xff]
    %v3264 = vld [vmem:[%s3237 + $0xd0] sm:$0xff]
    %v3265 = vld [vmem:[%s3237 + $0xd8] sm:$0xff]
    %v3266 = vld [vmem:[%s3237 + $0xe0] sm:$0xff]
    %v3267 = vld [vmem:[%s3237 + $0xe8] sm:$0xff]
    %v3268 = vld [vmem:[%s3237 + $0xf0] sm:$0xff]
    %v3269 = vld [vmem:[%s3237 + $0xf8] sm:$0xff]
    %v3270 = vld [vmem:[%s3237 + $0x100] sm:$0xff]
    %v3271 = vld [vmem:[%s3237 + $0x108] sm:$0xff]
    %v3272 = vld [vmem:[%s3237 + $0x110] sm:$0xff]
    %v3273 = vld [vmem:[%s3237 + $0x118] sm:$0xff]
    %v3274 = vld [vmem:[%s3237 + $0x120] sm:$0xff]
    %v3275 = vld [vmem:[%s3237 + $0x128] sm:$0xff]
    %v3276 = vld [vmem:[%s3237 + $0x130] sm:$0xff]
    %v3277 = vld [vmem:[%s3237 + $0x138] sm:$0xff]
    %v3278 = vld [vmem:[%s3237 + $0x140] sm:$0xff]
    %v3279 = vld [vmem:[%s3237 + $0x148] sm:$0xff]
    %v3280 = vld [vmem:[%s3237 + $0x150] sm:$0xff]
    %v3281 = vld [vmem:[%s3237 + $0x158] sm:$0xff]
    %v3282 = vld [vmem:[%s3237 + $0x160] sm:$0xff]
    %v3283 = vld [vmem:[%s3237 + $0x168] sm:$0xff]
    %v3284 = vld [vmem:[%s3237 + $0x170] sm:$0xff]
    %v3285 = vld [vmem:[%s3237 + $0x178] sm:$0xff]
    %v3286 = vld [vmem:[%s3237 + $0x180] sm:$0xff]
    %v3287 = vld [vmem:[%s3237 + $0x188] sm:$0xff]
    %v3288 = vld [vmem:[%s3237 + $0x190] sm:$0xff]
    %v3289 = vld [vmem:[%s3237 + $0x198] sm:$0xff]
    %v3290 = vld [vmem:[%s3237 + $0x1a0] sm:$0xff]
    %v3291 = vld [vmem:[%s3237 + $0x1a8] sm:$0xff]
    %v3292 = vld [vmem:[%s3237 + $0x1b0] sm:$0xff]
    %v3293 = vld [vmem:[%s3237 + $0x1b8] sm:$0xff]
    %v3294 = vld [vmem:[%s3237 + $0x1c0] sm:$0xff]
    %v3295 = vld [vmem:[%s3237 + $0x1c8] sm:$0xff]
    %v3296 = vld [vmem:[%s3237 + $0x1d0] sm:$0xff]
    %v3297 = vld [vmem:[%s3237 + $0x1d8] sm:$0xff]
    %v3298 = vld [vmem:[%s3237 + $0x1e0] sm:$0xff]
    %v3299 = vld [vmem:[%s3237 + $0x1e8] sm:$0xff]
    %v3300 = vld [vmem:[%s3237 + $0x1f0] sm:$0xff]
    %v3301 = vld [vmem:[%s3237 + $0x1f8] sm:$0xff]
    %v3302 = vld [vmem:[%s3237 + $0x200] sm:$0xff]
    %v3303 = vld [vmem:[%s3237 + $0x208] sm:$0xff]
    %v3304 = vld [vmem:[%s3237 + $0x210] sm:$0xff]
    %v3305 = vld [vmem:[%s3237 + $0x218] sm:$0xff]
    %v3306 = vld [vmem:[%s3237 + $0x220] sm:$0xff]
    %v3307 = vld [vmem:[%s3237 + $0x228] sm:$0xff]
    %v3308 = vld [vmem:[%s3237 + $0x230] sm:$0xff]
    %v3309 = vld [vmem:[%s3237 + $0x238] sm:$0xff]
    %v3310 = vld [vmem:[%s3237 + $0x240] sm:$0xff]
    %v3311 = vld [vmem:[%s3237 + $0x248] sm:$0xff]
    %v3312 = vld [vmem:[%s3237 + $0x250] sm:$0xff]
    %v3313 = vld [vmem:[%s3237 + $0x258] sm:$0xff]
    %v3314 = vld [vmem:[%s3237 + $0x260] sm:$0xff]
    %v3315 = vld [vmem:[%s3237 + $0x268] sm:$0xff]
    %v3316 = vld [vmem:[%s3237 + $0x270] sm:$0xff]
    %v3317 = vld [vmem:[%s3237 + $0x278] sm:$0xff]
    %v3318 = vld [vmem:[%s3237 + $0x280] sm:$0xff]
    %v3319 = vld [vmem:[%s3237 + $0x288] sm:$0xff]
    %v3320 = vld [vmem:[%s3237 + $0x290] sm:$0xff]
    %v3321 = vld [vmem:[%s3237 + $0x298] sm:$0xff]
    %v3322 = vld [vmem:[%s3237 + $0x2a0] sm:$0xff]
    %v3323 = vld [vmem:[%s3237 + $0x2a8] sm:$0xff]
    %v3324 = vld [vmem:[%s3237 + $0x2b0] sm:$0xff]
    %v3325 = vld [vmem:[%s3237 + $0x2b8] sm:$0xff]
    %v3326 = vld [vmem:[%s3237 + $0x2c0] sm:$0xff]
    %v3327 = vld [vmem:[%s3237 + $0x2c8] sm:$0xff]
    %v3328 = vld [vmem:[%s3237 + $0x2d0] sm:$0xff]
    %v3329 = vld [vmem:[%s3237 + $0x2d8] sm:$0xff]
    %v3330 = vld [vmem:[%s3237 + $0x2e0] sm:$0xff]
    %v3331 = vld [vmem:[%s3237 + $0x2e8] sm:$0xff]
    %v3332 = vld [vmem:[%s3237 + $0x2f0] sm:$0xff]
    %v3333 = vld [vmem:[%s3237 + $0x2f8] sm:$0xff]
    %v3334 = vld [vmem:[%s3237 + $0x300] sm:$0xff]
    %v3335 = vld [vmem:[%s3237 + $0x308] sm:$0xff]
    %v3336 = vld [vmem:[%s3237 + $0x310] sm:$0xff]
    %v3337 = vld [vmem:[%s3237 + $0x318] sm:$0xff]
    %v3338 = vld [vmem:[%s3237 + $0x320] sm:$0xff]
    %v3339 = vld [vmem:[%s3237 + $0x328] sm:$0xff]
    %v3340 = vld [vmem:[%s3237 + $0x330] sm:$0xff]
    %v3341 = vld [vmem:[%s3237 + $0x338] sm:$0xff]
    %v3342 = vld [vmem:[%s3237 + $0x340] sm:$0xff]
    %v3343 = vld [vmem:[%s3237 + $0x348] sm:$0xff]
    %v3344 = vld [vmem:[%s3237 + $0x350] sm:$0xff]
    %v3345 = vld [vmem:[%s3237 + $0x358] sm:$0xff]
    %v3346 = vld [vmem:[%s3237 + $0x360] sm:$0xff]
    %v3347 = vld [vmem:[%s3237 + $0x368] sm:$0xff]
    %v3348 = vld [vmem:[%s3237 + $0x370] sm:$0xff]
    %v3349 = vld [vmem:[%s3237 + $0x378] sm:$0xff]
    %v3350 = vld [vmem:[%s3237 + $0x380] sm:$0xff]
    %v3351 = vld [vmem:[%s3237 + $0x388] sm:$0xff]
    %v3352 = vld [vmem:[%s3237 + $0x390] sm:$0xff]
    %v3353 = vld [vmem:[%s3237 + $0x398] sm:$0xff]
    %v3354 = vld [vmem:[%s3237 + $0x3a0] sm:$0xff]
    %v3355 = vld [vmem:[%s3237 + $0x3a8] sm:$0xff]
    %v3356 = vld [vmem:[%s3237 + $0x3b0] sm:$0xff]
    %v3357 = vld [vmem:[%s3237 + $0x3b8] sm:$0xff]
    %v3358 = vld [vmem:[%s3237 + $0x3c0] sm:$0xff]
    %v3359 = vld [vmem:[%s3237 + $0x3c8] sm:$0xff]
    %v3360 = vld [vmem:[%s3237 + $0x3d0] sm:$0xff]
    %v3361 = vld [vmem:[%s3237 + $0x3d8] sm:$0xff]
    %v3362 = vld [vmem:[%s3237 + $0x3e0] sm:$0xff]
    %v3363 = vld [vmem:[%s3237 + $0x3e8] sm:$0xff]
    %v3364 = vld [vmem:[%s3237 + $0x3f0] sm:$0xff]
    %v3365 = vld [vmem:[%s3237 + $0x3f8] sm:$0xff]
    %s3366 = scalar_lea.vmem [#allocation9], 12
    %v3367 = vld [vmem:[%s3366] sm:$0xf]
    %v3369 = vperm.slane %v3367, 0
    %v3370 = vperm.slane %v3367, 1
    %v3371 = vperm.slane %v3367, 2
    %v3372 = vperm.slane %v3367, 3
    %v3505 = vunpack.c.l.b16 %v3238
    %v3506 = vunpack.c.h.b16 %v3238
    %v3507 = vunpack.c.l.b16 %v3239
    %v3508 = vunpack.c.h.b16 %v3239
    %v3509 = vunpack.c.l.b16 %v3240
    %v3510 = vunpack.c.h.b16 %v3240
    %v3511 = vunpack.c.l.b16 %v3241
    %v3512 = vunpack.c.h.b16 %v3241
    %v3513 = vunpack.c.l.b16 %v3242
    %v3514 = vunpack.c.h.b16 %v3242
    %v3515 = vunpack.c.l.b16 %v3243
    %v3516 = vunpack.c.h.b16 %v3243
    %v3517 = vunpack.c.l.b16 %v3244
    %v3518 = vunpack.c.h.b16 %v3244
    %v3519 = vunpack.c.l.b16 %v3245
    %v3520 = vunpack.c.h.b16 %v3245
    %v3521 = vunpack.c.l.b16 %v3246
    %v3522 = vunpack.c.h.b16 %v3246
    %v3523 = vunpack.c.l.b16 %v3247
    %v3524 = vunpack.c.h.b16 %v3247
    %v3525 = vunpack.c.l.b16 %v3248
    %v3526 = vunpack.c.h.b16 %v3248
    %v3527 = vunpack.c.l.b16 %v3249
    %v3528 = vunpack.c.h.b16 %v3249
    %v3529 = vunpack.c.l.b16 %v3250
    %v3530 = vunpack.c.h.b16 %v3250
    %v3531 = vunpack.c.l.b16 %v3251
    %v3532 = vunpack.c.h.b16 %v3251
    %v3533 = vunpack.c.l.b16 %v3252
    %v3534 = vunpack.c.h.b16 %v3252
    %v3535 = vunpack.c.l.b16 %v3253
    %v3536 = vunpack.c.h.b16 %v3253
    %v3537 = vunpack.c.l.b16 %v3254
    %v3538 = vunpack.c.h.b16 %v3254
    %v3539 = vunpack.c.l.b16 %v3255
    %v3540 = vunpack.c.h.b16 %v3255
    %v3541 = vunpack.c.l.b16 %v3256
    %v3542 = vunpack.c.h.b16 %v3256
    %v3543 = vunpack.c.l.b16 %v3257
    %v3544 = vunpack.c.h.b16 %v3257
    %v3545 = vunpack.c.l.b16 %v3258
    %v3546 = vunpack.c.h.b16 %v3258
    %v3547 = vunpack.c.l.b16 %v3259
    %v3548 = vunpack.c.h.b16 %v3259
    %v3549 = vunpack.c.l.b16 %v3260
    %v3550 = vunpack.c.h.b16 %v3260
    %v3551 = vunpack.c.l.b16 %v3261
    %v3552 = vunpack.c.h.b16 %v3261
    %v3553 = vunpack.c.l.b16 %v3262
    %v3554 = vunpack.c.h.b16 %v3262
    %v3555 = vunpack.c.l.b16 %v3263
    %v3556 = vunpack.c.h.b16 %v3263
    %v3557 = vunpack.c.l.b16 %v3264
    %v3558 = vunpack.c.h.b16 %v3264
    %v3559 = vunpack.c.l.b16 %v3265
    %v3560 = vunpack.c.h.b16 %v3265
    %v3561 = vunpack.c.l.b16 %v3266
    %v3562 = vunpack.c.h.b16 %v3266
    %v3563 = vunpack.c.l.b16 %v3267
    %v3564 = vunpack.c.h.b16 %v3267
    %v3565 = vunpack.c.l.b16 %v3268
    %v3566 = vunpack.c.h.b16 %v3268
    %v3567 = vunpack.c.l.b16 %v3269
    %v3568 = vunpack.c.h.b16 %v3269
    %v3569 = vunpack.c.l.b16 %v3270
    %v3570 = vunpack.c.h.b16 %v3270
    %v3571 = vunpack.c.l.b16 %v3271
    %v3572 = vunpack.c.h.b16 %v3271
    %v3573 = vunpack.c.l.b16 %v3272
    %v3574 = vunpack.c.h.b16 %v3272
    %v3575 = vunpack.c.l.b16 %v3273
    %v3576 = vunpack.c.h.b16 %v3273
    %v3577 = vunpack.c.l.b16 %v3274
    %v3578 = vunpack.c.h.b16 %v3274
    %v3579 = vunpack.c.l.b16 %v3275
    %v3580 = vunpack.c.h.b16 %v3275
    %v3581 = vunpack.c.l.b16 %v3276
    %v3582 = vunpack.c.h.b16 %v3276
    %v3583 = vunpack.c.l.b16 %v3277
    %v3584 = vunpack.c.h.b16 %v3277
    %v3585 = vunpack.c.l.b16 %v3278
    %v3586 = vunpack.c.h.b16 %v3278
    %v3587 = vunpack.c.l.b16 %v3279
    %v3588 = vunpack.c.h.b16 %v3279
    %v3589 = vunpack.c.l.b16 %v3280
    %v3590 = vunpack.c.h.b16 %v3280
    %v3591 = vunpack.c.l.b16 %v3281
    %v3592 = vunpack.c.h.b16 %v3281
    %v3593 = vunpack.c.l.b16 %v3282
    %v3594 = vunpack.c.h.b16 %v3282
    %v3595 = vunpack.c.l.b16 %v3283
    %v3596 = vunpack.c.h.b16 %v3283
    %v3597 = vunpack.c.l.b16 %v3284
    %v3598 = vunpack.c.h.b16 %v3284
    %v3599 = vunpack.c.l.b16 %v3285
    %v3600 = vunpack.c.h.b16 %v3285
    %v3601 = vunpack.c.l.b16 %v3286
    %v3602 = vunpack.c.h.b16 %v3286
    %v3603 = vunpack.c.l.b16 %v3287
    %v3604 = vunpack.c.h.b16 %v3287
    %v3605 = vunpack.c.l.b16 %v3288
    %v3606 = vunpack.c.h.b16 %v3288
    %v3607 = vunpack.c.l.b16 %v3289
    %v3608 = vunpack.c.h.b16 %v3289
    %v3609 = vunpack.c.l.b16 %v3290
    %v3610 = vunpack.c.h.b16 %v3290
    %v3611 = vunpack.c.l.b16 %v3291
    %v3612 = vunpack.c.h.b16 %v3291
    %v3613 = vunpack.c.l.b16 %v3292
    %v3614 = vunpack.c.h.b16 %v3292
    %v3615 = vunpack.c.l.b16 %v3293
    %v3616 = vunpack.c.h.b16 %v3293
    %v3617 = vunpack.c.l.b16 %v3294
    %v3618 = vunpack.c.h.b16 %v3294
    %v3619 = vunpack.c.l.b16 %v3295
    %v3620 = vunpack.c.h.b16 %v3295
    %v3621 = vunpack.c.l.b16 %v3296
    %v3622 = vunpack.c.h.b16 %v3296
    %v3623 = vunpack.c.l.b16 %v3297
    %v3624 = vunpack.c.h.b16 %v3297
    %v3625 = vunpack.c.l.b16 %v3298
    %v3626 = vunpack.c.h.b16 %v3298
    %v3627 = vunpack.c.l.b16 %v3299
    %v3628 = vunpack.c.h.b16 %v3299
    %v3629 = vunpack.c.l.b16 %v3300
    %v3630 = vunpack.c.h.b16 %v3300
    %v3631 = vunpack.c.l.b16 %v3301
    %v3632 = vunpack.c.h.b16 %v3301
    %v3633 = vunpack.c.l.b16 %v3302
    %v3634 = vunpack.c.h.b16 %v3302
    %v3635 = vunpack.c.l.b16 %v3303
    %v3636 = vunpack.c.h.b16 %v3303
    %v3637 = vunpack.c.l.b16 %v3304
    %v3638 = vunpack.c.h.b16 %v3304
    %v3639 = vunpack.c.l.b16 %v3305
    %v3640 = vunpack.c.h.b16 %v3305
    %v3641 = vunpack.c.l.b16 %v3306
    %v3642 = vunpack.c.h.b16 %v3306
    %v3643 = vunpack.c.l.b16 %v3307
    %v3644 = vunpack.c.h.b16 %v3307
    %v3645 = vunpack.c.l.b16 %v3308
    %v3646 = vunpack.c.h.b16 %v3308
    %v3647 = vunpack.c.l.b16 %v3309
    %v3648 = vunpack.c.h.b16 %v3309
    %v3649 = vunpack.c.l.b16 %v3310
    %v3650 = vunpack.c.h.b16 %v3310
    %v3651 = vunpack.c.l.b16 %v3311
    %v3652 = vunpack.c.h.b16 %v3311
    %v3653 = vunpack.c.l.b16 %v3312
    %v3654 = vunpack.c.h.b16 %v3312
    %v3655 = vunpack.c.l.b16 %v3313
    %v3656 = vunpack.c.h.b16 %v3313
    %v3657 = vunpack.c.l.b16 %v3314
    %v3658 = vunpack.c.h.b16 %v3314
    %v3659 = vunpack.c.l.b16 %v3315
    %v3660 = vunpack.c.h.b16 %v3315
    %v3661 = vunpack.c.l.b16 %v3316
    %v3662 = vunpack.c.h.b16 %v3316
    %v3663 = vunpack.c.l.b16 %v3317
    %v3664 = vunpack.c.h.b16 %v3317
    %v3665 = vunpack.c.l.b16 %v3318
    %v3666 = vunpack.c.h.b16 %v3318
    %v3667 = vunpack.c.l.b16 %v3319
    %v3668 = vunpack.c.h.b16 %v3319
    %v3669 = vunpack.c.l.b16 %v3320
    %v3670 = vunpack.c.h.b16 %v3320
    %v3671 = vunpack.c.l.b16 %v3321
    %v3672 = vunpack.c.h.b16 %v3321
    %v3673 = vunpack.c.l.b16 %v3322
    %v3674 = vunpack.c.h.b16 %v3322
    %v3675 = vunpack.c.l.b16 %v3323
    %v3676 = vunpack.c.h.b16 %v3323
    %v3677 = vunpack.c.l.b16 %v3324
    %v3678 = vunpack.c.h.b16 %v3324
    %v3679 = vunpack.c.l.b16 %v3325
    %v3680 = vunpack.c.h.b16 %v3325
    %v3681 = vunpack.c.l.b16 %v3326
    %v3682 = vunpack.c.h.b16 %v3326
    %v3683 = vunpack.c.l.b16 %v3327
    %v3684 = vunpack.c.h.b16 %v3327
    %v3685 = vunpack.c.l.b16 %v3328
    %v3686 = vunpack.c.h.b16 %v3328
    %v3687 = vunpack.c.l.b16 %v3329
    %v3688 = vunpack.c.h.b16 %v3329
    %v3689 = vunpack.c.l.b16 %v3330
    %v3690 = vunpack.c.h.b16 %v3330
    %v3691 = vunpack.c.l.b16 %v3331
    %v3692 = vunpack.c.h.b16 %v3331
    %v3693 = vunpack.c.l.b16 %v3332
    %v3694 = vunpack.c.h.b16 %v3332
    %v3695 = vunpack.c.l.b16 %v3333
    %v3696 = vunpack.c.h.b16 %v3333
    %v3697 = vunpack.c.l.b16 %v3334
    %v3698 = vunpack.c.h.b16 %v3334
    %v3699 = vunpack.c.l.b16 %v3335
    %v3700 = vunpack.c.h.b16 %v3335
    %v3701 = vunpack.c.l.b16 %v3336
    %v3702 = vunpack.c.h.b16 %v3336
    %v3703 = vunpack.c.l.b16 %v3337
    %v3704 = vunpack.c.h.b16 %v3337
    %v3705 = vunpack.c.l.b16 %v3338
    %v3706 = vunpack.c.h.b16 %v3338
    %v3707 = vunpack.c.l.b16 %v3339
    %v3708 = vunpack.c.h.b16 %v3339
    %v3709 = vunpack.c.l.b16 %v3340
    %v3710 = vunpack.c.h.b16 %v3340
    %v3711 = vunpack.c.l.b16 %v3341
    %v3712 = vunpack.c.h.b16 %v3341
    %v3713 = vunpack.c.l.b16 %v3342
    %v3714 = vunpack.c.h.b16 %v3342
    %v3715 = vunpack.c.l.b16 %v3343
    %v3716 = vunpack.c.h.b16 %v3343
    %v3717 = vunpack.c.l.b16 %v3344
    %v3718 = vunpack.c.h.b16 %v3344
    %v3719 = vunpack.c.l.b16 %v3345
    %v3720 = vunpack.c.h.b16 %v3345
    %v3721 = vunpack.c.l.b16 %v3346
    %v3722 = vunpack.c.h.b16 %v3346
    %v3723 = vunpack.c.l.b16 %v3347
    %v3724 = vunpack.c.h.b16 %v3347
    %v3725 = vunpack.c.l.b16 %v3348
    %v3726 = vunpack.c.h.b16 %v3348
    %v3727 = vunpack.c.l.b16 %v3349
    %v3728 = vunpack.c.h.b16 %v3349
    %v3729 = vunpack.c.l.b16 %v3350
    %v3730 = vunpack.c.h.b16 %v3350
    %v3731 = vunpack.c.l.b16 %v3351
    %v3732 = vunpack.c.h.b16 %v3351
    %v3733 = vunpack.c.l.b16 %v3352
    %v3734 = vunpack.c.h.b16 %v3352
    %v3735 = vunpack.c.l.b16 %v3353
    %v3736 = vunpack.c.h.b16 %v3353
    %v3737 = vunpack.c.l.b16 %v3354
    %v3738 = vunpack.c.h.b16 %v3354
    %v3739 = vunpack.c.l.b16 %v3355
    %v3740 = vunpack.c.h.b16 %v3355
    %v3741 = vunpack.c.l.b16 %v3356
    %v3742 = vunpack.c.h.b16 %v3356
    %v3743 = vunpack.c.l.b16 %v3357
    %v3744 = vunpack.c.h.b16 %v3357
    %v3745 = vunpack.c.l.b16 %v3358
    %v3746 = vunpack.c.h.b16 %v3358
    %v3747 = vunpack.c.l.b16 %v3359
    %v3748 = vunpack.c.h.b16 %v3359
    %v3749 = vunpack.c.l.b16 %v3360
    %v3750 = vunpack.c.h.b16 %v3360
    %v3751 = vunpack.c.l.b16 %v3361
    %v3752 = vunpack.c.h.b16 %v3361
    %v3753 = vunpack.c.l.b16 %v3362
    %v3754 = vunpack.c.h.b16 %v3362
    %v3755 = vunpack.c.l.b16 %v3363
    %v3756 = vunpack.c.h.b16 %v3363
    %v3757 = vunpack.c.l.b16 %v3364
    %v3758 = vunpack.c.h.b16 %v3364
    %v3759 = vunpack.c.l.b16 %v3365
    %v3760 = vunpack.c.h.b16 %v3365
    %v3761 = vpack.c.b16 %v3509, %v3505
    %v3762 = vpack.c.b16 %v3510, %v3506
    %v3763 = vpack.c.b16 %v3511, %v3507
    %v3764 = vpack.c.b16 %v3512, %v3508
    %v3765 = vpack.c.b16 %v3517, %v3513
    %v3766 = vpack.c.b16 %v3518, %v3514
    %v3767 = vpack.c.b16 %v3519, %v3515
    %v3768 = vpack.c.b16 %v3520, %v3516
    %v3769 = vpack.c.b16 %v3525, %v3521
    %v3770 = vpack.c.b16 %v3526, %v3522
    %v3771 = vpack.c.b16 %v3527, %v3523
    %v3772 = vpack.c.b16 %v3528, %v3524
    %v3773 = vpack.c.b16 %v3533, %v3529
    %v3774 = vpack.c.b16 %v3534, %v3530
    %v3775 = vpack.c.b16 %v3535, %v3531
    %v3776 = vpack.c.b16 %v3536, %v3532
    %v3777 = vpack.c.b16 %v3541, %v3537
    %v3778 = vpack.c.b16 %v3542, %v3538
    %v3779 = vpack.c.b16 %v3543, %v3539
    %v3780 = vpack.c.b16 %v3544, %v3540
    %v3781 = vpack.c.b16 %v3549, %v3545
    %v3782 = vpack.c.b16 %v3550, %v3546
    %v3783 = vpack.c.b16 %v3551, %v3547
    %v3784 = vpack.c.b16 %v3552, %v3548
    %v3785 = vpack.c.b16 %v3557, %v3553
    %v3786 = vpack.c.b16 %v3558, %v3554
    %v3787 = vpack.c.b16 %v3559, %v3555
    %v3788 = vpack.c.b16 %v3560, %v3556
    %v3789 = vpack.c.b16 %v3565, %v3561
    %v3790 = vpack.c.b16 %v3566, %v3562
    %v3791 = vpack.c.b16 %v3567, %v3563
    %v3792 = vpack.c.b16 %v3568, %v3564
    %v3793 = vpack.c.b16 %v3573, %v3569
    %v3794 = vpack.c.b16 %v3574, %v3570
    %v3795 = vpack.c.b16 %v3575, %v3571
    %v3796 = vpack.c.b16 %v3576, %v3572
    %v3797 = vpack.c.b16 %v3581, %v3577
    %v3798 = vpack.c.b16 %v3582, %v3578
    %v3799 = vpack.c.b16 %v3583, %v3579
    %v3800 = vpack.c.b16 %v3584, %v3580
    %v3801 = vpack.c.b16 %v3589, %v3585
    %v3802 = vpack.c.b16 %v3590, %v3586
    %v3803 = vpack.c.b16 %v3591, %v3587
    %v3804 = vpack.c.b16 %v3592, %v3588
    %v3805 = vpack.c.b16 %v3597, %v3593
    %v3806 = vpack.c.b16 %v3598, %v3594
    %v3807 = vpack.c.b16 %v3599, %v3595
    %v3808 = vpack.c.b16 %v3600, %v3596
    %v3809 = vpack.c.b16 %v3605, %v3601
    %v3810 = vpack.c.b16 %v3606, %v3602
    %v3811 = vpack.c.b16 %v3607, %v3603
    %v3812 = vpack.c.b16 %v3608, %v3604
    %v3813 = vpack.c.b16 %v3613, %v3609
    %v3814 = vpack.c.b16 %v3614, %v3610
    %v3815 = vpack.c.b16 %v3615, %v3611
    %v3816 = vpack.c.b16 %v3616, %v3612
    %v3817 = vpack.c.b16 %v3621, %v3617
    %v3818 = vpack.c.b16 %v3622, %v3618
    %v3819 = vpack.c.b16 %v3623, %v3619
    %v3820 = vpack.c.b16 %v3624, %v3620
    %v3821 = vpack.c.b16 %v3629, %v3625
    %v3822 = vpack.c.b16 %v3630, %v3626
    %v3823 = vpack.c.b16 %v3631, %v3627
    %v3824 = vpack.c.b16 %v3632, %v3628
    %v3825 = vpack.c.b16 %v3637, %v3633
    %v3826 = vpack.c.b16 %v3638, %v3634
    %v3827 = vpack.c.b16 %v3639, %v3635
    %v3828 = vpack.c.b16 %v3640, %v3636
    %v3829 = vpack.c.b16 %v3645, %v3641
    %v3830 = vpack.c.b16 %v3646, %v3642
    %v3831 = vpack.c.b16 %v3647, %v3643
    %v3832 = vpack.c.b16 %v3648, %v3644
    %v3833 = vpack.c.b16 %v3653, %v3649
    %v3834 = vpack.c.b16 %v3654, %v3650
    %v3835 = vpack.c.b16 %v3655, %v3651
    %v3836 = vpack.c.b16 %v3656, %v3652
    %v3837 = vpack.c.b16 %v3661, %v3657
    %v3838 = vpack.c.b16 %v3662, %v3658
    %v3839 = vpack.c.b16 %v3663, %v3659
    %v3840 = vpack.c.b16 %v3664, %v3660
    %v3841 = vpack.c.b16 %v3669, %v3665
    %v3842 = vpack.c.b16 %v3670, %v3666
    %v3843 = vpack.c.b16 %v3671, %v3667
    %v3844 = vpack.c.b16 %v3672, %v3668
    %v3845 = vpack.c.b16 %v3677, %v3673
    %v3846 = vpack.c.b16 %v3678, %v3674
    %v3847 = vpack.c.b16 %v3679, %v3675
    %v3848 = vpack.c.b16 %v3680, %v3676
    %v3849 = vpack.c.b16 %v3685, %v3681
    %v3850 = vpack.c.b16 %v3686, %v3682
    %v3851 = vpack.c.b16 %v3687, %v3683
    %v3852 = vpack.c.b16 %v3688, %v3684
    %v3853 = vpack.c.b16 %v3693, %v3689
    %v3854 = vpack.c.b16 %v3694, %v3690
    %v3855 = vpack.c.b16 %v3695, %v3691
    %v3856 = vpack.c.b16 %v3696, %v3692
    %v3857 = vpack.c.b16 %v3701, %v3697
    %v3858 = vpack.c.b16 %v3702, %v3698
    %v3859 = vpack.c.b16 %v3703, %v3699
    %v3860 = vpack.c.b16 %v3704, %v3700
    %v3861 = vpack.c.b16 %v3709, %v3705
    %v3862 = vpack.c.b16 %v3710, %v3706
    %v3863 = vpack.c.b16 %v3711, %v3707
    %v3864 = vpack.c.b16 %v3712, %v3708
    %v3865 = vpack.c.b16 %v3717, %v3713
    %v3866 = vpack.c.b16 %v3718, %v3714
    %v3867 = vpack.c.b16 %v3719, %v3715
    %v3868 = vpack.c.b16 %v3720, %v3716
    %v3869 = vpack.c.b16 %v3725, %v3721
    %v3870 = vpack.c.b16 %v3726, %v3722
    %v3871 = vpack.c.b16 %v3727, %v3723
    %v3872 = vpack.c.b16 %v3728, %v3724
    %v3873 = vpack.c.b16 %v3733, %v3729
    %v3874 = vpack.c.b16 %v3734, %v3730
    %v3875 = vpack.c.b16 %v3735, %v3731
    %v3876 = vpack.c.b16 %v3736, %v3732
    %v3877 = vpack.c.b16 %v3741, %v3737
    %v3878 = vpack.c.b16 %v3742, %v3738
    %v3879 = vpack.c.b16 %v3743, %v3739
    %v3880 = vpack.c.b16 %v3744, %v3740
    %v3881 = vpack.c.b16 %v3749, %v3745
    %v3882 = vpack.c.b16 %v3750, %v3746
    %v3883 = vpack.c.b16 %v3751, %v3747
    %v3884 = vpack.c.b16 %v3752, %v3748
    %v3885 = vpack.c.b16 %v3757, %v3753
    %v3886 = vpack.c.b16 %v3758, %v3754
    %v3887 = vpack.c.b16 %v3759, %v3755
    %v3888 = vpack.c.b16 %v3760, %v3756
    %4017 = vmatpush.bf16.msra.mxu0 %v3789
    %4018 = vmatpush.bf16.msra.mxu0 %v3785
    %4019 = vmatpush.bf16.msra.mxu0 %v3781
    %4020 = vmatpush.bf16.msra.mxu0 %v3777
    %4021 = vmatpush.bf16.msra.mxu0 %v3773
    %4022 = vmatpush.bf16.msra.mxu0 %v3769
    %4023 = vmatpush.bf16.msra.mxu0 %v3765
    %4024 = vmatpush.bf16.msra.mxu0 %v3761
    %4025 = vmatmul.bf16.gmra.mxu0 %v3233
    %v4026 = vpop.f32.mrf.mxu0
    %v4027 = vadd.f32 %v3369, %v4026
    %v4028 = vpop.f32.mrf.mxu0
    %4029 = vdwg.mxu0
    %4030 = vmatpush.bf16.msra.mxu0 %v3821
    %4031 = vmatpush.bf16.msra.mxu0 %v3817
    %4032 = vmatpush.bf16.msra.mxu0 %v3813
    %4033 = vmatpush.bf16.msra.mxu0 %v3809
    %4034 = vmatpush.bf16.msra.mxu0 %v3805
    %4035 = vmatpush.bf16.msra.mxu0 %v3801
    %4036 = vmatpush.bf16.msra.mxu0 %v3797
    %4037 = vmatpush.bf16.msra.mxu0 %v3793
    %4038 = vmatmul.bf16.gmra.mxu0 %v3234
    %v4039 = vpop.f32.mrf.mxu0
    %v4040 = vadd.f32 %v4027, %v4039
    %v4041 = vpop.f32.mrf.mxu0
    %4042 = vdwg.mxu0
    %4043 = vmatpush.bf16.msra.mxu0 %v3853
    %4044 = vmatpush.bf16.msra.mxu0 %v3849
    %4045 = vmatpush.bf16.msra.mxu0 %v3845
    %4046 = vmatpush.bf16.msra.mxu0 %v3841
    %4047 = vmatpush.bf16.msra.mxu0 %v3837
    %4048 = vmatpush.bf16.msra.mxu0 %v3833
    %4049 = vmatpush.bf16.msra.mxu0 %v3829
    %4050 = vmatpush.bf16.msra.mxu0 %v3825
    %4051 = vmatmul.bf16.gmra.mxu0 %v3235
    %v4052 = vpop.f32.mrf.mxu0
    %v4053 = vadd.f32 %v4040, %v4052
    %v4054 = vpop.f32.mrf.mxu0
    %4055 = vdwg.mxu0
    %4056 = vmatpush.bf16.msra.mxu0 %v3885
    %4057 = vmatpush.bf16.msra.mxu0 %v3881
    %4058 = vmatpush.bf16.msra.mxu0 %v3877
    %4059 = vmatpush.bf16.msra.mxu0 %v3873
    %4060 = vmatpush.bf16.msra.mxu0 %v3869
    %4061 = vmatpush.bf16.msra.mxu0 %v3865
    %4062 = vmatpush.bf16.msra.mxu0 %v3861
    %4063 = vmatpush.bf16.msra.mxu0 %v3857
    %4064 = vmatmul.bf16.gmra.mxu0 %v3236
    %v4065 = vpop.f32.mrf.mxu0
    %v4066 = vadd.f32 %v4053, %v4065
    %v4067 = vpop.f32.mrf.mxu0
    %4068 = vdwg.mxu0
    %4069 = vmatpush.bf16.msra.mxu0 %v3790
    %4070 = vmatpush.bf16.msra.mxu0 %v3786
    %4071 = vmatpush.bf16.msra.mxu0 %v3782
    %4072 = vmatpush.bf16.msra.mxu0 %v3778
    %4073 = vmatpush.bf16.msra.mxu0 %v3774
    %4074 = vmatpush.bf16.msra.mxu0 %v3770
    %4075 = vmatpush.bf16.msra.mxu0 %v3766
    %4076 = vmatpush.bf16.msra.mxu0 %v3762
    %4077 = vmatmul.bf16.gmra.mxu0 %v3233
    %v4078 = vpop.f32.mrf.mxu0
    %v4079 = vadd.f32 %v3370, %v4078
    %v4080 = vpop.f32.mrf.mxu0
    %4081 = vdwg.mxu0
    %4082 = vmatpush.bf16.msra.mxu0 %v3822
    %4083 = vmatpush.bf16.msra.mxu0 %v3818
    %4084 = vmatpush.bf16.msra.mxu0 %v3814
    %4085 = vmatpush.bf16.msra.mxu0 %v3810
    %4086 = vmatpush.bf16.msra.mxu0 %v3806
    %4087 = vmatpush.bf16.msra.mxu0 %v3802
    %4088 = vmatpush.bf16.msra.mxu0 %v3798
    %4089 = vmatpush.bf16.msra.mxu0 %v3794
    %4090 = vmatmul.bf16.gmra.mxu0 %v3234
    %v4091 = vpop.f32.mrf.mxu0
    %v4092 = vadd.f32 %v4079, %v4091
    %v4093 = vpop.f32.mrf.mxu0
    %4094 = vdwg.mxu0
    %4095 = vmatpush.bf16.msra.mxu0 %v3854
    %4096 = vmatpush.bf16.msra.mxu0 %v3850
    %4097 = vmatpush.bf16.msra.mxu0 %v3846
    %4098 = vmatpush.bf16.msra.mxu0 %v3842
    %4099 = vmatpush.bf16.msra.mxu0 %v3838
    %4100 = vmatpush.bf16.msra.mxu0 %v3834
    %4101 = vmatpush.bf16.msra.mxu0 %v3830
    %4102 = vmatpush.bf16.msra.mxu0 %v3826
    %4103 = vmatmul.bf16.gmra.mxu0 %v3235
    %v4104 = vpop.f32.mrf.mxu0
    %v4105 = vadd.f32 %v4092, %v4104
    %v4106 = vpop.f32.mrf.mxu0
    %4107 = vdwg.mxu0
    %4108 = vmatpush.bf16.msra.mxu0 %v3886
    %4109 = vmatpush.bf16.msra.mxu0 %v3882
    %4110 = vmatpush.bf16.msra.mxu0 %v3878
    %4111 = vmatpush.bf16.msra.mxu0 %v3874
    %4112 = vmatpush.bf16.msra.mxu0 %v3870
    %4113 = vmatpush.bf16.msra.mxu0 %v3866
    %4114 = vmatpush.bf16.msra.mxu0 %v3862
    %4115 = vmatpush.bf16.msra.mxu0 %v3858
    %4116 = vmatmul.bf16.gmra.mxu0 %v3236
    %v4117 = vpop.f32.mrf.mxu0
    %v4118 = vadd.f32 %v4105, %v4117
    %v4119 = vpop.f32.mrf.mxu0
    %4120 = vdwg.mxu0
    %4121 = vmatpush.bf16.msra.mxu0 %v3791
    %4122 = vmatpush.bf16.msra.mxu0 %v3787
    %4123 = vmatpush.bf16.msra.mxu0 %v3783
    %4124 = vmatpush.bf16.msra.mxu0 %v3779
    %4125 = vmatpush.bf16.msra.mxu0 %v3775
    %4126 = vmatpush.bf16.msra.mxu0 %v3771
    %4127 = vmatpush.bf16.msra.mxu0 %v3767
    %4128 = vmatpush.bf16.msra.mxu0 %v3763
    %4129 = vmatmul.bf16.gmra.mxu0 %v3233
    %v4130 = vpop.f32.mrf.mxu0
    %v4131 = vadd.f32 %v3371, %v4130
    %v4132 = vpop.f32.mrf.mxu0
    %4133 = vdwg.mxu0
    %4134 = vmatpush.bf16.msra.mxu0 %v3823
    %4135 = vmatpush.bf16.msra.mxu0 %v3819
    %4136 = vmatpush.bf16.msra.mxu0 %v3815
    %4137 = vmatpush.bf16.msra.mxu0 %v3811
    %4138 = vmatpush.bf16.msra.mxu0 %v3807
    %4139 = vmatpush.bf16.msra.mxu0 %v3803
    %4140 = vmatpush.bf16.msra.mxu0 %v3799
    %4141 = vmatpush.bf16.msra.mxu0 %v3795
    %4142 = vmatmul.bf16.gmra.mxu0 %v3234
    %v4143 = vpop.f32.mrf.mxu0
    %v4144 = vadd.f32 %v4131, %v4143
    %v4145 = vpop.f32.mrf.mxu0
    %4146 = vdwg.mxu0
    %4147 = vmatpush.bf16.msra.mxu0 %v3855
    %4148 = vmatpush.bf16.msra.mxu0 %v3851
    %4149 = vmatpush.bf16.msra.mxu0 %v3847
    %4150 = vmatpush.bf16.msra.mxu0 %v3843
    %4151 = vmatpush.bf16.msra.mxu0 %v3839
    %4152 = vmatpush.bf16.msra.mxu0 %v3835
    %4153 = vmatpush.bf16.msra.mxu0 %v3831
    %4154 = vmatpush.bf16.msra.mxu0 %v3827
    %4155 = vmatmul.bf16.gmra.mxu0 %v3235
    %v4156 = vpop.f32.mrf.mxu0
    %v4157 = vadd.f32 %v4144, %v4156
    %v4158 = vpop.f32.mrf.mxu0
    %4159 = vdwg.mxu0
    %4160 = vmatpush.bf16.msra.mxu0 %v3887
    %4161 = vmatpush.bf16.msra.mxu0 %v3883
    %4162 = vmatpush.bf16.msra.mxu0 %v3879
    %4163 = vmatpush.bf16.msra.mxu0 %v3875
    %4164 = vmatpush.bf16.msra.mxu0 %v3871
    %4165 = vmatpush.bf16.msra.mxu0 %v3867
    %4166 = vmatpush.bf16.msra.mxu0 %v3863
    %4167 = vmatpush.bf16.msra.mxu0 %v3859
    %4168 = vmatmul.bf16.gmra.mxu0 %v3236
    %v4169 = vpop.f32.mrf.mxu0
    %v4170 = vadd.f32 %v4157, %v4169
    %v4171 = vpop.f32.mrf.mxu0
    %4172 = vdwg.mxu0
    %4173 = vmatpush.bf16.msra.mxu0 %v3792
    %4174 = vmatpush.bf16.msra.mxu0 %v3788
    %4175 = vmatpush.bf16.msra.mxu0 %v3784
    %4176 = vmatpush.bf16.msra.mxu0 %v3780
    %4177 = vmatpush.bf16.msra.mxu0 %v3776
    %4178 = vmatpush.bf16.msra.mxu0 %v3772
    %4179 = vmatpush.bf16.msra.mxu0 %v3768
    %4180 = vmatpush.bf16.msra.mxu0 %v3764
    %4181 = vmatmul.bf16.gmra.mxu0 %v3233
    %v4182 = vpop.f32.mrf.mxu0
    %v4183 = vadd.f32 %v3372, %v4182
    %v4184 = vpop.f32.mrf.mxu0
    %4185 = vdwg.mxu0
    %4186 = vmatpush.bf16.msra.mxu0 %v3824
    %4187 = vmatpush.bf16.msra.mxu0 %v3820
    %4188 = vmatpush.bf16.msra.mxu0 %v3816
    %4189 = vmatpush.bf16.msra.mxu0 %v3812
    %4190 = vmatpush.bf16.msra.mxu0 %v3808
    %4191 = vmatpush.bf16.msra.mxu0 %v3804
    %4192 = vmatpush.bf16.msra.mxu0 %v3800
    %4193 = vmatpush.bf16.msra.mxu0 %v3796
    %4194 = vmatmul.bf16.gmra.mxu0 %v3234
    %v4195 = vpop.f32.mrf.mxu0
    %v4196 = vadd.f32 %v4183, %v4195
    %v4197 = vpop.f32.mrf.mxu0
    %4198 = vdwg.mxu0
    %4199 = vmatpush.bf16.msra.mxu0 %v3856
    %4200 = vmatpush.bf16.msra.mxu0 %v3852
    %4201 = vmatpush.bf16.msra.mxu0 %v3848
    %4202 = vmatpush.bf16.msra.mxu0 %v3844
    %4203 = vmatpush.bf16.msra.mxu0 %v3840
    %4204 = vmatpush.bf16.msra.mxu0 %v3836
    %4205 = vmatpush.bf16.msra.mxu0 %v3832
    %4206 = vmatpush.bf16.msra.mxu0 %v3828
    %4207 = vmatmul.bf16.gmra.mxu0 %v3235
    %v4208 = vpop.f32.mrf.mxu0
    %v4209 = vadd.f32 %v4196, %v4208
    %v4210 = vpop.f32.mrf.mxu0
    %4211 = vdwg.mxu0
    %4212 = vmatpush.bf16.msra.mxu0 %v3888
    %4213 = vmatpush.bf16.msra.mxu0 %v3884
    %4214 = vmatpush.bf16.msra.mxu0 %v3880
    %4215 = vmatpush.bf16.msra.mxu0 %v3876
    %4216 = vmatpush.bf16.msra.mxu0 %v3872
    %4217 = vmatpush.bf16.msra.mxu0 %v3868
    %4218 = vmatpush.bf16.msra.mxu0 %v3864
    %4219 = vmatpush.bf16.msra.mxu0 %v3860
    %4220 = vmatmul.bf16.gmra.mxu0 %v3236
    %v4221 = vpop.f32.mrf.mxu0
    %v4222 = vadd.f32 %v4209, %v4221
    %v4223 = vpop.f32.mrf.mxu0
    %4224 = vdwg.mxu0
    %v4225 = vpack.c.bf16 %v4066, %v4066
    %v4226 = vpack.c.bf16 %v4118, %v4118
    %v4227 = vpack.c.bf16 %v4170, %v4170
    %v4228 = vpack.c.bf16 %v4222, %v4222
    %v4229 = vunpack.c.l.bf16 %v4225
    %v4230 = vunpack.c.l.bf16 %v4226
    %v4231 = vunpack.c.l.bf16 %v4227
    %v4232 = vunpack.c.l.bf16 %v4228
    %v4233 = vtanh.pop %v4229
    %v4234 = vtanh.pop %v4230
    %v4235 = vtanh.pop %v4231
    %v4236 = vtanh.pop %v4232
    %v4237 = vpack.c.bf16 %v4233, %v4233
    %v4238 = vpack.c.bf16 %v4234, %v4234
    %v4239 = vpack.c.bf16 %v4235, %v4235
    %v4240 = vpack.c.bf16 %v4236, %v4236
    %s4241 = scalar_lea.vmem [#allocation7], 4096
    %v4242 = vld [vmem:[%s4241] sm:$0xff]
    %v4243 = vld [vmem:[%s4241 + $0x8] sm:$0xff]
    %v4244 = vld [vmem:[%s4241 + $0x10] sm:$0xff]
    %v4245 = vld [vmem:[%s4241 + $0x18] sm:$0xff]
    %v4246 = vld [vmem:[%s4241 + $0x20] sm:$0xff]
    %v4247 = vld [vmem:[%s4241 + $0x28] sm:$0xff]
    %v4248 = vld [vmem:[%s4241 + $0x30] sm:$0xff]
    %v4249 = vld [vmem:[%s4241 + $0x38] sm:$0xff]
    %v4250 = vld [vmem:[%s4241 + $0x40] sm:$0xff]
    %v4251 = vld [vmem:[%s4241 + $0x48] sm:$0xff]
    %v4252 = vld [vmem:[%s4241 + $0x50] sm:$0xff]
    %v4253 = vld [vmem:[%s4241 + $0x58] sm:$0xff]
    %v4254 = vld [vmem:[%s4241 + $0x60] sm:$0xff]
    %v4255 = vld [vmem:[%s4241 + $0x68] sm:$0xff]
    %v4256 = vld [vmem:[%s4241 + $0x70] sm:$0xff]
    %v4257 = vld [vmem:[%s4241 + $0x78] sm:$0xff]
    %v4258 = vld [vmem:[%s4241 + $0x80] sm:$0xff]
    %v4259 = vld [vmem:[%s4241 + $0x88] sm:$0xff]
    %v4260 = vld [vmem:[%s4241 + $0x90] sm:$0xff]
    %v4261 = vld [vmem:[%s4241 + $0x98] sm:$0xff]
    %v4262 = vld [vmem:[%s4241 + $0xa0] sm:$0xff]
    %v4263 = vld [vmem:[%s4241 + $0xa8] sm:$0xff]
    %v4264 = vld [vmem:[%s4241 + $0xb0] sm:$0xff]
    %v4265 = vld [vmem:[%s4241 + $0xb8] sm:$0xff]
    %v4266 = vld [vmem:[%s4241 + $0xc0] sm:$0xff]
    %v4267 = vld [vmem:[%s4241 + $0xc8] sm:$0xff]
    %v4268 = vld [vmem:[%s4241 + $0xd0] sm:$0xff]
    %v4269 = vld [vmem:[%s4241 + $0xd8] sm:$0xff]
    %v4270 = vld [vmem:[%s4241 + $0xe0] sm:$0xff]
    %v4271 = vld [vmem:[%s4241 + $0xe8] sm:$0xff]
    %v4272 = vld [vmem:[%s4241 + $0xf0] sm:$0xff]
    %v4273 = vld [vmem:[%s4241 + $0xf8] sm:$0xff]
    %v4274 = vld [vmem:[%s4241 + $0x100] sm:$0xff]
    %v4275 = vld [vmem:[%s4241 + $0x108] sm:$0xff]
    %v4276 = vld [vmem:[%s4241 + $0x110] sm:$0xff]
    %v4277 = vld [vmem:[%s4241 + $0x118] sm:$0xff]
    %v4278 = vld [vmem:[%s4241 + $0x120] sm:$0xff]
    %v4279 = vld [vmem:[%s4241 + $0x128] sm:$0xff]
    %v4280 = vld [vmem:[%s4241 + $0x130] sm:$0xff]
    %v4281 = vld [vmem:[%s4241 + $0x138] sm:$0xff]
    %v4282 = vld [vmem:[%s4241 + $0x140] sm:$0xff]
    %v4283 = vld [vmem:[%s4241 + $0x148] sm:$0xff]
    %v4284 = vld [vmem:[%s4241 + $0x150] sm:$0xff]
    %v4285 = vld [vmem:[%s4241 + $0x158] sm:$0xff]
    %v4286 = vld [vmem:[%s4241 + $0x160] sm:$0xff]
    %v4287 = vld [vmem:[%s4241 + $0x168] sm:$0xff]
    %v4288 = vld [vmem:[%s4241 + $0x170] sm:$0xff]
    %v4289 = vld [vmem:[%s4241 + $0x178] sm:$0xff]
    %v4290 = vld [vmem:[%s4241 + $0x180] sm:$0xff]
    %v4291 = vld [vmem:[%s4241 + $0x188] sm:$0xff]
    %v4292 = vld [vmem:[%s4241 + $0x190] sm:$0xff]
    %v4293 = vld [vmem:[%s4241 + $0x198] sm:$0xff]
    %v4294 = vld [vmem:[%s4241 + $0x1a0] sm:$0xff]
    %v4295 = vld [vmem:[%s4241 + $0x1a8] sm:$0xff]
    %v4296 = vld [vmem:[%s4241 + $0x1b0] sm:$0xff]
    %v4297 = vld [vmem:[%s4241 + $0x1b8] sm:$0xff]
    %v4298 = vld [vmem:[%s4241 + $0x1c0] sm:$0xff]
    %v4299 = vld [vmem:[%s4241 + $0x1c8] sm:$0xff]
    %v4300 = vld [vmem:[%s4241 + $0x1d0] sm:$0xff]
    %v4301 = vld [vmem:[%s4241 + $0x1d8] sm:$0xff]
    %v4302 = vld [vmem:[%s4241 + $0x1e0] sm:$0xff]
    %v4303 = vld [vmem:[%s4241 + $0x1e8] sm:$0xff]
    %v4304 = vld [vmem:[%s4241 + $0x1f0] sm:$0xff]
    %v4305 = vld [vmem:[%s4241 + $0x1f8] sm:$0xff]
    %v4306 = vld [vmem:[%s4241 + $0x200] sm:$0xff]
    %v4307 = vld [vmem:[%s4241 + $0x208] sm:$0xff]
    %v4308 = vld [vmem:[%s4241 + $0x210] sm:$0xff]
    %v4309 = vld [vmem:[%s4241 + $0x218] sm:$0xff]
    %v4310 = vld [vmem:[%s4241 + $0x220] sm:$0xff]
    %v4311 = vld [vmem:[%s4241 + $0x228] sm:$0xff]
    %v4312 = vld [vmem:[%s4241 + $0x230] sm:$0xff]
    %v4313 = vld [vmem:[%s4241 + $0x238] sm:$0xff]
    %v4314 = vld [vmem:[%s4241 + $0x240] sm:$0xff]
    %v4315 = vld [vmem:[%s4241 + $0x248] sm:$0xff]
    %v4316 = vld [vmem:[%s4241 + $0x250] sm:$0xff]
    %v4317 = vld [vmem:[%s4241 + $0x258] sm:$0xff]
    %v4318 = vld [vmem:[%s4241 + $0x260] sm:$0xff]
    %v4319 = vld [vmem:[%s4241 + $0x268] sm:$0xff]
    %v4320 = vld [vmem:[%s4241 + $0x270] sm:$0xff]
    %v4321 = vld [vmem:[%s4241 + $0x278] sm:$0xff]
    %v4322 = vld [vmem:[%s4241 + $0x280] sm:$0xff]
    %v4323 = vld [vmem:[%s4241 + $0x288] sm:$0xff]
    %v4324 = vld [vmem:[%s4241 + $0x290] sm:$0xff]
    %v4325 = vld [vmem:[%s4241 + $0x298] sm:$0xff]
    %v4326 = vld [vmem:[%s4241 + $0x2a0] sm:$0xff]
    %v4327 = vld [vmem:[%s4241 + $0x2a8] sm:$0xff]
    %v4328 = vld [vmem:[%s4241 + $0x2b0] sm:$0xff]
    %v4329 = vld [vmem:[%s4241 + $0x2b8] sm:$0xff]
    %v4330 = vld [vmem:[%s4241 + $0x2c0] sm:$0xff]
    %v4331 = vld [vmem:[%s4241 + $0x2c8] sm:$0xff]
    %v4332 = vld [vmem:[%s4241 + $0x2d0] sm:$0xff]
    %v4333 = vld [vmem:[%s4241 + $0x2d8] sm:$0xff]
    %v4334 = vld [vmem:[%s4241 + $0x2e0] sm:$0xff]
    %v4335 = vld [vmem:[%s4241 + $0x2e8] sm:$0xff]
    %v4336 = vld [vmem:[%s4241 + $0x2f0] sm:$0xff]
    %v4337 = vld [vmem:[%s4241 + $0x2f8] sm:$0xff]
    %v4338 = vld [vmem:[%s4241 + $0x300] sm:$0xff]
    %v4339 = vld [vmem:[%s4241 + $0x308] sm:$0xff]
    %v4340 = vld [vmem:[%s4241 + $0x310] sm:$0xff]
    %v4341 = vld [vmem:[%s4241 + $0x318] sm:$0xff]
    %v4342 = vld [vmem:[%s4241 + $0x320] sm:$0xff]
    %v4343 = vld [vmem:[%s4241 + $0x328] sm:$0xff]
    %v4344 = vld [vmem:[%s4241 + $0x330] sm:$0xff]
    %v4345 = vld [vmem:[%s4241 + $0x338] sm:$0xff]
    %v4346 = vld [vmem:[%s4241 + $0x340] sm:$0xff]
    %v4347 = vld [vmem:[%s4241 + $0x348] sm:$0xff]
    %v4348 = vld [vmem:[%s4241 + $0x350] sm:$0xff]
    %v4349 = vld [vmem:[%s4241 + $0x358] sm:$0xff]
    %v4350 = vld [vmem:[%s4241 + $0x360] sm:$0xff]
    %v4351 = vld [vmem:[%s4241 + $0x368] sm:$0xff]
    %v4352 = vld [vmem:[%s4241 + $0x370] sm:$0xff]
    %v4353 = vld [vmem:[%s4241 + $0x378] sm:$0xff]
    %v4354 = vld [vmem:[%s4241 + $0x380] sm:$0xff]
    %v4355 = vld [vmem:[%s4241 + $0x388] sm:$0xff]
    %v4356 = vld [vmem:[%s4241 + $0x390] sm:$0xff]
    %v4357 = vld [vmem:[%s4241 + $0x398] sm:$0xff]
    %v4358 = vld [vmem:[%s4241 + $0x3a0] sm:$0xff]
    %v4359 = vld [vmem:[%s4241 + $0x3a8] sm:$0xff]
    %v4360 = vld [vmem:[%s4241 + $0x3b0] sm:$0xff]
    %v4361 = vld [vmem:[%s4241 + $0x3b8] sm:$0xff]
    %v4362 = vld [vmem:[%s4241 + $0x3c0] sm:$0xff]
    %v4363 = vld [vmem:[%s4241 + $0x3c8] sm:$0xff]
    %v4364 = vld [vmem:[%s4241 + $0x3d0] sm:$0xff]
    %v4365 = vld [vmem:[%s4241 + $0x3d8] sm:$0xff]
    %v4366 = vld [vmem:[%s4241 + $0x3e0] sm:$0xff]
    %v4367 = vld [vmem:[%s4241 + $0x3e8] sm:$0xff]
    %v4368 = vld [vmem:[%s4241 + $0x3f0] sm:$0xff]
    %v4369 = vld [vmem:[%s4241 + $0x3f8] sm:$0xff]
    %s4370 = scalar_lea.vmem [#allocation9], 16
    %v4371 = vld [vmem:[%s4370] sm:$0xf]
    %v4373 = vperm.slane %v4371, 0
    %v4374 = vperm.slane %v4371, 1
    %v4375 = vperm.slane %v4371, 2
    %v4376 = vperm.slane %v4371, 3
    %v4509 = vunpack.c.l.b16 %v4242
    %v4510 = vunpack.c.h.b16 %v4242
    %v4511 = vunpack.c.l.b16 %v4243
    %v4512 = vunpack.c.h.b16 %v4243
    %v4513 = vunpack.c.l.b16 %v4244
    %v4514 = vunpack.c.h.b16 %v4244
    %v4515 = vunpack.c.l.b16 %v4245
    %v4516 = vunpack.c.h.b16 %v4245
    %v4517 = vunpack.c.l.b16 %v4246
    %v4518 = vunpack.c.h.b16 %v4246
    %v4519 = vunpack.c.l.b16 %v4247
    %v4520 = vunpack.c.h.b16 %v4247
    %v4521 = vunpack.c.l.b16 %v4248
    %v4522 = vunpack.c.h.b16 %v4248
    %v4523 = vunpack.c.l.b16 %v4249
    %v4524 = vunpack.c.h.b16 %v4249
    %v4525 = vunpack.c.l.b16 %v4250
    %v4526 = vunpack.c.h.b16 %v4250
    %v4527 = vunpack.c.l.b16 %v4251
    %v4528 = vunpack.c.h.b16 %v4251
    %v4529 = vunpack.c.l.b16 %v4252
    %v4530 = vunpack.c.h.b16 %v4252
    %v4531 = vunpack.c.l.b16 %v4253
    %v4532 = vunpack.c.h.b16 %v4253
    %v4533 = vunpack.c.l.b16 %v4254
    %v4534 = vunpack.c.h.b16 %v4254
    %v4535 = vunpack.c.l.b16 %v4255
    %v4536 = vunpack.c.h.b16 %v4255
    %v4537 = vunpack.c.l.b16 %v4256
    %v4538 = vunpack.c.h.b16 %v4256
    %v4539 = vunpack.c.l.b16 %v4257
    %v4540 = vunpack.c.h.b16 %v4257
    %v4541 = vunpack.c.l.b16 %v4258
    %v4542 = vunpack.c.h.b16 %v4258
    %v4543 = vunpack.c.l.b16 %v4259
    %v4544 = vunpack.c.h.b16 %v4259
    %v4545 = vunpack.c.l.b16 %v4260
    %v4546 = vunpack.c.h.b16 %v4260
    %v4547 = vunpack.c.l.b16 %v4261
    %v4548 = vunpack.c.h.b16 %v4261
    %v4549 = vunpack.c.l.b16 %v4262
    %v4550 = vunpack.c.h.b16 %v4262
    %v4551 = vunpack.c.l.b16 %v4263
    %v4552 = vunpack.c.h.b16 %v4263
    %v4553 = vunpack.c.l.b16 %v4264
    %v4554 = vunpack.c.h.b16 %v4264
    %v4555 = vunpack.c.l.b16 %v4265
    %v4556 = vunpack.c.h.b16 %v4265
    %v4557 = vunpack.c.l.b16 %v4266
    %v4558 = vunpack.c.h.b16 %v4266
    %v4559 = vunpack.c.l.b16 %v4267
    %v4560 = vunpack.c.h.b16 %v4267
    %v4561 = vunpack.c.l.b16 %v4268
    %v4562 = vunpack.c.h.b16 %v4268
    %v4563 = vunpack.c.l.b16 %v4269
    %v4564 = vunpack.c.h.b16 %v4269
    %v4565 = vunpack.c.l.b16 %v4270
    %v4566 = vunpack.c.h.b16 %v4270
    %v4567 = vunpack.c.l.b16 %v4271
    %v4568 = vunpack.c.h.b16 %v4271
    %v4569 = vunpack.c.l.b16 %v4272
    %v4570 = vunpack.c.h.b16 %v4272
    %v4571 = vunpack.c.l.b16 %v4273
    %v4572 = vunpack.c.h.b16 %v4273
    %v4573 = vunpack.c.l.b16 %v4274
    %v4574 = vunpack.c.h.b16 %v4274
    %v4575 = vunpack.c.l.b16 %v4275
    %v4576 = vunpack.c.h.b16 %v4275
    %v4577 = vunpack.c.l.b16 %v4276
    %v4578 = vunpack.c.h.b16 %v4276
    %v4579 = vunpack.c.l.b16 %v4277
    %v4580 = vunpack.c.h.b16 %v4277
    %v4581 = vunpack.c.l.b16 %v4278
    %v4582 = vunpack.c.h.b16 %v4278
    %v4583 = vunpack.c.l.b16 %v4279
    %v4584 = vunpack.c.h.b16 %v4279
    %v4585 = vunpack.c.l.b16 %v4280
    %v4586 = vunpack.c.h.b16 %v4280
    %v4587 = vunpack.c.l.b16 %v4281
    %v4588 = vunpack.c.h.b16 %v4281
    %v4589 = vunpack.c.l.b16 %v4282
    %v4590 = vunpack.c.h.b16 %v4282
    %v4591 = vunpack.c.l.b16 %v4283
    %v4592 = vunpack.c.h.b16 %v4283
    %v4593 = vunpack.c.l.b16 %v4284
    %v4594 = vunpack.c.h.b16 %v4284
    %v4595 = vunpack.c.l.b16 %v4285
    %v4596 = vunpack.c.h.b16 %v4285
    %v4597 = vunpack.c.l.b16 %v4286
    %v4598 = vunpack.c.h.b16 %v4286
    %v4599 = vunpack.c.l.b16 %v4287
    %v4600 = vunpack.c.h.b16 %v4287
    %v4601 = vunpack.c.l.b16 %v4288
    %v4602 = vunpack.c.h.b16 %v4288
    %v4603 = vunpack.c.l.b16 %v4289
    %v4604 = vunpack.c.h.b16 %v4289
    %v4605 = vunpack.c.l.b16 %v4290
    %v4606 = vunpack.c.h.b16 %v4290
    %v4607 = vunpack.c.l.b16 %v4291
    %v4608 = vunpack.c.h.b16 %v4291
    %v4609 = vunpack.c.l.b16 %v4292
    %v4610 = vunpack.c.h.b16 %v4292
    %v4611 = vunpack.c.l.b16 %v4293
    %v4612 = vunpack.c.h.b16 %v4293
    %v4613 = vunpack.c.l.b16 %v4294
    %v4614 = vunpack.c.h.b16 %v4294
    %v4615 = vunpack.c.l.b16 %v4295
    %v4616 = vunpack.c.h.b16 %v4295
    %v4617 = vunpack.c.l.b16 %v4296
    %v4618 = vunpack.c.h.b16 %v4296
    %v4619 = vunpack.c.l.b16 %v4297
    %v4620 = vunpack.c.h.b16 %v4297
    %v4621 = vunpack.c.l.b16 %v4298
    %v4622 = vunpack.c.h.b16 %v4298
    %v4623 = vunpack.c.l.b16 %v4299
    %v4624 = vunpack.c.h.b16 %v4299
    %v4625 = vunpack.c.l.b16 %v4300
    %v4626 = vunpack.c.h.b16 %v4300
    %v4627 = vunpack.c.l.b16 %v4301
    %v4628 = vunpack.c.h.b16 %v4301
    %v4629 = vunpack.c.l.b16 %v4302
    %v4630 = vunpack.c.h.b16 %v4302
    %v4631 = vunpack.c.l.b16 %v4303
    %v4632 = vunpack.c.h.b16 %v4303
    %v4633 = vunpack.c.l.b16 %v4304
    %v4634 = vunpack.c.h.b16 %v4304
    %v4635 = vunpack.c.l.b16 %v4305
    %v4636 = vunpack.c.h.b16 %v4305
    %v4637 = vunpack.c.l.b16 %v4306
    %v4638 = vunpack.c.h.b16 %v4306
    %v4639 = vunpack.c.l.b16 %v4307
    %v4640 = vunpack.c.h.b16 %v4307
    %v4641 = vunpack.c.l.b16 %v4308
    %v4642 = vunpack.c.h.b16 %v4308
    %v4643 = vunpack.c.l.b16 %v4309
    %v4644 = vunpack.c.h.b16 %v4309
    %v4645 = vunpack.c.l.b16 %v4310
    %v4646 = vunpack.c.h.b16 %v4310
    %v4647 = vunpack.c.l.b16 %v4311
    %v4648 = vunpack.c.h.b16 %v4311
    %v4649 = vunpack.c.l.b16 %v4312
    %v4650 = vunpack.c.h.b16 %v4312
    %v4651 = vunpack.c.l.b16 %v4313
    %v4652 = vunpack.c.h.b16 %v4313
    %v4653 = vunpack.c.l.b16 %v4314
    %v4654 = vunpack.c.h.b16 %v4314
    %v4655 = vunpack.c.l.b16 %v4315
    %v4656 = vunpack.c.h.b16 %v4315
    %v4657 = vunpack.c.l.b16 %v4316
    %v4658 = vunpack.c.h.b16 %v4316
    %v4659 = vunpack.c.l.b16 %v4317
    %v4660 = vunpack.c.h.b16 %v4317
    %v4661 = vunpack.c.l.b16 %v4318
    %v4662 = vunpack.c.h.b16 %v4318
    %v4663 = vunpack.c.l.b16 %v4319
    %v4664 = vunpack.c.h.b16 %v4319
    %v4665 = vunpack.c.l.b16 %v4320
    %v4666 = vunpack.c.h.b16 %v4320
    %v4667 = vunpack.c.l.b16 %v4321
    %v4668 = vunpack.c.h.b16 %v4321
    %v4669 = vunpack.c.l.b16 %v4322
    %v4670 = vunpack.c.h.b16 %v4322
    %v4671 = vunpack.c.l.b16 %v4323
    %v4672 = vunpack.c.h.b16 %v4323
    %v4673 = vunpack.c.l.b16 %v4324
    %v4674 = vunpack.c.h.b16 %v4324
    %v4675 = vunpack.c.l.b16 %v4325
    %v4676 = vunpack.c.h.b16 %v4325
    %v4677 = vunpack.c.l.b16 %v4326
    %v4678 = vunpack.c.h.b16 %v4326
    %v4679 = vunpack.c.l.b16 %v4327
    %v4680 = vunpack.c.h.b16 %v4327
    %v4681 = vunpack.c.l.b16 %v4328
    %v4682 = vunpack.c.h.b16 %v4328
    %v4683 = vunpack.c.l.b16 %v4329
    %v4684 = vunpack.c.h.b16 %v4329
    %v4685 = vunpack.c.l.b16 %v4330
    %v4686 = vunpack.c.h.b16 %v4330
    %v4687 = vunpack.c.l.b16 %v4331
    %v4688 = vunpack.c.h.b16 %v4331
    %v4689 = vunpack.c.l.b16 %v4332
    %v4690 = vunpack.c.h.b16 %v4332
    %v4691 = vunpack.c.l.b16 %v4333
    %v4692 = vunpack.c.h.b16 %v4333
    %v4693 = vunpack.c.l.b16 %v4334
    %v4694 = vunpack.c.h.b16 %v4334
    %v4695 = vunpack.c.l.b16 %v4335
    %v4696 = vunpack.c.h.b16 %v4335
    %v4697 = vunpack.c.l.b16 %v4336
    %v4698 = vunpack.c.h.b16 %v4336
    %v4699 = vunpack.c.l.b16 %v4337
    %v4700 = vunpack.c.h.b16 %v4337
    %v4701 = vunpack.c.l.b16 %v4338
    %v4702 = vunpack.c.h.b16 %v4338
    %v4703 = vunpack.c.l.b16 %v4339
    %v4704 = vunpack.c.h.b16 %v4339
    %v4705 = vunpack.c.l.b16 %v4340
    %v4706 = vunpack.c.h.b16 %v4340
    %v4707 = vunpack.c.l.b16 %v4341
    %v4708 = vunpack.c.h.b16 %v4341
    %v4709 = vunpack.c.l.b16 %v4342
    %v4710 = vunpack.c.h.b16 %v4342
    %v4711 = vunpack.c.l.b16 %v4343
    %v4712 = vunpack.c.h.b16 %v4343
    %v4713 = vunpack.c.l.b16 %v4344
    %v4714 = vunpack.c.h.b16 %v4344
    %v4715 = vunpack.c.l.b16 %v4345
    %v4716 = vunpack.c.h.b16 %v4345
    %v4717 = vunpack.c.l.b16 %v4346
    %v4718 = vunpack.c.h.b16 %v4346
    %v4719 = vunpack.c.l.b16 %v4347
    %v4720 = vunpack.c.h.b16 %v4347
    %v4721 = vunpack.c.l.b16 %v4348
    %v4722 = vunpack.c.h.b16 %v4348
    %v4723 = vunpack.c.l.b16 %v4349
    %v4724 = vunpack.c.h.b16 %v4349
    %v4725 = vunpack.c.l.b16 %v4350
    %v4726 = vunpack.c.h.b16 %v4350
    %v4727 = vunpack.c.l.b16 %v4351
    %v4728 = vunpack.c.h.b16 %v4351
    %v4729 = vunpack.c.l.b16 %v4352
    %v4730 = vunpack.c.h.b16 %v4352
    %v4731 = vunpack.c.l.b16 %v4353
    %v4732 = vunpack.c.h.b16 %v4353
    %v4733 = vunpack.c.l.b16 %v4354
    %v4734 = vunpack.c.h.b16 %v4354
    %v4735 = vunpack.c.l.b16 %v4355
    %v4736 = vunpack.c.h.b16 %v4355
    %v4737 = vunpack.c.l.b16 %v4356
    %v4738 = vunpack.c.h.b16 %v4356
    %v4739 = vunpack.c.l.b16 %v4357
    %v4740 = vunpack.c.h.b16 %v4357
    %v4741 = vunpack.c.l.b16 %v4358
    %v4742 = vunpack.c.h.b16 %v4358
    %v4743 = vunpack.c.l.b16 %v4359
    %v4744 = vunpack.c.h.b16 %v4359
    %v4745 = vunpack.c.l.b16 %v4360
    %v4746 = vunpack.c.h.b16 %v4360
    %v4747 = vunpack.c.l.b16 %v4361
    %v4748 = vunpack.c.h.b16 %v4361
    %v4749 = vunpack.c.l.b16 %v4362
    %v4750 = vunpack.c.h.b16 %v4362
    %v4751 = vunpack.c.l.b16 %v4363
    %v4752 = vunpack.c.h.b16 %v4363
    %v4753 = vunpack.c.l.b16 %v4364
    %v4754 = vunpack.c.h.b16 %v4364
    %v4755 = vunpack.c.l.b16 %v4365
    %v4756 = vunpack.c.h.b16 %v4365
    %v4757 = vunpack.c.l.b16 %v4366
    %v4758 = vunpack.c.h.b16 %v4366
    %v4759 = vunpack.c.l.b16 %v4367
    %v4760 = vunpack.c.h.b16 %v4367
    %v4761 = vunpack.c.l.b16 %v4368
    %v4762 = vunpack.c.h.b16 %v4368
    %v4763 = vunpack.c.l.b16 %v4369
    %v4764 = vunpack.c.h.b16 %v4369
    %v4765 = vpack.c.b16 %v4513, %v4509
    %v4766 = vpack.c.b16 %v4514, %v4510
    %v4767 = vpack.c.b16 %v4515, %v4511
    %v4768 = vpack.c.b16 %v4516, %v4512
    %v4769 = vpack.c.b16 %v4521, %v4517
    %v4770 = vpack.c.b16 %v4522, %v4518
    %v4771 = vpack.c.b16 %v4523, %v4519
    %v4772 = vpack.c.b16 %v4524, %v4520
    %v4773 = vpack.c.b16 %v4529, %v4525
    %v4774 = vpack.c.b16 %v4530, %v4526
    %v4775 = vpack.c.b16 %v4531, %v4527
    %v4776 = vpack.c.b16 %v4532, %v4528
    %v4777 = vpack.c.b16 %v4537, %v4533
    %v4778 = vpack.c.b16 %v4538, %v4534
    %v4779 = vpack.c.b16 %v4539, %v4535
    %v4780 = vpack.c.b16 %v4540, %v4536
    %v4781 = vpack.c.b16 %v4545, %v4541
    %v4782 = vpack.c.b16 %v4546, %v4542
    %v4783 = vpack.c.b16 %v4547, %v4543
    %v4784 = vpack.c.b16 %v4548, %v4544
    %v4785 = vpack.c.b16 %v4553, %v4549
    %v4786 = vpack.c.b16 %v4554, %v4550
    %v4787 = vpack.c.b16 %v4555, %v4551
    %v4788 = vpack.c.b16 %v4556, %v4552
    %v4789 = vpack.c.b16 %v4561, %v4557
    %v4790 = vpack.c.b16 %v4562, %v4558
    %v4791 = vpack.c.b16 %v4563, %v4559
    %v4792 = vpack.c.b16 %v4564, %v4560
    %v4793 = vpack.c.b16 %v4569, %v4565
    %v4794 = vpack.c.b16 %v4570, %v4566
    %v4795 = vpack.c.b16 %v4571, %v4567
    %v4796 = vpack.c.b16 %v4572, %v4568
    %v4797 = vpack.c.b16 %v4577, %v4573
    %v4798 = vpack.c.b16 %v4578, %v4574
    %v4799 = vpack.c.b16 %v4579, %v4575
    %v4800 = vpack.c.b16 %v4580, %v4576
    %v4801 = vpack.c.b16 %v4585, %v4581
    %v4802 = vpack.c.b16 %v4586, %v4582
    %v4803 = vpack.c.b16 %v4587, %v4583
    %v4804 = vpack.c.b16 %v4588, %v4584
    %v4805 = vpack.c.b16 %v4593, %v4589
    %v4806 = vpack.c.b16 %v4594, %v4590
    %v4807 = vpack.c.b16 %v4595, %v4591
    %v4808 = vpack.c.b16 %v4596, %v4592
    %v4809 = vpack.c.b16 %v4601, %v4597
    %v4810 = vpack.c.b16 %v4602, %v4598
    %v4811 = vpack.c.b16 %v4603, %v4599
    %v4812 = vpack.c.b16 %v4604, %v4600
    %v4813 = vpack.c.b16 %v4609, %v4605
    %v4814 = vpack.c.b16 %v4610, %v4606
    %v4815 = vpack.c.b16 %v4611, %v4607
    %v4816 = vpack.c.b16 %v4612, %v4608
    %v4817 = vpack.c.b16 %v4617, %v4613
    %v4818 = vpack.c.b16 %v4618, %v4614
    %v4819 = vpack.c.b16 %v4619, %v4615
    %v4820 = vpack.c.b16 %v4620, %v4616
    %v4821 = vpack.c.b16 %v4625, %v4621
    %v4822 = vpack.c.b16 %v4626, %v4622
    %v4823 = vpack.c.b16 %v4627, %v4623
    %v4824 = vpack.c.b16 %v4628, %v4624
    %v4825 = vpack.c.b16 %v4633, %v4629
    %v4826 = vpack.c.b16 %v4634, %v4630
    %v4827 = vpack.c.b16 %v4635, %v4631
    %v4828 = vpack.c.b16 %v4636, %v4632
    %v4829 = vpack.c.b16 %v4641, %v4637
    %v4830 = vpack.c.b16 %v4642, %v4638
    %v4831 = vpack.c.b16 %v4643, %v4639
    %v4832 = vpack.c.b16 %v4644, %v4640
    %v4833 = vpack.c.b16 %v4649, %v4645
    %v4834 = vpack.c.b16 %v4650, %v4646
    %v4835 = vpack.c.b16 %v4651, %v4647
    %v4836 = vpack.c.b16 %v4652, %v4648
    %v4837 = vpack.c.b16 %v4657, %v4653
    %v4838 = vpack.c.b16 %v4658, %v4654
    %v4839 = vpack.c.b16 %v4659, %v4655
    %v4840 = vpack.c.b16 %v4660, %v4656
    %v4841 = vpack.c.b16 %v4665, %v4661
    %v4842 = vpack.c.b16 %v4666, %v4662
    %v4843 = vpack.c.b16 %v4667, %v4663
    %v4844 = vpack.c.b16 %v4668, %v4664
    %v4845 = vpack.c.b16 %v4673, %v4669
    %v4846 = vpack.c.b16 %v4674, %v4670
    %v4847 = vpack.c.b16 %v4675, %v4671
    %v4848 = vpack.c.b16 %v4676, %v4672
    %v4849 = vpack.c.b16 %v4681, %v4677
    %v4850 = vpack.c.b16 %v4682, %v4678
    %v4851 = vpack.c.b16 %v4683, %v4679
    %v4852 = vpack.c.b16 %v4684, %v4680
    %v4853 = vpack.c.b16 %v4689, %v4685
    %v4854 = vpack.c.b16 %v4690, %v4686
    %v4855 = vpack.c.b16 %v4691, %v4687
    %v4856 = vpack.c.b16 %v4692, %v4688
    %v4857 = vpack.c.b16 %v4697, %v4693
    %v4858 = vpack.c.b16 %v4698, %v4694
    %v4859 = vpack.c.b16 %v4699, %v4695
    %v4860 = vpack.c.b16 %v4700, %v4696
    %v4861 = vpack.c.b16 %v4705, %v4701
    %v4862 = vpack.c.b16 %v4706, %v4702
    %v4863 = vpack.c.b16 %v4707, %v4703
    %v4864 = vpack.c.b16 %v4708, %v4704
    %v4865 = vpack.c.b16 %v4713, %v4709
    %v4866 = vpack.c.b16 %v4714, %v4710
    %v4867 = vpack.c.b16 %v4715, %v4711
    %v4868 = vpack.c.b16 %v4716, %v4712
    %v4869 = vpack.c.b16 %v4721, %v4717
    %v4870 = vpack.c.b16 %v4722, %v4718
    %v4871 = vpack.c.b16 %v4723, %v4719
    %v4872 = vpack.c.b16 %v4724, %v4720
    %v4873 = vpack.c.b16 %v4729, %v4725
    %v4874 = vpack.c.b16 %v4730, %v4726
    %v4875 = vpack.c.b16 %v4731, %v4727
    %v4876 = vpack.c.b16 %v4732, %v4728
    %v4877 = vpack.c.b16 %v4737, %v4733
    %v4878 = vpack.c.b16 %v4738, %v4734
    %v4879 = vpack.c.b16 %v4739, %v4735
    %v4880 = vpack.c.b16 %v4740, %v4736
    %v4881 = vpack.c.b16 %v4745, %v4741
    %v4882 = vpack.c.b16 %v4746, %v4742
    %v4883 = vpack.c.b16 %v4747, %v4743
    %v4884 = vpack.c.b16 %v4748, %v4744
    %v4885 = vpack.c.b16 %v4753, %v4749
    %v4886 = vpack.c.b16 %v4754, %v4750
    %v4887 = vpack.c.b16 %v4755, %v4751
    %v4888 = vpack.c.b16 %v4756, %v4752
    %v4889 = vpack.c.b16 %v4761, %v4757
    %v4890 = vpack.c.b16 %v4762, %v4758
    %v4891 = vpack.c.b16 %v4763, %v4759
    %v4892 = vpack.c.b16 %v4764, %v4760
    %5021 = vmatpush.bf16.msra.mxu0 %v4793
    %5022 = vmatpush.bf16.msra.mxu0 %v4789
    %5023 = vmatpush.bf16.msra.mxu0 %v4785
    %5024 = vmatpush.bf16.msra.mxu0 %v4781
    %5025 = vmatpush.bf16.msra.mxu0 %v4777
    %5026 = vmatpush.bf16.msra.mxu0 %v4773
    %5027 = vmatpush.bf16.msra.mxu0 %v4769
    %5028 = vmatpush.bf16.msra.mxu0 %v4765
    %5029 = vmatmul.bf16.gmra.mxu0 %v4237
    %v5030 = vpop.f32.mrf.mxu0
    %v5031 = vadd.f32 %v4373, %v5030
    %v5032 = vpop.f32.mrf.mxu0
    %5033 = vdwg.mxu0
    %5034 = vmatpush.bf16.msra.mxu0 %v4825
    %5035 = vmatpush.bf16.msra.mxu0 %v4821
    %5036 = vmatpush.bf16.msra.mxu0 %v4817
    %5037 = vmatpush.bf16.msra.mxu0 %v4813
    %5038 = vmatpush.bf16.msra.mxu0 %v4809
    %5039 = vmatpush.bf16.msra.mxu0 %v4805
    %5040 = vmatpush.bf16.msra.mxu0 %v4801
    %5041 = vmatpush.bf16.msra.mxu0 %v4797
    %5042 = vmatmul.bf16.gmra.mxu0 %v4238
    %v5043 = vpop.f32.mrf.mxu0
    %v5044 = vadd.f32 %v5031, %v5043
    %v5045 = vpop.f32.mrf.mxu0
    %5046 = vdwg.mxu0
    %5047 = vmatpush.bf16.msra.mxu0 %v4857
    %5048 = vmatpush.bf16.msra.mxu0 %v4853
    %5049 = vmatpush.bf16.msra.mxu0 %v4849
    %5050 = vmatpush.bf16.msra.mxu0 %v4845
    %5051 = vmatpush.bf16.msra.mxu0 %v4841
    %5052 = vmatpush.bf16.msra.mxu0 %v4837
    %5053 = vmatpush.bf16.msra.mxu0 %v4833
    %5054 = vmatpush.bf16.msra.mxu0 %v4829
    %5055 = vmatmul.bf16.gmra.mxu0 %v4239
    %v5056 = vpop.f32.mrf.mxu0
    %v5057 = vadd.f32 %v5044, %v5056
    %v5058 = vpop.f32.mrf.mxu0
    %5059 = vdwg.mxu0
    %5060 = vmatpush.bf16.msra.mxu0 %v4889
    %5061 = vmatpush.bf16.msra.mxu0 %v4885
    %5062 = vmatpush.bf16.msra.mxu0 %v4881
    %5063 = vmatpush.bf16.msra.mxu0 %v4877
    %5064 = vmatpush.bf16.msra.mxu0 %v4873
    %5065 = vmatpush.bf16.msra.mxu0 %v4869
    %5066 = vmatpush.bf16.msra.mxu0 %v4865
    %5067 = vmatpush.bf16.msra.mxu0 %v4861
    %5068 = vmatmul.bf16.gmra.mxu0 %v4240
    %v5069 = vpop.f32.mrf.mxu0
    %v5070 = vadd.f32 %v5057, %v5069
    %v5071 = vpop.f32.mrf.mxu0
    %5072 = vdwg.mxu0
    %5073 = vmatpush.bf16.msra.mxu0 %v4794
    %5074 = vmatpush.bf16.msra.mxu0 %v4790
    %5075 = vmatpush.bf16.msra.mxu0 %v4786
    %5076 = vmatpush.bf16.msra.mxu0 %v4782
    %5077 = vmatpush.bf16.msra.mxu0 %v4778
    %5078 = vmatpush.bf16.msra.mxu0 %v4774
    %5079 = vmatpush.bf16.msra.mxu0 %v4770
    %5080 = vmatpush.bf16.msra.mxu0 %v4766
    %5081 = vmatmul.bf16.gmra.mxu0 %v4237
    %v5082 = vpop.f32.mrf.mxu0
    %v5083 = vadd.f32 %v4374, %v5082
    %v5084 = vpop.f32.mrf.mxu0
    %5085 = vdwg.mxu0
    %5086 = vmatpush.bf16.msra.mxu0 %v4826
    %5087 = vmatpush.bf16.msra.mxu0 %v4822
    %5088 = vmatpush.bf16.msra.mxu0 %v4818
    %5089 = vmatpush.bf16.msra.mxu0 %v4814
    %5090 = vmatpush.bf16.msra.mxu0 %v4810
    %5091 = vmatpush.bf16.msra.mxu0 %v4806
    %5092 = vmatpush.bf16.msra.mxu0 %v4802
    %5093 = vmatpush.bf16.msra.mxu0 %v4798
    %5094 = vmatmul.bf16.gmra.mxu0 %v4238
    %v5095 = vpop.f32.mrf.mxu0
    %v5096 = vadd.f32 %v5083, %v5095
    %v5097 = vpop.f32.mrf.mxu0
    %5098 = vdwg.mxu0
    %5099 = vmatpush.bf16.msra.mxu0 %v4858
    %5100 = vmatpush.bf16.msra.mxu0 %v4854
    %5101 = vmatpush.bf16.msra.mxu0 %v4850
    %5102 = vmatpush.bf16.msra.mxu0 %v4846
    %5103 = vmatpush.bf16.msra.mxu0 %v4842
    %5104 = vmatpush.bf16.msra.mxu0 %v4838
    %5105 = vmatpush.bf16.msra.mxu0 %v4834
    %5106 = vmatpush.bf16.msra.mxu0 %v4830
    %5107 = vmatmul.bf16.gmra.mxu0 %v4239
    %v5108 = vpop.f32.mrf.mxu0
    %v5109 = vadd.f32 %v5096, %v5108
    %v5110 = vpop.f32.mrf.mxu0
    %5111 = vdwg.mxu0
    %5112 = vmatpush.bf16.msra.mxu0 %v4890
    %5113 = vmatpush.bf16.msra.mxu0 %v4886
    %5114 = vmatpush.bf16.msra.mxu0 %v4882
    %5115 = vmatpush.bf16.msra.mxu0 %v4878
    %5116 = vmatpush.bf16.msra.mxu0 %v4874
    %5117 = vmatpush.bf16.msra.mxu0 %v4870
    %5118 = vmatpush.bf16.msra.mxu0 %v4866
    %5119 = vmatpush.bf16.msra.mxu0 %v4862
    %5120 = vmatmul.bf16.gmra.mxu0 %v4240
    %v5121 = vpop.f32.mrf.mxu0
    %v5122 = vadd.f32 %v5109, %v5121
    %v5123 = vpop.f32.mrf.mxu0
    %5124 = vdwg.mxu0
    %5125 = vmatpush.bf16.msra.mxu0 %v4795
    %5126 = vmatpush.bf16.msra.mxu0 %v4791
    %5127 = vmatpush.bf16.msra.mxu0 %v4787
    %5128 = vmatpush.bf16.msra.mxu0 %v4783
    %5129 = vmatpush.bf16.msra.mxu0 %v4779
    %5130 = vmatpush.bf16.msra.mxu0 %v4775
    %5131 = vmatpush.bf16.msra.mxu0 %v4771
    %5132 = vmatpush.bf16.msra.mxu0 %v4767
    %5133 = vmatmul.bf16.gmra.mxu0 %v4237
    %v5134 = vpop.f32.mrf.mxu0
    %v5135 = vadd.f32 %v4375, %v5134
    %v5136 = vpop.f32.mrf.mxu0
    %5137 = vdwg.mxu0
    %5138 = vmatpush.bf16.msra.mxu0 %v4827
    %5139 = vmatpush.bf16.msra.mxu0 %v4823
    %5140 = vmatpush.bf16.msra.mxu0 %v4819
    %5141 = vmatpush.bf16.msra.mxu0 %v4815
    %5142 = vmatpush.bf16.msra.mxu0 %v4811
    %5143 = vmatpush.bf16.msra.mxu0 %v4807
    %5144 = vmatpush.bf16.msra.mxu0 %v4803
    %5145 = vmatpush.bf16.msra.mxu0 %v4799
    %5146 = vmatmul.bf16.gmra.mxu0 %v4238
    %v5147 = vpop.f32.mrf.mxu0
    %v5148 = vadd.f32 %v5135, %v5147
    %v5149 = vpop.f32.mrf.mxu0
    %5150 = vdwg.mxu0
    %5151 = vmatpush.bf16.msra.mxu0 %v4859
    %5152 = vmatpush.bf16.msra.mxu0 %v4855
    %5153 = vmatpush.bf16.msra.mxu0 %v4851
    %5154 = vmatpush.bf16.msra.mxu0 %v4847
    %5155 = vmatpush.bf16.msra.mxu0 %v4843
    %5156 = vmatpush.bf16.msra.mxu0 %v4839
    %5157 = vmatpush.bf16.msra.mxu0 %v4835
    %5158 = vmatpush.bf16.msra.mxu0 %v4831
    %5159 = vmatmul.bf16.gmra.mxu0 %v4239
    %v5160 = vpop.f32.mrf.mxu0
    %v5161 = vadd.f32 %v5148, %v5160
    %v5162 = vpop.f32.mrf.mxu0
    %5163 = vdwg.mxu0
    %5164 = vmatpush.bf16.msra.mxu0 %v4891
    %5165 = vmatpush.bf16.msra.mxu0 %v4887
    %5166 = vmatpush.bf16.msra.mxu0 %v4883
    %5167 = vmatpush.bf16.msra.mxu0 %v4879
    %5168 = vmatpush.bf16.msra.mxu0 %v4875
    %5169 = vmatpush.bf16.msra.mxu0 %v4871
    %5170 = vmatpush.bf16.msra.mxu0 %v4867
    %5171 = vmatpush.bf16.msra.mxu0 %v4863
    %5172 = vmatmul.bf16.gmra.mxu0 %v4240
    %v5173 = vpop.f32.mrf.mxu0
    %v5174 = vadd.f32 %v5161, %v5173
    %v5175 = vpop.f32.mrf.mxu0
    %5176 = vdwg.mxu0
    %5177 = vmatpush.bf16.msra.mxu0 %v4796
    %5178 = vmatpush.bf16.msra.mxu0 %v4792
    %5179 = vmatpush.bf16.msra.mxu0 %v4788
    %5180 = vmatpush.bf16.msra.mxu0 %v4784
    %5181 = vmatpush.bf16.msra.mxu0 %v4780
    %5182 = vmatpush.bf16.msra.mxu0 %v4776
    %5183 = vmatpush.bf16.msra.mxu0 %v4772
    %5184 = vmatpush.bf16.msra.mxu0 %v4768
    %5185 = vmatmul.bf16.gmra.mxu0 %v4237
    %v5186 = vpop.f32.mrf.mxu0
    %v5187 = vadd.f32 %v4376, %v5186
    %v5188 = vpop.f32.mrf.mxu0
    %5189 = vdwg.mxu0
    %5190 = vmatpush.bf16.msra.mxu0 %v4828
    %5191 = vmatpush.bf16.msra.mxu0 %v4824
    %5192 = vmatpush.bf16.msra.mxu0 %v4820
    %5193 = vmatpush.bf16.msra.mxu0 %v4816
    %5194 = vmatpush.bf16.msra.mxu0 %v4812
    %5195 = vmatpush.bf16.msra.mxu0 %v4808
    %5196 = vmatpush.bf16.msra.mxu0 %v4804
    %5197 = vmatpush.bf16.msra.mxu0 %v4800
    %5198 = vmatmul.bf16.gmra.mxu0 %v4238
    %v5199 = vpop.f32.mrf.mxu0
    %v5200 = vadd.f32 %v5187, %v5199
    %v5201 = vpop.f32.mrf.mxu0
    %5202 = vdwg.mxu0
    %5203 = vmatpush.bf16.msra.mxu0 %v4860
    %5204 = vmatpush.bf16.msra.mxu0 %v4856
    %5205 = vmatpush.bf16.msra.mxu0 %v4852
    %5206 = vmatpush.bf16.msra.mxu0 %v4848
    %5207 = vmatpush.bf16.msra.mxu0 %v4844
    %5208 = vmatpush.bf16.msra.mxu0 %v4840
    %5209 = vmatpush.bf16.msra.mxu0 %v4836
    %5210 = vmatpush.bf16.msra.mxu0 %v4832
    %5211 = vmatmul.bf16.gmra.mxu0 %v4239
    %v5212 = vpop.f32.mrf.mxu0
    %v5213 = vadd.f32 %v5200, %v5212
    %v5214 = vpop.f32.mrf.mxu0
    %5215 = vdwg.mxu0
    %5216 = vmatpush.bf16.msra.mxu0 %v4892
    %5217 = vmatpush.bf16.msra.mxu0 %v4888
    %5218 = vmatpush.bf16.msra.mxu0 %v4884
    %5219 = vmatpush.bf16.msra.mxu0 %v4880
    %5220 = vmatpush.bf16.msra.mxu0 %v4876
    %5221 = vmatpush.bf16.msra.mxu0 %v4872
    %5222 = vmatpush.bf16.msra.mxu0 %v4868
    %5223 = vmatpush.bf16.msra.mxu0 %v4864
    %5224 = vmatmul.bf16.gmra.mxu0 %v4240
    %v5225 = vpop.f32.mrf.mxu0
    %v5226 = vadd.f32 %v5213, %v5225
    %v5227 = vpop.f32.mrf.mxu0
    %5228 = vdwg.mxu0
    %v5229 = vpack.c.bf16 %v5070, %v5070
    %v5230 = vpack.c.bf16 %v5122, %v5122
    %v5231 = vpack.c.bf16 %v5174, %v5174
    %v5232 = vpack.c.bf16 %v5226, %v5226
    %v5233 = vunpack.c.l.bf16 %v5229
    %v5234 = vunpack.c.l.bf16 %v5230
    %v5235 = vunpack.c.l.bf16 %v5231
    %v5236 = vunpack.c.l.bf16 %v5232
    %v5237 = vtanh.pop %v5233
    %v5238 = vtanh.pop %v5234
    %v5239 = vtanh.pop %v5235
    %v5240 = vtanh.pop %v5236
    %v5241 = vpack.c.bf16 %v5237, %v5237
    %v5242 = vpack.c.bf16 %v5238, %v5238
    %v5243 = vpack.c.bf16 %v5239, %v5239
    %v5244 = vpack.c.bf16 %v5240, %v5240
    %v5245 = vld [vmem:[#allocation10] sm:$0xf]
    %v5246 = vld [vmem:[#allocation10 + $0x4] sm:$0xf]
    %v5247 = vld [vmem:[#allocation10 + $0x8] sm:$0xf]
    %v5248 = vld [vmem:[#allocation10 + $0xc] sm:$0xf]
    %v5249 = vld [vmem:[#allocation10 + $0x10] sm:$0xf]
    %v5250 = vld [vmem:[#allocation10 + $0x14] sm:$0xf]
    %v5251 = vld [vmem:[#allocation10 + $0x18] sm:$0xf]
    %v5252 = vld [vmem:[#allocation10 + $0x1c] sm:$0xf]
    %v5253 = vld [vmem:[#allocation10 + $0x20] sm:$0xf]
    %v5254 = vld [vmem:[#allocation10 + $0x24] sm:$0xf]
    %v5255 = vld [vmem:[#allocation10 + $0x28] sm:$0xf]
    %v5256 = vld [vmem:[#allocation10 + $0x2c] sm:$0xf]
    %v5257 = vld [vmem:[#allocation10 + $0x30] sm:$0xf]
    %v5258 = vld [vmem:[#allocation10 + $0x34] sm:$0xf]
    %v5259 = vld [vmem:[#allocation10 + $0x38] sm:$0xf]
    %v5260 = vld [vmem:[#allocation10 + $0x3c] sm:$0xf]
    %v5261 = vld [vmem:[#allocation10 + $0x40] sm:$0xf]
    %v5262 = vld [vmem:[#allocation10 + $0x44] sm:$0xf]
    %v5263 = vld [vmem:[#allocation10 + $0x48] sm:$0xf]
    %v5264 = vld [vmem:[#allocation10 + $0x4c] sm:$0xf]
    %v5265 = vld [vmem:[#allocation10 + $0x50] sm:$0xf]
    %v5266 = vld [vmem:[#allocation10 + $0x54] sm:$0xf]
    %v5267 = vld [vmem:[#allocation10 + $0x58] sm:$0xf]
    %v5268 = vld [vmem:[#allocation10 + $0x5c] sm:$0xf]
    %v5269 = vld [vmem:[#allocation10 + $0x60] sm:$0xf]
    %v5270 = vld [vmem:[#allocation10 + $0x64] sm:$0xf]
    %v5271 = vld [vmem:[#allocation10 + $0x68] sm:$0xf]
    %v5272 = vld [vmem:[#allocation10 + $0x6c] sm:$0xf]
    %v5273 = vld [vmem:[#allocation10 + $0x70] sm:$0xf]
    %v5274 = vld [vmem:[#allocation10 + $0x74] sm:$0xf]
    %v5275 = vld [vmem:[#allocation10 + $0x78] sm:$0xf]
    %v5276 = vld [vmem:[#allocation10 + $0x7c] sm:$0xf]
    %v5277 = vld [vmem:[#allocation10 + $0x80] sm:$0xf]
    %v5278 = vld [vmem:[#allocation10 + $0x84] sm:$0xf]
    %v5279 = vld [vmem:[#allocation10 + $0x88] sm:$0xf]
    %v5280 = vld [vmem:[#allocation10 + $0x8c] sm:$0xf]
    %v5281 = vld [vmem:[#allocation10 + $0x90] sm:$0xf]
    %v5282 = vld [vmem:[#allocation10 + $0x94] sm:$0xf]
    %v5283 = vld [vmem:[#allocation10 + $0x98] sm:$0xf]
    %v5284 = vld [vmem:[#allocation10 + $0x9c] sm:$0xf]
    %v5285 = vld [vmem:[#allocation10 + $0xa0] sm:$0xf]
    %v5286 = vld [vmem:[#allocation10 + $0xa4] sm:$0xf]
    %v5287 = vld [vmem:[#allocation10 + $0xa8] sm:$0xf]
    %v5288 = vld [vmem:[#allocation10 + $0xac] sm:$0xf]
    %v5289 = vld [vmem:[#allocation10 + $0xb0] sm:$0xf]
    %v5290 = vld [vmem:[#allocation10 + $0xb4] sm:$0xf]
    %v5291 = vld [vmem:[#allocation10 + $0xb8] sm:$0xf]
    %v5292 = vld [vmem:[#allocation10 + $0xbc] sm:$0xf]
    %v5293 = vld [vmem:[#allocation10 + $0xc0] sm:$0xf]
    %v5294 = vld [vmem:[#allocation10 + $0xc4] sm:$0xf]
    %v5295 = vld [vmem:[#allocation10 + $0xc8] sm:$0xf]
    %v5296 = vld [vmem:[#allocation10 + $0xcc] sm:$0xf]
    %v5297 = vld [vmem:[#allocation10 + $0xd0] sm:$0xf]
    %v5298 = vld [vmem:[#allocation10 + $0xd4] sm:$0xf]
    %v5299 = vld [vmem:[#allocation10 + $0xd8] sm:$0xf]
    %v5300 = vld [vmem:[#allocation10 + $0xdc] sm:$0xf]
    %v5301 = vld [vmem:[#allocation10 + $0xe0] sm:$0xf]
    %v5302 = vld [vmem:[#allocation10 + $0xe4] sm:$0xf]
    %v5303 = vld [vmem:[#allocation10 + $0xe8] sm:$0xf]
    %v5304 = vld [vmem:[#allocation10 + $0xec] sm:$0xf]
    %v5305 = vld [vmem:[#allocation10 + $0xf0] sm:$0xf]
    %v5306 = vld [vmem:[#allocation10 + $0xf4] sm:$0xf]
    %v5307 = vld [vmem:[#allocation10 + $0xf8] sm:$0xf]
    %v5308 = vld [vmem:[#allocation10 + $0xfc] sm:$0xf]
    %v5309 = vld [vmem:[#allocation12] sm:$0x1]
    %v5311 = vperm.slane %v5309, 0
    %v5377 = vunpack.c.l.b16 %v5245
    %v5378 = vunpack.c.l.b16 %v5246
    %v5379 = vunpack.c.l.b16 %v5247
    %v5380 = vunpack.c.l.b16 %v5248
    %v5381 = vunpack.c.l.b16 %v5249
    %v5382 = vunpack.c.l.b16 %v5250
    %v5383 = vunpack.c.l.b16 %v5251
    %v5384 = vunpack.c.l.b16 %v5252
    %v5385 = vunpack.c.l.b16 %v5253
    %v5386 = vunpack.c.l.b16 %v5254
    %v5387 = vunpack.c.l.b16 %v5255
    %v5388 = vunpack.c.l.b16 %v5256
    %v5389 = vunpack.c.l.b16 %v5257
    %v5390 = vunpack.c.l.b16 %v5258
    %v5391 = vunpack.c.l.b16 %v5259
    %v5392 = vunpack.c.l.b16 %v5260
    %v5393 = vunpack.c.l.b16 %v5261
    %v5394 = vunpack.c.l.b16 %v5262
    %v5395 = vunpack.c.l.b16 %v5263
    %v5396 = vunpack.c.l.b16 %v5264
    %v5397 = vunpack.c.l.b16 %v5265
    %v5398 = vunpack.c.l.b16 %v5266
    %v5399 = vunpack.c.l.b16 %v5267
    %v5400 = vunpack.c.l.b16 %v5268
    %v5401 = vunpack.c.l.b16 %v5269
    %v5402 = vunpack.c.l.b16 %v5270
    %v5403 = vunpack.c.l.b16 %v5271
    %v5404 = vunpack.c.l.b16 %v5272
    %v5405 = vunpack.c.l.b16 %v5273
    %v5406 = vunpack.c.l.b16 %v5274
    %v5407 = vunpack.c.l.b16 %v5275
    %v5408 = vunpack.c.l.b16 %v5276
    %v5409 = vunpack.c.l.b16 %v5277
    %v5410 = vunpack.c.l.b16 %v5278
    %v5411 = vunpack.c.l.b16 %v5279
    %v5412 = vunpack.c.l.b16 %v5280
    %v5413 = vunpack.c.l.b16 %v5281
    %v5414 = vunpack.c.l.b16 %v5282
    %v5415 = vunpack.c.l.b16 %v5283
    %v5416 = vunpack.c.l.b16 %v5284
    %v5417 = vunpack.c.l.b16 %v5285
    %v5418 = vunpack.c.l.b16 %v5286
    %v5419 = vunpack.c.l.b16 %v5287
    %v5420 = vunpack.c.l.b16 %v5288
    %v5421 = vunpack.c.l.b16 %v5289
    %v5422 = vunpack.c.l.b16 %v5290
    %v5423 = vunpack.c.l.b16 %v5291
    %v5424 = vunpack.c.l.b16 %v5292
    %v5425 = vunpack.c.l.b16 %v5293
    %v5426 = vunpack.c.l.b16 %v5294
    %v5427 = vunpack.c.l.b16 %v5295
    %v5428 = vunpack.c.l.b16 %v5296
    %v5429 = vunpack.c.l.b16 %v5297
    %v5430 = vunpack.c.l.b16 %v5298
    %v5431 = vunpack.c.l.b16 %v5299
    %v5432 = vunpack.c.l.b16 %v5300
    %v5433 = vunpack.c.l.b16 %v5301
    %v5434 = vunpack.c.l.b16 %v5302
    %v5435 = vunpack.c.l.b16 %v5303
    %v5436 = vunpack.c.l.b16 %v5304
    %v5437 = vunpack.c.l.b16 %v5305
    %v5438 = vunpack.c.l.b16 %v5306
    %v5439 = vunpack.c.l.b16 %v5307
    %v5440 = vunpack.c.l.b16 %v5308
    %v5441 = vpack.c.b16 %v5378, %v5377
    %v5442 = vpack.c.b16 %v5380, %v5379
    %v5443 = vpack.c.b16 %v5382, %v5381
    %v5444 = vpack.c.b16 %v5384, %v5383
    %v5445 = vpack.c.b16 %v5386, %v5385
    %v5446 = vpack.c.b16 %v5388, %v5387
    %v5447 = vpack.c.b16 %v5390, %v5389
    %v5448 = vpack.c.b16 %v5392, %v5391
    %v5449 = vpack.c.b16 %v5394, %v5393
    %v5450 = vpack.c.b16 %v5396, %v5395
    %v5451 = vpack.c.b16 %v5398, %v5397
    %v5452 = vpack.c.b16 %v5400, %v5399
    %v5453 = vpack.c.b16 %v5402, %v5401
    %v5454 = vpack.c.b16 %v5404, %v5403
    %v5455 = vpack.c.b16 %v5406, %v5405
    %v5456 = vpack.c.b16 %v5408, %v5407
    %v5457 = vpack.c.b16 %v5410, %v5409
    %v5458 = vpack.c.b16 %v5412, %v5411
    %v5459 = vpack.c.b16 %v5414, %v5413
    %v5460 = vpack.c.b16 %v5416, %v5415
    %v5461 = vpack.c.b16 %v5418, %v5417
    %v5462 = vpack.c.b16 %v5420, %v5419
    %v5463 = vpack.c.b16 %v5422, %v5421
    %v5464 = vpack.c.b16 %v5424, %v5423
    %v5465 = vpack.c.b16 %v5426, %v5425
    %v5466 = vpack.c.b16 %v5428, %v5427
    %v5467 = vpack.c.b16 %v5430, %v5429
    %v5468 = vpack.c.b16 %v5432, %v5431
    %v5469 = vpack.c.b16 %v5434, %v5433
    %v5470 = vpack.c.b16 %v5436, %v5435
    %v5471 = vpack.c.b16 %v5438, %v5437
    %v5472 = vpack.c.b16 %v5440, %v5439
    %5505 = vmatpush.bf16.msra.mxu0 %v5448
    %5506 = vmatpush.bf16.msra.mxu0 %v5447
    %5507 = vmatpush.bf16.msra.mxu0 %v5446
    %5508 = vmatpush.bf16.msra.mxu0 %v5445
    %5509 = vmatpush.bf16.msra.mxu0 %v5444
    %5510 = vmatpush.bf16.msra.mxu0 %v5443
    %5511 = vmatpush.bf16.msra.mxu0 %v5442
    %5512 = vmatpush.bf16.msra.mxu0 %v5441
    %5513 = vmatmul.bf16.gmra.mxu0 %v5241
    %v5514 = vpop.f32.mrf.mxu0
    %v5515 = vadd.f32 %v5311, %v5514
    %v5516 = vpop.f32.mrf.mxu0
    %5517 = vdwg.mxu0
    %5518 = vmatpush.bf16.msra.mxu0 %v5456
    %5519 = vmatpush.bf16.msra.mxu0 %v5455
    %5520 = vmatpush.bf16.msra.mxu0 %v5454
    %5521 = vmatpush.bf16.msra.mxu0 %v5453
    %5522 = vmatpush.bf16.msra.mxu0 %v5452
    %5523 = vmatpush.bf16.msra.mxu0 %v5451
    %5524 = vmatpush.bf16.msra.mxu0 %v5450
    %5525 = vmatpush.bf16.msra.mxu0 %v5449
    %5526 = vmatmul.bf16.gmra.mxu0 %v5242
    %v5527 = vpop.f32.mrf.mxu0
    %v5528 = vadd.f32 %v5515, %v5527
    %v5529 = vpop.f32.mrf.mxu0
    %5530 = vdwg.mxu0
    %5531 = vmatpush.bf16.msra.mxu0 %v5464
    %5532 = vmatpush.bf16.msra.mxu0 %v5463
    %5533 = vmatpush.bf16.msra.mxu0 %v5462
    %5534 = vmatpush.bf16.msra.mxu0 %v5461
    %5535 = vmatpush.bf16.msra.mxu0 %v5460
    %5536 = vmatpush.bf16.msra.mxu0 %v5459
    %5537 = vmatpush.bf16.msra.mxu0 %v5458
    %5538 = vmatpush.bf16.msra.mxu0 %v5457
    %5539 = vmatmul.bf16.gmra.mxu0 %v5243
    %v5540 = vpop.f32.mrf.mxu0
    %v5541 = vadd.f32 %v5528, %v5540
    %v5542 = vpop.f32.mrf.mxu0
    %5543 = vdwg.mxu0
    %5544 = vmatpush.bf16.msra.mxu0 %v5472
    %5545 = vmatpush.bf16.msra.mxu0 %v5471
    %5546 = vmatpush.bf16.msra.mxu0 %v5470
    %5547 = vmatpush.bf16.msra.mxu0 %v5469
    %5548 = vmatpush.bf16.msra.mxu0 %v5468
    %5549 = vmatpush.bf16.msra.mxu0 %v5467
    %5550 = vmatpush.bf16.msra.mxu0 %v5466
    %5551 = vmatpush.bf16.msra.mxu0 %v5465
    %5552 = vmatmul.bf16.gmra.mxu0 %v5244
    %v5553 = vpop.f32.mrf.mxu0
    %v5554 = vadd.f32 %v5541, %v5553
    %v5555 = vpop.f32.mrf.mxu0
    %5556 = vdwg.mxu0
    %5557 = vst [vmem:[%s7] sm:$0xff] %v5554
    // Predicated region
    $region58: #{mlp_forward.1} parent=1 // pred_check
      _
    $region59: #{mlp_forward.1} parent=1 // pred_check_branch
      %5559 = sbr.rel (0) target = $region61
    $region60: #{mlp_forward.1} parent=1 // pred_region
      _
    $region61: #{mlp_forward.1} parent=1 // pred_fallthru
      _
    // Predicated region
    $region62: #{mlp_forward.1} parent=1 // pred_check
      _
    $region63: #{mlp_forward.1} parent=1 // pred_check_branch
      %5561 = sbr.rel (0) target = $region65
    $region64: #{mlp_forward.1} parent=1 // pred_region
      _
    $region65: #{mlp_forward.1} parent=1 // pred_fallthru
      _
    %5562 = vsyncpa [#allocation3], 1
    %5563 = vsyncpa [#allocation5], 1
    %5564 = vsyncpa [#allocation8], 1
    %5565 = vsyncpa [#allocation11], 1

</llo_original>
